<compile_context>
chip_gen: v7x
topology: tpu7x:2x2x1
jax: 0.10.0
libtpu: 0.0.40
codegen_flags: <defaults>
</compile_context>

<pallas_src>
import math
import functools

import jax
import jax.numpy as jnp
from jax.experimental import pallas as pl
from jax.experimental.pallas import tpu as pltpu


# ---------------------------------------------------------------------------
# Small helpers
# ---------------------------------------------------------------------------
def _layernorm(x, w, b, eps=1e-5):
    mu = jnp.mean(x, axis=-1, keepdims=True)
    var = jnp.mean((x - mu) ** 2, axis=-1, keepdims=True)
    return (x - mu) * jax.lax.rsqrt(var + eps) * w + b


def _gelu_tanh(x):
    c = math.sqrt(2.0 / math.pi)
    return 0.5 * x * (1.0 + jnp.tanh(c * (x + 0.044715 * x * x * x)))


def _pick_tile(n, prefs):
    for p in prefs:
        if n % p == 0:
            return p
    return n


def _device_kind():
    try:
        return jax.devices()[0].device_kind.lower()
    except Exception:
        return ""


def _vmem_limit_bytes():
    # Generation-aware VMEM budget: ~40 MiB on v7x (64 MiB physical),
    # 96 MiB on v5e/v6e (128 MiB physical).
    try:
        cap = int(pltpu.get_tpu_info().vmem_capacity_bytes)
    except Exception:
        cap = 128 * 1024 * 1024
    if cap <= 64 * 1024 * 1024:
        return 40 * 1024 * 1024
    return 96 * 1024 * 1024


# ---------------------------------------------------------------------------
# Kernel 1: fused LayerNorm1 + QKV projection, writes q (pre-scaled), k, v
#           as three lane-dense (B, T, C) arrays.
# ---------------------------------------------------------------------------
def _ln_qkv_kernel(x_ref, lnw_ref, lnb_ref, w_ref, b_ref,
                   q_ref, k_ref, v_ref, *, n_embd, q_scale):
    x = x_ref[0].astype(jnp.float32)                                    # (TS, C)
    h = _layernorm(x, lnw_ref[0].astype(jnp.float32),
                   lnb_ref[0].astype(jnp.float32))
    qkv = jnp.dot(h.astype(jnp.bfloat16), w_ref[...],
                  preferred_element_type=jnp.float32) + b_ref[0].astype(jnp.float32)
    C = n_embd
    # Fold the 1/sqrt(D) attention scale into q here (fused, in f32).
    q_ref[0] = (qkv[:, :C] * q_scale).astype(q_ref.dtype)
    k_ref[0] = qkv[:, C:2 * C].astype(k_ref.dtype)
    v_ref[0] = qkv[:, 2 * C:].astype(v_ref.dtype)


# ---------------------------------------------------------------------------
# Kernel 2: causal flash attention, online softmax over KV tiles.
#   q/k/v/out are all (B, T, C); heads handled via static channel slices.
#   KV tiles fully in the causal future are never DMA'd (clamped index_map)
#   and the causal mask is only built on diagonal tiles.
# ---------------------------------------------------------------------------
def _flash_attn_kernel(q_ref, k_ref, v_ref, o_ref, m_sc, l_sc, acc_sc,
                       *, n_head, d_head, tq, tkv):
    iq = pl.program_id(1)
    ikv = pl.program_id(2)

    first_row = iq * tq
    last_row = first_row + (tq - 1)
    first_col = ikv * tkv
    last_col = first_col + (tkv - 1)
    needed = first_col <= last_row          # tile contains any causally-visible key
    diagonal = last_col > first_row         # tile straddles the causal boundary

    @pl.when(ikv == 0)
    def _init():
        m_sc[...] = jnp.full_like(m_sc, -1e30)
        l_sc[...] = jnp.zeros_like(l_sc)
        acc_sc[...] = jnp.zeros_like(acc_sc)

    def tile_update(apply_mask):
        q = q_ref[0]                                                    # (TQ, C) bf16 (pre-scaled)
        k = k_ref[0]                                                    # (TKV, C) bf16
        v = v_ref[0]                                                    # (TKV, C) bf16
        if apply_mask:
            row = first_row + jax.lax.broadcasted_iota(jnp.int32, (tq, tkv), 0)
            col = first_col + jax.lax.broadcasted_iota(jnp.int32, (tq, tkv), 1)
            future = col > row
        for h in range(n_head):
            sl = slice(h * d_head, (h + 1) * d_head)
            s = jax.lax.dot_general(                                    # q_h @ k_h.T
                q[:, sl], k[:, sl],
                dimension_numbers=(((1,), (1,)), ((), ())),
                preferred_element_type=jnp.float32)                     # (TQ, TKV) f32
            if apply_mask:
                s = jnp.where(future, -1e30, s)                         # finite mask value
            m_prev = m_sc[h]                                            # (TQ, 1)
            m_new = jnp.maximum(m_prev, jnp.max(s, axis=-1, keepdims=True))
            alpha = jnp.exp(m_prev - m_new)
            p = jnp.exp(s - m_new)
            l_sc[h] = alpha * l_sc[h] + jnp.sum(p, axis=-1, keepdims=True)
            acc_sc[h] = alpha * acc_sc[h] + jnp.dot(
                p.astype(v.dtype), v[:, sl], preferred_element_type=jnp.float32)
            m_sc[h] = m_new

    @pl.when(jnp.logical_and(needed, jnp.logical_not(diagonal)))
    def _past_tile():            # fully-past KV tile: no mask work needed
        tile_update(apply_mask=False)

    @pl.when(jnp.logical_and(needed, diagonal))
    def _diag_tile():            # diagonal KV tile: build the causal mask
        tile_update(apply_mask=True)

    @pl.when(ikv == pl.num_programs(2) - 1)
    def _finalize():
        for h in range(n_head):
            inv = pl.reciprocal(l_sc[h], approx=True)
            o_ref[0, :, h * d_head:(h + 1) * d_head] = (
                acc_sc[h] * inv).astype(o_ref.dtype)


# ---------------------------------------------------------------------------
# Kernel 3: attn out-proj + residual1 + LayerNorm2 + MLP (hidden dim gridded)
#           + residual2.  Grid axis 2 walks H in hc-sized chunks.
# ---------------------------------------------------------------------------
def _proj_mlp_kernel(x_ref, y_ref, wp_ref, bp_ref, ln2w_ref, ln2b_ref,
                     wfc_ref, bfc_ref, wfp_ref, bfp_ref, o_ref,
                     x1_sc, h2_sc, acc_sc):
    hcx = pl.program_id(2)

    @pl.when(hcx == 0)
    def _prologue():
        x = x_ref[0].astype(jnp.float32)                                # (TS, C) residual stream
        attn = jnp.dot(y_ref[0], wp_ref[...],
                       preferred_element_type=jnp.float32) + bp_ref[0].astype(jnp.float32)
        x1 = x + attn                                                   # residual 1 (f32)
        x1_sc[...] = x1
        h2_sc[...] = _layernorm(x1, ln2w_ref[0].astype(jnp.float32),
                                ln2b_ref[0].astype(jnp.float32)).astype(h2_sc.dtype)
        acc_sc[...] = jnp.zeros_like(acc_sc)

    # One hc-wide chunk of the MLP hidden dim per grid step.
    f = jnp.dot(h2_sc[...], wfc_ref[...],
                preferred_element_type=jnp.float32) + bfc_ref[0].astype(jnp.float32)
    f = _gelu_tanh(f).astype(jnp.bfloat16)
    acc_sc[...] += jnp.dot(f, wfp_ref[...], preferred_element_type=jnp.float32)

    @pl.when(hcx == pl.num_programs(2) - 1)
    def _epilogue():
        o_ref[0] = (x1_sc[...] + acc_sc[...] +
                    bfp_ref[0].astype(jnp.float32)).astype(o_ref.dtype)


# ---------------------------------------------------------------------------
# Wrapper
# ---------------------------------------------------------------------------
def transformer_block(x, params, n_head):
    B, T, C = x.shape
    assert C % n_head == 0
    D = C // n_head
    H = params["w_fc"].shape[1]

    kind = _device_kind()
    is_v5e = ("v5 lite" in kind) or ("v5e" in kind) or ("v5litepod" in kind)

    # v5e: 128-wide KV tiles (4x128 MXU, lowest HBM BW); v6e/v7x: 256 tiles.
    attn_prefs = (128,) if is_v5e else (256, 128)
    ts_prefs = (256, 128) if is_v5e else (512, 256, 128)

    ts = _pick_tile(T, ts_prefs)          # seq tile for the matmul-only kernels
    t_att = _pick_tile(T, attn_prefs)     # flash-attention q and kv tile (equal)
    hc = _pick_tile(H, (512, 256, 128))   # MLP hidden-dim chunk (grid axis)

    vmem_limit = _vmem_limit_bytes()

    bf16 = jnp.bfloat16
    w_attn = params["w_attn"].astype(bf16)
    w_proj = params["w_proj"].astype(bf16)
    w_fc = params["w_fc"].astype(bf16)
    w_fc_proj = params["w_fc_proj"].astype(bf16)

    cp2 = pltpu.CompilerParams(dimension_semantics=("parallel", "parallel"),
                               vmem_limit_bytes=vmem_limit)
    cp3 = pltpu.CompilerParams(
        dimension_semantics=("parallel", "parallel", "arbitrary"),
        vmem_limit_bytes=vmem_limit)

    # --- 1) fused LayerNorm1 + QKV projection -> q, k, v as (B, T, C) --------
    q, k, v = pl.pallas_call(
        functools.partial(_ln_qkv_kernel, n_embd=C, q_scale=1.0 / math.sqrt(D)),
        out_shape=(jax.ShapeDtypeStruct((B, T, C), bf16),
                   jax.ShapeDtypeStruct((B, T, C), bf16),
                   jax.ShapeDtypeStruct((B, T, C), bf16)),
        grid_spec=pltpu.PrefetchScalarGridSpec(
            num_scalar_prefetch=0,
            grid=(B, T // ts),
            in_specs=[
                pl.BlockSpec((1, ts, C), lambda b, i: (b, i, 0)),
                pl.BlockSpec((1, C), lambda b, i: (0, 0)),
                pl.BlockSpec((1, C), lambda b, i: (0, 0)),
                pl.BlockSpec((C, 3 * C), lambda b, i: (0, 0)),
                pl.BlockSpec((1, 3 * C), lambda b, i: (0, 0)),
            ],
            out_specs=[
                pl.BlockSpec((1, ts, C), lambda b, i: (b, i, 0)),
                pl.BlockSpec((1, ts, C), lambda b, i: (b, i, 0)),
                pl.BlockSpec((1, ts, C), lambda b, i: (b, i, 0)),
            ],
        ),
        compiler_params=cp2,
    )(x, params["ln1_w"], params["ln1_b"], w_attn, params["b_attn"])

    # --- 2) causal flash attention (lane-dense (B, T, C) everywhere) ---------
    # K/V index_map is clamped to the last causally-needed tile (tq == tkv), so
    # future tiles are never DMA'd; the pl.when guards skip their compute.
    kv_map = lambda b, i, j: (b, jnp.minimum(j, i), 0)
    y = pl.pallas_call(
        functools.partial(_flash_attn_kernel,
                          n_head=n_head, d_head=D, tq=t_att, tkv=t_att),
        out_shape=jax.ShapeDtypeStruct((B, T, C), bf16),
        grid_spec=pltpu.PrefetchScalarGridSpec(
            num_scalar_prefetch=0,
            grid=(B, T // t_att, T // t_att),
            in_specs=[
                pl.BlockSpec((1, t_att, C), lambda b, i, j: (b, i, 0)),
                pl.BlockSpec((1, t_att, C), kv_map),
                pl.BlockSpec((1, t_att, C), kv_map),
            ],
            out_specs=pl.BlockSpec((1, t_att, C), lambda b, i, j: (b, i, 0)),
            scratch_shapes=[
                pltpu.VMEM((n_head, t_att, 1), jnp.float32),   # running max
                pltpu.VMEM((n_head, t_att, 1), jnp.float32),   # running denom
                pltpu.VMEM((n_head, t_att, D), jnp.float32),   # output accumulator
            ],
        ),
        compiler_params=cp3,
    )(q, k, v)

    # --- 3) out-proj + residual + LN2 + MLP (H gridded) + residual -----------
    out = pl.pallas_call(
        _proj_mlp_kernel,
        out_shape=jax.ShapeDtypeStruct((B, T, C), x.dtype),
        grid_spec=pltpu.PrefetchScalarGridSpec(
            num_scalar_prefetch=0,
            grid=(B, T // ts, H // hc),
            in_specs=[
                pl.BlockSpec((1, ts, C), lambda b, i, h: (b, i, 0)),   # x (residual)
                pl.BlockSpec((1, ts, C), lambda b, i, h: (b, i, 0)),   # attention output
                pl.BlockSpec((C, C), lambda b, i, h: (0, 0)),          # w_proj
                pl.BlockSpec((1, C), lambda b, i, h: (0, 0)),          # b_proj
                pl.BlockSpec((1, C), lambda b, i, h: (0, 0)),          # ln2_w
                pl.BlockSpec((1, C), lambda b, i, h: (0, 0)),          # ln2_b
                pl.BlockSpec((C, hc), lambda b, i, h: (0, h)),         # w_fc chunk
                pl.BlockSpec((1, hc), lambda b, i, h: (0, h)),         # b_fc chunk
                pl.BlockSpec((hc, C), lambda b, i, h: (h, 0)),         # w_fc_proj chunk
                pl.BlockSpec((1, C), lambda b, i, h: (0, 0)),          # b_fc_proj
            ],
            out_specs=pl.BlockSpec((1, ts, C), lambda b, i, h: (b, i, 0)),
            scratch_shapes=[
                pltpu.VMEM((ts, C), jnp.float32),    # x1 (post-attn residual)
                pltpu.VMEM((ts, C), jnp.bfloat16),   # LN2 activations
                pltpu.VMEM((ts, C), jnp.float32),    # MLP accumulator
            ],
        ),
        compiler_params=cp3,
    )(x, y, w_proj, params["b_proj"], params["ln2_w"], params["ln2_b"],
      w_fc, params["b_fc"], w_fc_proj, params["b_fc_proj"])

    return out


# ---------------------------------------------------------------------------
# Pure-JAX f32 reference (mirrors the PyTorch forward)
# ---------------------------------------------------------------------------
def ref_block(x, p, n_head):
    B, T, C = x.shape
    D = C // n_head
    f32 = jnp.float32

    def ln(z, w, b, eps=1e-5):
        mu = z.mean(-1, keepdims=True)
        var = ((z - mu) ** 2).mean(-1, keepdims=True)
        return (z - mu) / jnp.sqrt(var + eps) * w + b

    h = ln(x, p["ln1_w"][0].astype(f32), p["ln1_b"][0].astype(f32))
    qkv = h @ p["w_attn"].astype(f32) + p["b_attn"][0].astype(f32)
    q, k, v = jnp.split(qkv, 3, axis=-1)
    q = q.reshape(B, T, n_head, D).transpose(0, 2, 1, 3)
    k = k.reshape(B, T, n_head, D).transpose(0, 2, 1, 3)
    v = v.reshape(B, T, n_head, D).transpose(0, 2, 1, 3)
    s = jnp.einsum("bhtd,bhsd->bhts", q, k) / jnp.sqrt(float(D))
    mask = jnp.tril(jnp.ones((T, T), bool))
    s = jnp.where(mask, s, -jnp.inf)
    pr = jax.nn.softmax(s, axis=-1)
    y = jnp.einsum("bhts,bhsd->bhtd", pr, v).transpose(0, 2, 1, 3).reshape(B, T, C)
    y = y @ p["w_proj"].astype(f32) + p["b_proj"][0].astype(f32)
    x = x + y
    h2 = ln(x, p["ln2_w"][0].astype(f32), p["ln2_b"][0].astype(f32))
    f = h2 @ p["w_fc"].astype(f32) + p["b_fc"][0].astype(f32)
    f = 0.5 * f * (1.0 + jnp.tanh(jnp.sqrt(2.0 / jnp.pi) * (f + 0.044715 * f ** 3)))
    f = f @ p["w_fc_proj"].astype(f32) + p["b_fc_proj"][0].astype(f32)
    return x + f


if __name__ == "__main__":
    B, T, C, n_head = 2, 8, 32, 4
    mlp_ratio = 4.0
    H = int(mlp_ratio * C)

    keys = jax.random.split(jax.random.PRNGKey(0), 9)
    s = 0.02
    bf16 = jnp.bfloat16
    params = {
        "ln1_w": jnp.ones((1, C), jnp.float32),
        "ln1_b": jnp.zeros((1, C), jnp.float32),
        "w_attn": (s * jax.random.normal(keys[0], (C, 3 * C), jnp.float32)).astype(bf16),
        "b_attn": s * jax.random.normal(keys[1], (1, 3 * C), jnp.float32),
        "w_proj": (s * jax.random.normal(keys[2], (C, C), jnp.float32)).astype(bf16),
        "b_proj": s * jax.random.normal(keys[3], (1, C), jnp.float32),
        "ln2_w": jnp.ones((1, C), jnp.float32),
        "ln2_b": jnp.zeros((1, C), jnp.float32),
        "w_fc": (s * jax.random.normal(keys[4], (C, H), jnp.float32)).astype(bf16),
        "b_fc": s * jax.random.normal(keys[5], (1, H), jnp.float32),
        "w_fc_proj": (s * jax.random.normal(keys[6], (H, C), jnp.float32)).astype(bf16),
        "b_fc_proj": s * jax.random.normal(keys[7], (1, C), jnp.float32),
    }
    x = jax.random.normal(keys[8], (B, T, C), jnp.float32)

    block_fn = jax.jit(transformer_block, static_argnames=("n_head",))
    out = jax.block_until_ready(block_fn(x, params, n_head=n_head))

    ref = ref_block(x, params, n_head)
    assert out.shape == ref.shape
    # bf16 matmul operands / activations with f32 accumulation vs the f32 reference.
    assert jnp.allclose(out, ref, atol=1e-2, rtol=1e-2), (
        f"Pallas output mismatch vs JAX reference; "
        f"max abs err={jnp.max(jnp.abs(out - ref))}")

    print("KERNEL_OK")
</pallas_src>

<mosaic_0001>
module attributes {stable_mosaic.version = 11 : i64} {
  func.func @_ln_qkv_kernel(%arg0: i32, %arg1: i32, %arg2: memref<1x8x32xf32, #tpu.memory_space<vmem>>, %arg3: memref<1x32xf32, #tpu.memory_space<vmem>>, %arg4: memref<1x32xf32, #tpu.memory_space<vmem>>, %arg5: memref<32x96xbf16, #tpu.memory_space<vmem>>, %arg6: memref<1x96xf32, #tpu.memory_space<vmem>>, %arg7: memref<1x8x32xbf16, #tpu.memory_space<vmem>>, %arg8: memref<1x8x32xbf16, #tpu.memory_space<vmem>>, %arg9: memref<1x8x32xbf16, #tpu.memory_space<vmem>>) attributes {dimension_semantics = [#tpu.dimension_semantics<parallel>, #tpu.dimension_semantics<parallel>], iteration_bounds = array<i64: 2, 1>, scalar_prefetch = 0 : i64, scratch_operands = 0 : i64, tpu.core_type = #tpu.core_type<tc>, window_params = [{transform_indices = @transform_0, window_bounds = array<i64: 1, 8, 32>}, {pipeline_mode = #tpu.pipeline_mode<synchronous>, transform_indices = @transform_1, window_bounds = array<i64: 1, 32>}, {pipeline_mode = #tpu.pipeline_mode<synchronous>, transform_indices = @transform_2, window_bounds = array<i64: 1, 32>}, {pipeline_mode = #tpu.pipeline_mode<synchronous>, transform_indices = @transform_3, window_bounds = array<i64: 32, 96>}, {pipeline_mode = #tpu.pipeline_mode<synchronous>, transform_indices = @transform_4, window_bounds = array<i64: 1, 96>}, {transform_indices = @transform_5, window_bounds = array<i64: 1, 8, 32>}, {transform_indices = @transform_6, window_bounds = array<i64: 1, 8, 32>}, {transform_indices = @transform_7, window_bounds = array<i64: 1, 8, 32>}]} {
    %c0 = arith.constant 0 : index
    %c0_0 = arith.constant 0 : index
    %c0_1 = arith.constant 0 : index
    %0 = vector.load %arg2[%c0, %c0_0, %c0_1] : memref<1x8x32xf32, #tpu.memory_space<vmem>>, vector<1x8x32xf32>
    %1 = vector.shape_cast %0 : vector<1x8x32xf32> to vector<8x32xf32>
    %c0_2 = arith.constant 0 : index
    %c0_3 = arith.constant 0 : index
    %2 = vector.load %arg3[%c0_2, %c0_3] : memref<1x32xf32, #tpu.memory_space<vmem>>, vector<1x32xf32>
    %3 = vector.shape_cast %2 : vector<1x32xf32> to vector<32xf32>
    %c0_4 = arith.constant 0 : index
    %c0_5 = arith.constant 0 : index
    %4 = vector.load %arg4[%c0_4, %c0_5] : memref<1x32xf32, #tpu.memory_space<vmem>>, vector<1x32xf32>
    %5 = vector.shape_cast %4 : vector<1x32xf32> to vector<32xf32>
    %cst = arith.constant dense<0.000000e+00> : vector<8xf32>
    %6 = vector.multi_reduction <add>, %1, %cst [1] : vector<8x32xf32> to vector<8xf32>
    %7 = vector.shape_cast %6 : vector<8xf32> to vector<8x1xf32>
    %cst_6 = arith.constant 3.200000e+01 : f32
    %8 = vector.broadcast %cst_6 : f32 to vector<8x1xf32>
    %9 = arith.divf %7, %8 : vector<8x1xf32>
    %10 = vector.broadcast %9 : vector<8x1xf32> to vector<8x32xf32>
    %11 = arith.subf %1, %10 : vector<8x32xf32>
    %12 = arith.mulf %11, %11 : vector<8x32xf32>
    %cst_7 = arith.constant dense<0.000000e+00> : vector<8xf32>
    %13 = vector.multi_reduction <add>, %12, %cst_7 [1] : vector<8x32xf32> to vector<8xf32>
    %14 = vector.shape_cast %13 : vector<8xf32> to vector<8x1xf32>
    %cst_8 = arith.constant 3.200000e+01 : f32
    %15 = vector.broadcast %cst_8 : f32 to vector<8x1xf32>
    %16 = arith.divf %14, %15 : vector<8x1xf32>
    %17 = vector.broadcast %9 : vector<8x1xf32> to vector<8x32xf32>
    %18 = arith.subf %1, %17 : vector<8x32xf32>
    %cst_9 = arith.constant 9.99999974E-6 : f32
    %19 = vector.broadcast %cst_9 : f32 to vector<8x1xf32>
    %20 = arith.addf %16, %19 : vector<8x1xf32>
    %21 = math.rsqrt %20 : vector<8x1xf32>
    %22 = vector.broadcast %21 : vector<8x1xf32> to vector<8x32xf32>
    %23 = arith.mulf %18, %22 : vector<8x32xf32>
    %24 = vector.shape_cast %3 : vector<32xf32> to vector<1x32xf32>
    %25 = vector.broadcast %24 : vector<1x32xf32> to vector<8x32xf32>
    %26 = arith.mulf %23, %25 : vector<8x32xf32>
    %27 = vector.shape_cast %5 : vector<32xf32> to vector<1x32xf32>
    %28 = vector.broadcast %27 : vector<1x32xf32> to vector<8x32xf32>
    %29 = arith.addf %26, %28 : vector<8x32xf32>
    %30 = arith.truncf %29 : vector<8x32xf32> to vector<8x32xbf16>
    %c0_10 = arith.constant 0 : index
    %c0_11 = arith.constant 0 : index
    %31 = vector.load %arg5[%c0_10, %c0_11] : memref<32x96xbf16, #tpu.memory_space<vmem>>, vector<32x96xbf16>
    %cst_12 = arith.constant dense<0.000000e+00> : vector<8x96xf32>
    %32 = tpu.matmul %30, %31, %cst_12 {dimension_numbers = #tpu.dot_dimension_numbers<[1], [0], [0], [1], [0, 0, 1, 1], [], []>} : vector<8x32xbf16>, vector<32x96xbf16>, vector<8x96xf32> -> vector<8x96xf32>
    %c0_13 = arith.constant 0 : index
    %c0_14 = arith.constant 0 : index
    %33 = vector.load %arg6[%c0_13, %c0_14] : memref<1x96xf32, #tpu.memory_space<vmem>>, vector<1x96xf32>
    %34 = vector.shape_cast %33 : vector<1x96xf32> to vector<96xf32>
    %35 = vector.shape_cast %34 : vector<96xf32> to vector<1x96xf32>
    %36 = vector.broadcast %35 : vector<1x96xf32> to vector<8x96xf32>
    %37 = arith.addf %32, %36 : vector<8x96xf32>
    %38 = vector.extract_strided_slice %37 {offsets = [0, 0], sizes = [8, 32], strides = [1, 1]} : vector<8x96xf32> to vector<8x32xf32>
    %cst_15 = arith.constant 0.353553385 : f32
    %39 = vector.broadcast %cst_15 : f32 to vector<8x32xf32>
    %40 = arith.mulf %38, %39 : vector<8x32xf32>
    %41 = arith.truncf %40 : vector<8x32xf32> to vector<8x32xbf16>
    %c0_16 = arith.constant 0 : index
    %c0_17 = arith.constant 0 : index
    %c0_18 = arith.constant 0 : index
    %42 = vector.load %arg7[%c0_16, %c0_17, %c0_18] : memref<1x8x32xbf16, #tpu.memory_space<vmem>>, vector<1x8x32xbf16>
    %43 = vector.shape_cast %42 : vector<1x8x32xbf16> to vector<8x32xbf16>
    %44 = vector.shape_cast %41 : vector<8x32xbf16> to vector<1x8x32xbf16>
    tpu.vector_store %arg7[%c0_16, %c0_17, %c0_18], %44 {strides = array<i32>} : memref<1x8x32xbf16, #tpu.memory_space<vmem>>, vector<1x8x32xbf16>,
    %45 = vector.extract_strided_slice %37 {offsets = [0, 32], sizes = [8, 32], strides = [1, 1]} : vector<8x96xf32> to vector<8x32xf32>
    %46 = arith.truncf %45 : vector<8x32xf32> to vector<8x32xbf16>
    %c0_19 = arith.constant 0 : index
    %c0_20 = arith.constant 0 : index
    %c0_21 = arith.constant 0 : index
    %47 = vector.load %arg8[%c0_19, %c0_20, %c0_21] : memref<1x8x32xbf16, #tpu.memory_space<vmem>>, vector<1x8x32xbf16>
    %48 = vector.shape_cast %47 : vector<1x8x32xbf16> to vector<8x32xbf16>
    %49 = vector.shape_cast %46 : vector<8x32xbf16> to vector<1x8x32xbf16>
    tpu.vector_store %arg8[%c0_19, %c0_20, %c0_21], %49 {strides = array<i32>} : memref<1x8x32xbf16, #tpu.memory_space<vmem>>, vector<1x8x32xbf16>,
    %50 = vector.extract_strided_slice %37 {offsets = [0, 64], sizes = [8, 32], strides = [1, 1]} : vector<8x96xf32> to vector<8x32xf32>
    %51 = arith.truncf %50 : vector<8x32xf32> to vector<8x32xbf16>
    %c0_22 = arith.constant 0 : index
    %c0_23 = arith.constant 0 : index
    %c0_24 = arith.constant 0 : index
    %52 = vector.load %arg9[%c0_22, %c0_23, %c0_24] : memref<1x8x32xbf16, #tpu.memory_space<vmem>>, vector<1x8x32xbf16>
    %53 = vector.shape_cast %52 : vector<1x8x32xbf16> to vector<8x32xbf16>
    %54 = vector.shape_cast %51 : vector<8x32xbf16> to vector<1x8x32xbf16>
    tpu.vector_store %arg9[%c0_22, %c0_23, %c0_24], %54 {strides = array<i32>} : memref<1x8x32xbf16, #tpu.memory_space<vmem>>, vector<1x8x32xbf16>,
    return
  }
  func.func @transform_0(%arg0: i32, %arg1: i32) -> (i32, i32, i32) {
    %c0_i32 = arith.constant 0 : i32
    %c0_i32_0 = arith.constant 0 : i32
    return %arg0, %arg1, %c0_i32 : i32, i32, i32
  }
  func.func @transform_1(%arg0: i32, %arg1: i32) -> (i32, i32) {
    %c0_i32 = arith.constant 0 : i32
    %c0_i32_0 = arith.constant 0 : i32
    %c0_i32_1 = arith.constant 0 : i32
    return %c0_i32, %c0_i32_0 : i32, i32
  }
  func.func @transform_2(%arg0: i32, %arg1: i32) -> (i32, i32) {
    %c0_i32 = arith.constant 0 : i32
    %c0_i32_0 = arith.constant 0 : i32
    %c0_i32_1 = arith.constant 0 : i32
    return %c0_i32, %c0_i32_0 : i32, i32
  }
  func.func @transform_3(%arg0: i32, %arg1: i32) -> (i32, i32) {
    %c0_i32 = arith.constant 0 : i32
    %c0_i32_0 = arith.constant 0 : i32
    %c0_i32_1 = arith.constant 0 : i32
    return %c0_i32, %c0_i32_0 : i32, i32
  }
  func.func @transform_4(%arg0: i32, %arg1: i32) -> (i32, i32) {
    %c0_i32 = arith.constant 0 : i32
    %c0_i32_0 = arith.constant 0 : i32
    %c0_i32_1 = arith.constant 0 : i32
    return %c0_i32, %c0_i32_0 : i32, i32
  }
  func.func @transform_5(%arg0: i32, %arg1: i32) -> (i32, i32, i32) {
    %c0_i32 = arith.constant 0 : i32
    %c0_i32_0 = arith.constant 0 : i32
    return %arg0, %arg1, %c0_i32 : i32, i32, i32
  }
  func.func @transform_6(%arg0: i32, %arg1: i32) -> (i32, i32, i32) {
    %c0_i32 = arith.constant 0 : i32
    %c0_i32_0 = arith.constant 0 : i32
    return %arg0, %arg1, %c0_i32 : i32, i32, i32
  }
  func.func @transform_7(%arg0: i32, %arg1: i32) -> (i32, i32, i32) {
    %c0_i32 = arith.constant 0 : i32
    %c0_i32_0 = arith.constant 0 : i32
    return %arg0, %arg1, %c0_i32 : i32, i32, i32
  }
}

module attributes {stable_mosaic.version = 11 : i64} {
  func.func @_proj_mlp_kernel(%arg0: i32, %arg1: i32, %arg2: i32, %arg3: memref<1x8x32xf32, #tpu.memory_space<vmem>>, %arg4: memref<1x8x32xbf16, #tpu.memory_space<vmem>>, %arg5: memref<32x32xbf16, #tpu.memory_space<vmem>>, %arg6: memref<1x32xf32, #tpu.memory_space<vmem>>, %arg7: memref<1x32xf32, #tpu.memory_space<vmem>>, %arg8: memref<1x32xf32, #tpu.memory_space<vmem>>, %arg9: memref<32x128xbf16, #tpu.memory_space<vmem>>, %arg10: memref<1x128xf32, #tpu.memory_space<vmem>>, %arg11: memref<128x32xbf16, #tpu.memory_space<vmem>>, %arg12: memref<1x32xf32, #tpu.memory_space<vmem>>, %arg13: memref<1x8x32xf32, #tpu.memory_space<vmem>>, %arg14: memref<8x32xf32, #tpu.memory_space<vmem>>, %arg15: memref<8x32xbf16, #tpu.memory_space<vmem>>, %arg16: memref<8x32xf32, #tpu.memory_space<vmem>>) attributes {dimension_semantics = [#tpu.dimension_semantics<parallel>, #tpu.dimension_semantics<parallel>, #tpu.dimension_semantics<arbitrary>], iteration_bounds = array<i64: 2, 1, 1>, scalar_prefetch = 0 : i64, scratch_operands = 3 : i64, tpu.core_type = #tpu.core_type<tc>, window_params = [{transform_indices = @transform_0, window_bounds = array<i64: 1, 8, 32>}, {transform_indices = @transform_1, window_bounds = array<i64: 1, 8, 32>}, {pipeline_mode = #tpu.pipeline_mode<synchronous>, transform_indices = @transform_2, window_bounds = array<i64: 32, 32>}, {pipeline_mode = #tpu.pipeline_mode<synchronous>, transform_indices = @transform_3, window_bounds = array<i64: 1, 32>}, {pipeline_mode = #tpu.pipeline_mode<synchronous>, transform_indices = @transform_4, window_bounds = array<i64: 1, 32>}, {pipeline_mode = #tpu.pipeline_mode<synchronous>, transform_indices = @transform_5, window_bounds = array<i64: 1, 32>}, {transform_indices = @transform_6, window_bounds = array<i64: 32, 128>}, {transform_indices = @transform_7, window_bounds = array<i64: 1, 128>}, {transform_indices = @transform_8, window_bounds = array<i64: 128, 32>}, {pipeline_mode = #tpu.pipeline_mode<synchronous>, transform_indices = @transform_9, window_bounds = array<i64: 1, 32>}, {transform_indices = @transform_10, window_bounds = array<i64: 1, 8, 32>}]} {
    %c0_i32 = arith.constant 0 : i32
    %0 = arith.cmpi eq, %arg2, %c0_i32 : i32
    %1 = arith.extui %0 : i1 to i32
    %c0_i32_0 = arith.constant 0 : i32
    %2 = arith.cmpi ne, %1, %c0_i32_0 : i32
    scf.if %2 {
      %c0_19 = arith.constant 0 : index
      %c0_20 = arith.constant 0 : index
      %c0_21 = arith.constant 0 : index
      %33 = vector.load %arg3[%c0_19, %c0_20, %c0_21] : memref<1x8x32xf32, #tpu.memory_space<vmem>>, vector<1x8x32xf32>
      %34 = vector.shape_cast %33 : vector<1x8x32xf32> to vector<8x32xf32>
      %c0_22 = arith.constant 0 : index
      %c0_23 = arith.constant 0 : index
      %c0_24 = arith.constant 0 : index
      %35 = vector.load %arg4[%c0_22, %c0_23, %c0_24] : memref<1x8x32xbf16, #tpu.memory_space<vmem>>, vector<1x8x32xbf16>
      %36 = vector.shape_cast %35 : vector<1x8x32xbf16> to vector<8x32xbf16>
      %c0_25 = arith.constant 0 : index
      %c0_26 = arith.constant 0 : index
      %37 = vector.load %arg5[%c0_25, %c0_26] : memref<32x32xbf16, #tpu.memory_space<vmem>>, vector<32x32xbf16>
      %cst_27 = arith.constant dense<0.000000e+00> : vector<8x32xf32>
      %38 = tpu.matmul %36, %37, %cst_27 {dimension_numbers = #tpu.dot_dimension_numbers<[1], [0], [0], [1], [0, 0, 1, 1], [], []>} : vector<8x32xbf16>, vector<32x32xbf16>, vector<8x32xf32> -> vector<8x32xf32>
      %c0_28 = arith.constant 0 : index
      %c0_29 = arith.constant 0 : index
      %39 = vector.load %arg6[%c0_28, %c0_29] : memref<1x32xf32, #tpu.memory_space<vmem>>, vector<1x32xf32>
      %40 = vector.shape_cast %39 : vector<1x32xf32> to vector<32xf32>
      %41 = vector.shape_cast %40 : vector<32xf32> to vector<1x32xf32>
      %42 = vector.broadcast %41 : vector<1x32xf32> to vector<8x32xf32>
      %43 = arith.addf %38, %42 : vector<8x32xf32>
      %44 = arith.addf %34, %43 : vector<8x32xf32>
      %c0_30 = arith.constant 0 : index
      %c0_31 = arith.constant 0 : index
      %45 = vector.load %arg14[%c0_30, %c0_31] : memref<8x32xf32, #tpu.memory_space<vmem>>, vector<8x32xf32>
      tpu.vector_store %arg14[%c0_30, %c0_31], %44 {strides = array<i32>} : memref<8x32xf32, #tpu.memory_space<vmem>>, vector<8x32xf32>,
      %c0_32 = arith.constant 0 : index
      %c0_33 = arith.constant 0 : index
      %46 = vector.load %arg7[%c0_32, %c0_33] : memref<1x32xf32, #tpu.memory_space<vmem>>, vector<1x32xf32>
      %47 = vector.shape_cast %46 : vector<1x32xf32> to vector<32xf32>
      %c0_34 = arith.constant 0 : index
      %c0_35 = arith.constant 0 : index
      %48 = vector.load %arg8[%c0_34, %c0_35] : memref<1x32xf32, #tpu.memory_space<vmem>>, vector<1x32xf32>
      %49 = vector.shape_cast %48 : vector<1x32xf32> to vector<32xf32>
      %cst_36 = arith.constant dense<0.000000e+00> : vector<8xf32>
      %50 = vector.multi_reduction <add>, %44, %cst_36 [1] : vector<8x32xf32> to vector<8xf32>
      %51 = vector.shape_cast %50 : vector<8xf32> to vector<8x1xf32>
      %cst_37 = arith.constant 3.200000e+01 : f32
      %52 = vector.broadcast %cst_37 : f32 to vector<8x1xf32>
      %53 = arith.divf %51, %52 : vector<8x1xf32>
      %54 = vector.broadcast %53 : vector<8x1xf32> to vector<8x32xf32>
      %55 = arith.subf %44, %54 : vector<8x32xf32>
      %56 = arith.mulf %55, %55 : vector<8x32xf32>
      %cst_38 = arith.constant dense<0.000000e+00> : vector<8xf32>
      %57 = vector.multi_reduction <add>, %56, %cst_38 [1] : vector<8x32xf32> to vector<8xf32>
      %58 = vector.shape_cast %57 : vector<8xf32> to vector<8x1xf32>
      %cst_39 = arith.constant 3.200000e+01 : f32
      %59 = vector.broadcast %cst_39 : f32 to vector<8x1xf32>
      %60 = arith.divf %58, %59 : vector<8x1xf32>
      %61 = vector.broadcast %53 : vector<8x1xf32> to vector<8x32xf32>
      %62 = arith.subf %44, %61 : vector<8x32xf32>
      %cst_40 = arith.constant 9.99999974E-6 : f32
      %63 = vector.broadcast %cst_40 : f32 to vector<8x1xf32>
      %64 = arith.addf %60, %63 : vector<8x1xf32>
      %65 = math.rsqrt %64 : vector<8x1xf32>
      %66 = vector.broadcast %65 : vector<8x1xf32> to vector<8x32xf32>
      %67 = arith.mulf %62, %66 : vector<8x32xf32>
      %68 = vector.shape_cast %47 : vector<32xf32> to vector<1x32xf32>
      %69 = vector.broadcast %68 : vector<1x32xf32> to vector<8x32xf32>
      %70 = arith.mulf %67, %69 : vector<8x32xf32>
      %71 = vector.shape_cast %49 : vector<32xf32> to vector<1x32xf32>
      %72 = vector.broadcast %71 : vector<1x32xf32> to vector<8x32xf32>
      %73 = arith.addf %70, %72 : vector<8x32xf32>
      %74 = arith.truncf %73 : vector<8x32xf32> to vector<8x32xbf16>
      %c0_41 = arith.constant 0 : index
      %c0_42 = arith.constant 0 : index
      %75 = vector.load %arg15[%c0_41, %c0_42] : memref<8x32xbf16, #tpu.memory_space<vmem>>, vector<8x32xbf16>
      tpu.vector_store %arg15[%c0_41, %c0_42], %74 {strides = array<i32>} : memref<8x32xbf16, #tpu.memory_space<vmem>>, vector<8x32xbf16>,
      %cst_43 = arith.constant 0.000000e+00 : f32
      %76 = vector.broadcast %cst_43 : f32 to vector<8x32xf32>
      %c0_44 = arith.constant 0 : index
      %c0_45 = arith.constant 0 : index
      %77 = vector.load %arg16[%c0_44, %c0_45] : memref<8x32xf32, #tpu.memory_space<vmem>>, vector<8x32xf32>
      tpu.vector_store %arg16[%c0_44, %c0_45], %76 {strides = array<i32>} : memref<8x32xf32, #tpu.memory_space<vmem>>, vector<8x32xf32>,
    } else {
    }
    %c0 = arith.constant 0 : index
    %c0_1 = arith.constant 0 : index
    %3 = vector.load %arg15[%c0, %c0_1] : memref<8x32xbf16, #tpu.memory_space<vmem>>, vector<8x32xbf16>
    %c0_2 = arith.constant 0 : index
    %c0_3 = arith.constant 0 : index
    %4 = vector.load %arg9[%c0_2, %c0_3] : memref<32x128xbf16, #tpu.memory_space<vmem>>, vector<32x128xbf16>
    %cst = arith.constant dense<0.000000e+00> : vector<8x128xf32>
    %5 = tpu.matmul %3, %4, %cst {dimension_numbers = #tpu.dot_dimension_numbers<[1], [0], [0], [1], [0, 0, 1, 1], [], []>} : vector<8x32xbf16>, vector<32x128xbf16>, vector<8x128xf32> -> vector<8x128xf32>
    %c0_4 = arith.constant 0 : index
    %c0_5 = arith.constant 0 : index
    %6 = vector.load %arg10[%c0_4, %c0_5] : memref<1x128xf32, #tpu.memory_space<vmem>>, vector<1x128xf32>
    %7 = vector.shape_cast %6 : vector<1x128xf32> to vector<128xf32>
    %8 = vector.shape_cast %7 : vector<128xf32> to vector<1x128xf32>
    %9 = vector.broadcast %8 : vector<1x128xf32> to vector<8x128xf32>
    %10 = arith.addf %5, %9 : vector<8x128xf32>
    %cst_6 = arith.constant 5.000000e-01 : f32
    %11 = vector.broadcast %cst_6 : f32 to vector<8x128xf32>
    %12 = arith.mulf %11, %10 : vector<8x128xf32>
    %cst_7 = arith.constant 4.471500e-02 : f32
    %13 = vector.broadcast %cst_7 : f32 to vector<8x128xf32>
    %14 = arith.mulf %13, %10 : vector<8x128xf32>
    %15 = arith.mulf %14, %10 : vector<8x128xf32>
    %16 = arith.mulf %15, %10 : vector<8x128xf32>
    %17 = arith.addf %10, %16 : vector<8x128xf32>
    %cst_8 = arith.constant 0.797884583 : f32
    %18 = vector.broadcast %cst_8 : f32 to vector<8x128xf32>
    %19 = arith.mulf %18, %17 : vector<8x128xf32>
    %20 = math.tanh %19 : vector<8x128xf32>
    %cst_9 = arith.constant 1.000000e+00 : f32
    %21 = vector.broadcast %cst_9 : f32 to vector<8x128xf32>
    %22 = arith.addf %21, %20 : vector<8x128xf32>
    %23 = arith.mulf %12, %22 : vector<8x128xf32>
    %24 = arith.truncf %23 : vector<8x128xf32> to vector<8x128xbf16>
    %c0_10 = arith.constant 0 : index
    %c0_11 = arith.constant 0 : index
    %25 = vector.load %arg16[%c0_10, %c0_11] : memref<8x32xf32, #tpu.memory_space<vmem>>, vector<8x32xf32>
    %c0_12 = arith.constant 0 : index
    %c0_13 = arith.constant 0 : index
    %26 = vector.load %arg11[%c0_12, %c0_13] : memref<128x32xbf16, #tpu.memory_space<vmem>>, vector<128x32xbf16>
    %cst_14 = arith.constant dense<0.000000e+00> : vector<8x32xf32>
    %27 = tpu.matmul %24, %26, %cst_14 {dimension_numbers = #tpu.dot_dimension_numbers<[1], [0], [0], [1], [0, 0, 1, 1], [], []>} : vector<8x128xbf16>, vector<128x32xbf16>, vector<8x32xf32> -> vector<8x32xf32>
    %28 = arith.addf %25, %27 : vector<8x32xf32>
    %c0_15 = arith.constant 0 : index
    %c0_16 = arith.constant 0 : index
    %29 = vector.load %arg16[%c0_15, %c0_16] : memref<8x32xf32, #tpu.memory_space<vmem>>, vector<8x32xf32>
    tpu.vector_store %arg16[%c0_15, %c0_16], %28 {strides = array<i32>} : memref<8x32xf32, #tpu.memory_space<vmem>>, vector<8x32xf32>,
    %c0_i32_17 = arith.constant 0 : i32
    %30 = arith.cmpi eq, %arg2, %c0_i32_17 : i32
    %31 = arith.extui %30 : i1 to i32
    %c0_i32_18 = arith.constant 0 : i32
    %32 = arith.cmpi ne, %31, %c0_i32_18 : i32
    scf.if %32 {
      %c0_19 = arith.constant 0 : index
      %c0_20 = arith.constant 0 : index
      %33 = vector.load %arg14[%c0_19, %c0_20] : memref<8x32xf32, #tpu.memory_space<vmem>>, vector<8x32xf32>
      %c0_21 = arith.constant 0 : index
      %c0_22 = arith.constant 0 : index
      %34 = vector.load %arg16[%c0_21, %c0_22] : memref<8x32xf32, #tpu.memory_space<vmem>>, vector<8x32xf32>
      %35 = arith.addf %33, %34 : vector<8x32xf32>
      %c0_23 = arith.constant 0 : index
      %c0_24 = arith.constant 0 : index
      %36 = vector.load %arg12[%c0_23, %c0_24] : memref<1x32xf32, #tpu.memory_space<vmem>>, vector<1x32xf32>
      %37 = vector.shape_cast %36 : vector<1x32xf32> to vector<32xf32>
      %38 = vector.shape_cast %37 : vector<32xf32> to vector<1x32xf32>
      %39 = vector.broadcast %38 : vector<1x32xf32> to vector<8x32xf32>
      %40 = arith.addf %35, %39 : vector<8x32xf32>
      %c0_25 = arith.constant 0 : index
      %c0_26 = arith.constant 0 : index
      %c0_27 = arith.constant 0 : index
      %41 = vector.load %arg13[%c0_25, %c0_26, %c0_27] : memref<1x8x32xf32, #tpu.memory_space<vmem>>, vector<1x8x32xf32>
      %42 = vector.shape_cast %41 : vector<1x8x32xf32> to vector<8x32xf32>
      %43 = vector.shape_cast %40 : vector<8x32xf32> to vector<1x8x32xf32>
      tpu.vector_store %arg13[%c0_25, %c0_26, %c0_27], %43 {strides = array<i32>} : memref<1x8x32xf32, #tpu.memory_space<vmem>>, vector<1x8x32xf32>,
    } else {
    }
    return
  }
  func.func @transform_0(%arg0: i32, %arg1: i32, %arg2: i32) -> (i32, i32, i32) {
    %c0_i32 = arith.constant 0 : i32
    %c0_i32_0 = arith.constant 0 : i32
    return %arg0, %arg1, %c0_i32 : i32, i32, i32
  }
  func.func @transform_1(%arg0: i32, %arg1: i32, %arg2: i32) -> (i32, i32, i32) {
    %c0_i32 = arith.constant 0 : i32
    %c0_i32_0 = arith.constant 0 : i32
    return %arg0, %arg1, %c0_i32 : i32, i32, i32
  }
  func.func @transform_2(%arg0: i32, %arg1: i32, %arg2: i32) -> (i32, i32) {
    %c0_i32 = arith.constant 0 : i32
    %c0_i32_0 = arith.constant 0 : i32
    %c0_i32_1 = arith.constant 0 : i32
    return %c0_i32, %c0_i32_0 : i32, i32
  }
  func.func @transform_3(%arg0: i32, %arg1: i32, %arg2: i32) -> (i32, i32) {
    %c0_i32 = arith.constant 0 : i32
    %c0_i32_0 = arith.constant 0 : i32
    %c0_i32_1 = arith.constant 0 : i32
    return %c0_i32, %c0_i32_0 : i32, i32
  }
  func.func @transform_4(%arg0: i32, %arg1: i32, %arg2: i32) -> (i32, i32) {
    %c0_i32 = arith.constant 0 : i32
    %c0_i32_0 = arith.constant 0 : i32
    %c0_i32_1 = arith.constant 0 : i32
    return %c0_i32, %c0_i32_0 : i32, i32
  }
  func.func @transform_5(%arg0: i32, %arg1: i32, %arg2: i32) -> (i32, i32) {
    %c0_i32 = arith.constant 0 : i32
    %c0_i32_0 = arith.constant 0 : i32
    %c0_i32_1 = arith.constant 0 : i32
    return %c0_i32, %c0_i32_0 : i32, i32
  }
  func.func @transform_6(%arg0: i32, %arg1: i32, %arg2: i32) -> (i32, i32) {
    %c0_i32 = arith.constant 0 : i32
    %c0_i32_0 = arith.constant 0 : i32
    return %c0_i32, %arg2 : i32, i32
  }
  func.func @transform_7(%arg0: i32, %arg1: i32, %arg2: i32) -> (i32, i32) {
    %c0_i32 = arith.constant 0 : i32
    %c0_i32_0 = arith.constant 0 : i32
    return %c0_i32, %arg2 : i32, i32
  }
  func.func @transform_8(%arg0: i32, %arg1: i32, %arg2: i32) -> (i32, i32) {
    %c0_i32 = arith.constant 0 : i32
    %c0_i32_0 = arith.constant 0 : i32
    return %arg2, %c0_i32 : i32, i32
  }
  func.func @transform_9(%arg0: i32, %arg1: i32, %arg2: i32) -> (i32, i32) {
    %c0_i32 = arith.constant 0 : i32
    %c0_i32_0 = arith.constant 0 : i32
    %c0_i32_1 = arith.constant 0 : i32
    return %c0_i32, %c0_i32_0 : i32, i32
  }
  func.func @transform_10(%arg0: i32, %arg1: i32, %arg2: i32) -> (i32, i32, i32) {
    %c0_i32 = arith.constant 0 : i32
    %c0_i32_0 = arith.constant 0 : i32
    return %arg0, %arg1, %c0_i32 : i32, i32, i32
  }
}

module attributes {stable_mosaic.version = 11 : i64} {
  func.func @_flash_attn_kernel(%arg0: i32, %arg1: i32, %arg2: i32, %arg3: memref<1x8x32xbf16, #tpu.memory_space<vmem>>, %arg4: memref<1x8x32xbf16, #tpu.memory_space<vmem>>, %arg5: memref<1x8x32xbf16, #tpu.memory_space<vmem>>, %arg6: memref<1x8x32xbf16, #tpu.memory_space<vmem>>, %arg7: memref<4x8x1xf32, #tpu.memory_space<vmem>>, %arg8: memref<4x8x1xf32, #tpu.memory_space<vmem>>, %arg9: memref<4x8x8xf32, #tpu.memory_space<vmem>>) attributes {dimension_semantics = [#tpu.dimension_semantics<parallel>, #tpu.dimension_semantics<parallel>, #tpu.dimension_semantics<arbitrary>], iteration_bounds = array<i64: 2, 1, 1>, scalar_prefetch = 0 : i64, scratch_operands = 3 : i64, tpu.core_type = #tpu.core_type<tc>, window_params = [{transform_indices = @transform_0, window_bounds = array<i64: 1, 8, 32>}, {transform_indices = @transform_1, window_bounds = array<i64: 1, 8, 32>}, {transform_indices = @transform_2, window_bounds = array<i64: 1, 8, 32>}, {transform_indices = @transform_3, window_bounds = array<i64: 1, 8, 32>}]} {
    %c8_i32 = arith.constant 8 : i32
    %0 = arith.muli %arg1, %c8_i32 : i32
    %c7_i32 = arith.constant 7 : i32
    %1 = arith.addi %0, %c7_i32 : i32
    %c8_i32_0 = arith.constant 8 : i32
    %2 = arith.muli %arg2, %c8_i32_0 : i32
    %c7_i32_1 = arith.constant 7 : i32
    %3 = arith.addi %2, %c7_i32_1 : i32
    %4 = arith.cmpi sle, %2, %1 : i32
    %5 = arith.cmpi sgt, %3, %0 : i32
    %c0_i32 = arith.constant 0 : i32
    %6 = arith.cmpi eq, %arg2, %c0_i32 : i32
    %7 = arith.extui %6 : i1 to i32
    %c0_i32_2 = arith.constant 0 : i32
    %8 = arith.cmpi ne, %7, %c0_i32_2 : i32
    scf.if %8 {
      %cst = arith.constant -1.000000e+30 : f32
      %19 = vector.broadcast %cst : f32 to vector<4x8x1xf32>
      %c0 = arith.constant 0 : index
      %c0_7 = arith.constant 0 : index
      %c0_8 = arith.constant 0 : index
      %20 = vector.load %arg7[%c0, %c0_7, %c0_8] : memref<4x8x1xf32, #tpu.memory_space<vmem>>, vector<4x8x1xf32>
      tpu.vector_store %arg7[%c0, %c0_7, %c0_8], %19 {strides = array<i32>} : memref<4x8x1xf32, #tpu.memory_space<vmem>>, vector<4x8x1xf32>,
      %cst_9 = arith.constant 0.000000e+00 : f32
      %21 = vector.broadcast %cst_9 : f32 to vector<4x8x1xf32>
      %c0_10 = arith.constant 0 : index
      %c0_11 = arith.constant 0 : index
      %c0_12 = arith.constant 0 : index
      %22 = vector.load %arg8[%c0_10, %c0_11, %c0_12] : memref<4x8x1xf32, #tpu.memory_space<vmem>>, vector<4x8x1xf32>
      tpu.vector_store %arg8[%c0_10, %c0_11, %c0_12], %21 {strides = array<i32>} : memref<4x8x1xf32, #tpu.memory_space<vmem>>, vector<4x8x1xf32>,
      %cst_13 = arith.constant 0.000000e+00 : f32
      %23 = vector.broadcast %cst_13 : f32 to vector<4x8x8xf32>
      %c0_14 = arith.constant 0 : index
      %c0_15 = arith.constant 0 : index
      %c0_16 = arith.constant 0 : index
      %24 = vector.load %arg9[%c0_14, %c0_15, %c0_16] : memref<4x8x8xf32, #tpu.memory_space<vmem>>, vector<4x8x8xf32>
      tpu.vector_store %arg9[%c0_14, %c0_15, %c0_16], %23 {strides = array<i32>} : memref<4x8x8xf32, #tpu.memory_space<vmem>>, vector<4x8x8xf32>,
    } else {
    }
    %true = arith.constant true
    %9 = arith.xori %5, %true : i1
    %10 = arith.andi %4, %9 : i1
    %11 = arith.extui %10 : i1 to i32
    %c0_i32_3 = arith.constant 0 : i32
    %12 = arith.cmpi ne, %11, %c0_i32_3 : i32
    scf.if %12 {
      %c0 = arith.constant 0 : index
      %c0_7 = arith.constant 0 : index
      %c0_8 = arith.constant 0 : index
      %19 = vector.load %arg3[%c0, %c0_7, %c0_8] : memref<1x8x32xbf16, #tpu.memory_space<vmem>>, vector<1x8x32xbf16>
      %20 = vector.shape_cast %19 : vector<1x8x32xbf16> to vector<8x32xbf16>
      %c0_9 = arith.constant 0 : index
      %c0_10 = arith.constant 0 : index
      %c0_11 = arith.constant 0 : index
      %21 = vector.load %arg4[%c0_9, %c0_10, %c0_11] : memref<1x8x32xbf16, #tpu.memory_space<vmem>>, vector<1x8x32xbf16>
      %22 = vector.shape_cast %21 : vector<1x8x32xbf16> to vector<8x32xbf16>
      %c0_12 = arith.constant 0 : index
      %c0_13 = arith.constant 0 : index
      %c0_14 = arith.constant 0 : index
      %23 = vector.load %arg5[%c0_12, %c0_13, %c0_14] : memref<1x8x32xbf16, #tpu.memory_space<vmem>>, vector<1x8x32xbf16>
      %24 = vector.shape_cast %23 : vector<1x8x32xbf16> to vector<8x32xbf16>
      %25 = vector.extract_strided_slice %20 {offsets = [0, 0], sizes = [8, 8], strides = [1, 1]} : vector<8x32xbf16> to vector<8x8xbf16>
      %26 = vector.extract_strided_slice %22 {offsets = [0, 0], sizes = [8, 8], strides = [1, 1]} : vector<8x32xbf16> to vector<8x8xbf16>
      %cst = arith.constant dense<0.000000e+00> : vector<8x8xf32>
      %27 = tpu.matmul %25, %26, %cst {dimension_numbers = #tpu.dot_dimension_numbers<[1], [1], [0], [0], [0, 0, 1, 0], [], []>} : vector<8x8xbf16>, vector<8x8xbf16>, vector<8x8xf32> -> vector<8x8xf32>
      %c0_15 = arith.constant 0 : index
      %c0_16 = arith.constant 0 : index
      %c0_17 = arith.constant 0 : index
      %28 = vector.load %arg7[%c0_15, %c0_16, %c0_17] : memref<4x8x1xf32, #tpu.memory_space<vmem>>, vector<1x8x1xf32>
      %29 = vector.shape_cast %28 : vector<1x8x1xf32> to vector<8x1xf32>
      %cst_18 = arith.constant dense<0xFF800000> : vector<8xf32>
      %30 = vector.multi_reduction <maximumf>, %27, %cst_18 [1] : vector<8x8xf32> to vector<8xf32>
      %31 = vector.shape_cast %30 : vector<8xf32> to vector<8x1xf32>
      %32 = arith.maximumf %29, %31 : vector<8x1xf32>
      %33 = arith.subf %29, %32 : vector<8x1xf32>
      %34 = math.exp %33 : vector<8x1xf32>
      %35 = vector.broadcast %32 : vector<8x1xf32> to vector<8x8xf32>
      %36 = arith.subf %27, %35 : vector<8x8xf32>
      %37 = math.exp %36 : vector<8x8xf32>
      %c0_19 = arith.constant 0 : index
      %c0_20 = arith.constant 0 : index
      %c0_21 = arith.constant 0 : index
      %38 = vector.load %arg8[%c0_19, %c0_20, %c0_21] : memref<4x8x1xf32, #tpu.memory_space<vmem>>, vector<1x8x1xf32>
      %39 = vector.shape_cast %38 : vector<1x8x1xf32> to vector<8x1xf32>
      %40 = arith.mulf %34, %39 : vector<8x1xf32>
      %cst_22 = arith.constant dense<0.000000e+00> : vector<8xf32>
      %41 = vector.multi_reduction <add>, %37, %cst_22 [1] : vector<8x8xf32> to vector<8xf32>
      %42 = vector.shape_cast %41 : vector<8xf32> to vector<8x1xf32>
      %43 = arith.addf %40, %42 : vector<8x1xf32>
      %c0_23 = arith.constant 0 : index
      %c0_24 = arith.constant 0 : index
      %c0_25 = arith.constant 0 : index
      %44 = vector.load %arg8[%c0_23, %c0_24, %c0_25] : memref<4x8x1xf32, #tpu.memory_space<vmem>>, vector<1x8x1xf32>
      %45 = vector.shape_cast %44 : vector<1x8x1xf32> to vector<8x1xf32>
      %46 = vector.shape_cast %43 : vector<8x1xf32> to vector<1x8x1xf32>
      tpu.vector_store %arg8[%c0_23, %c0_24, %c0_25], %46 {strides = array<i32>} : memref<4x8x1xf32, #tpu.memory_space<vmem>>, vector<1x8x1xf32>,
      %c0_26 = arith.constant 0 : index
      %c0_27 = arith.constant 0 : index
      %c0_28 = arith.constant 0 : index
      %47 = vector.load %arg9[%c0_26, %c0_27, %c0_28] : memref<4x8x8xf32, #tpu.memory_space<vmem>>, vector<1x8x8xf32>
      %48 = vector.shape_cast %47 : vector<1x8x8xf32> to vector<8x8xf32>
      %49 = vector.broadcast %34 : vector<8x1xf32> to vector<8x8xf32>
      %50 = arith.mulf %49, %48 : vector<8x8xf32>
      %51 = arith.truncf %37 : vector<8x8xf32> to vector<8x8xbf16>
      %52 = vector.extract_strided_slice %24 {offsets = [0, 0], sizes = [8, 8], strides = [1, 1]} : vector<8x32xbf16> to vector<8x8xbf16>
      %cst_29 = arith.constant dense<0.000000e+00> : vector<8x8xf32>
      %53 = tpu.matmul %51, %52, %cst_29 {dimension_numbers = #tpu.dot_dimension_numbers<[1], [0], [0], [1], [0, 0, 1, 1], [], []>} : vector<8x8xbf16>, vector<8x8xbf16>, vector<8x8xf32> -> vector<8x8xf32>
      %54 = arith.addf %50, %53 : vector<8x8xf32>
      %c0_30 = arith.constant 0 : index
      %c0_31 = arith.constant 0 : index
      %c0_32 = arith.constant 0 : index
      %55 = vector.load %arg9[%c0_30, %c0_31, %c0_32] : memref<4x8x8xf32, #tpu.memory_space<vmem>>, vector<1x8x8xf32>
      %56 = vector.shape_cast %55 : vector<1x8x8xf32> to vector<8x8xf32>
      %57 = vector.shape_cast %54 : vector<8x8xf32> to vector<1x8x8xf32>
      tpu.vector_store %arg9[%c0_30, %c0_31, %c0_32], %57 {strides = array<i32>} : memref<4x8x8xf32, #tpu.memory_space<vmem>>, vector<1x8x8xf32>,
      %c0_33 = arith.constant 0 : index
      %c0_34 = arith.constant 0 : index
      %c0_35 = arith.constant 0 : index
      %58 = vector.load %arg7[%c0_33, %c0_34, %c0_35] : memref<4x8x1xf32, #tpu.memory_space<vmem>>, vector<1x8x1xf32>
      %59 = vector.shape_cast %58 : vector<1x8x1xf32> to vector<8x1xf32>
      %60 = vector.shape_cast %32 : vector<8x1xf32> to vector<1x8x1xf32>
      tpu.vector_store %arg7[%c0_33, %c0_34, %c0_35], %60 {strides = array<i32>} : memref<4x8x1xf32, #tpu.memory_space<vmem>>, vector<1x8x1xf32>,
      %61 = vector.extract_strided_slice %20 {offsets = [0, 8], sizes = [8, 8], strides = [1, 1]} : vector<8x32xbf16> to vector<8x8xbf16>
      %62 = vector.extract_strided_slice %22 {offsets = [0, 8], sizes = [8, 8], strides = [1, 1]} : vector<8x32xbf16> to vector<8x8xbf16>
      %cst_36 = arith.constant dense<0.000000e+00> : vector<8x8xf32>
      %63 = tpu.matmul %61, %62, %cst_36 {dimension_numbers = #tpu.dot_dimension_numbers<[1], [1], [0], [0], [0, 0, 1, 0], [], []>} : vector<8x8xbf16>, vector<8x8xbf16>, vector<8x8xf32> -> vector<8x8xf32>
      %c1 = arith.constant 1 : index
      %c0_37 = arith.constant 0 : index
      %c0_38 = arith.constant 0 : index
      %64 = vector.load %arg7[%c1, %c0_37, %c0_38] : memref<4x8x1xf32, #tpu.memory_space<vmem>>, vector<1x8x1xf32>
      %65 = vector.shape_cast %64 : vector<1x8x1xf32> to vector<8x1xf32>
      %cst_39 = arith.constant dense<0xFF800000> : vector<8xf32>
      %66 = vector.multi_reduction <maximumf>, %63, %cst_39 [1] : vector<8x8xf32> to vector<8xf32>
      %67 = vector.shape_cast %66 : vector<8xf32> to vector<8x1xf32>
      %68 = arith.maximumf %65, %67 : vector<8x1xf32>
      %69 = arith.subf %65, %68 : vector<8x1xf32>
      %70 = math.exp %69 : vector<8x1xf32>
      %71 = vector.broadcast %68 : vector<8x1xf32> to vector<8x8xf32>
      %72 = arith.subf %63, %71 : vector<8x8xf32>
      %73 = math.exp %72 : vector<8x8xf32>
      %c1_40 = arith.constant 1 : index
      %c0_41 = arith.constant 0 : index
      %c0_42 = arith.constant 0 : index
      %74 = vector.load %arg8[%c1_40, %c0_41, %c0_42] : memref<4x8x1xf32, #tpu.memory_space<vmem>>, vector<1x8x1xf32>
      %75 = vector.shape_cast %74 : vector<1x8x1xf32> to vector<8x1xf32>
      %76 = arith.mulf %70, %75 : vector<8x1xf32>
      %cst_43 = arith.constant dense<0.000000e+00> : vector<8xf32>
      %77 = vector.multi_reduction <add>, %73, %cst_43 [1] : vector<8x8xf32> to vector<8xf32>
      %78 = vector.shape_cast %77 : vector<8xf32> to vector<8x1xf32>
      %79 = arith.addf %76, %78 : vector<8x1xf32>
      %c1_44 = arith.constant 1 : index
      %c0_45 = arith.constant 0 : index
      %c0_46 = arith.constant 0 : index
      %80 = vector.load %arg8[%c1_44, %c0_45, %c0_46] : memref<4x8x1xf32, #tpu.memory_space<vmem>>, vector<1x8x1xf32>
      %81 = vector.shape_cast %80 : vector<1x8x1xf32> to vector<8x1xf32>
      %82 = vector.shape_cast %79 : vector<8x1xf32> to vector<1x8x1xf32>
      tpu.vector_store %arg8[%c1_44, %c0_45, %c0_46], %82 {strides = array<i32>} : memref<4x8x1xf32, #tpu.memory_space<vmem>>, vector<1x8x1xf32>,
      %c1_47 = arith.constant 1 : index
      %c0_48 = arith.constant 0 : index
      %c0_49 = arith.constant 0 : index
      %83 = vector.load %arg9[%c1_47, %c0_48, %c0_49] : memref<4x8x8xf32, #tpu.memory_space<vmem>>, vector<1x8x8xf32>
      %84 = vector.shape_cast %83 : vector<1x8x8xf32> to vector<8x8xf32>
      %85 = vector.broadcast %70 : vector<8x1xf32> to vector<8x8xf32>
      %86 = arith.mulf %85, %84 : vector<8x8xf32>
      %87 = arith.truncf %73 : vector<8x8xf32> to vector<8x8xbf16>
      %88 = vector.extract_strided_slice %24 {offsets = [0, 8], sizes = [8, 8], strides = [1, 1]} : vector<8x32xbf16> to vector<8x8xbf16>
      %cst_50 = arith.constant dense<0.000000e+00> : vector<8x8xf32>
      %89 = tpu.matmul %87, %88, %cst_50 {dimension_numbers = #tpu.dot_dimension_numbers<[1], [0], [0], [1], [0, 0, 1, 1], [], []>} : vector<8x8xbf16>, vector<8x8xbf16>, vector<8x8xf32> -> vector<8x8xf32>
      %90 = arith.addf %86, %89 : vector<8x8xf32>
      %c1_51 = arith.constant 1 : index
      %c0_52 = arith.constant 0 : index
      %c0_53 = arith.constant 0 : index
      %91 = vector.load %arg9[%c1_51, %c0_52, %c0_53] : memref<4x8x8xf32, #tpu.memory_space<vmem>>, vector<1x8x8xf32>
      %92 = vector.shape_cast %91 : vector<1x8x8xf32> to vector<8x8xf32>
      %93 = vector.shape_cast %90 : vector<8x8xf32> to vector<1x8x8xf32>
      tpu.vector_store %arg9[%c1_51, %c0_52, %c0_53], %93 {strides = array<i32>} : memref<4x8x8xf32, #tpu.memory_space<vmem>>, vector<1x8x8xf32>,
      %c1_54 = arith.constant 1 : index
      %c0_55 = arith.constant 0 : index
      %c0_56 = arith.constant 0 : index
      %94 = vector.load %arg7[%c1_54, %c0_55, %c0_56] : memref<4x8x1xf32, #tpu.memory_space<vmem>>, vector<1x8x1xf32>
      %95 = vector.shape_cast %94 : vector<1x8x1xf32> to vector<8x1xf32>
      %96 = vector.shape_cast %68 : vector<8x1xf32> to vector<1x8x1xf32>
      tpu.vector_store %arg7[%c1_54, %c0_55, %c0_56], %96 {strides = array<i32>} : memref<4x8x1xf32, #tpu.memory_space<vmem>>, vector<1x8x1xf32>,
      %97 = vector.extract_strided_slice %20 {offsets = [0, 16], sizes = [8, 8], strides = [1, 1]} : vector<8x32xbf16> to vector<8x8xbf16>
      %98 = vector.extract_strided_slice %22 {offsets = [0, 16], sizes = [8, 8], strides = [1, 1]} : vector<8x32xbf16> to vector<8x8xbf16>
      %cst_57 = arith.constant dense<0.000000e+00> : vector<8x8xf32>
      %99 = tpu.matmul %97, %98, %cst_57 {dimension_numbers = #tpu.dot_dimension_numbers<[1], [1], [0], [0], [0, 0, 1, 0], [], []>} : vector<8x8xbf16>, vector<8x8xbf16>, vector<8x8xf32> -> vector<8x8xf32>
      %c2 = arith.constant 2 : index
      %c0_58 = arith.constant 0 : index
      %c0_59 = arith.constant 0 : index
      %100 = vector.load %arg7[%c2, %c0_58, %c0_59] : memref<4x8x1xf32, #tpu.memory_space<vmem>>, vector<1x8x1xf32>
      %101 = vector.shape_cast %100 : vector<1x8x1xf32> to vector<8x1xf32>
      %cst_60 = arith.constant dense<0xFF800000> : vector<8xf32>
      %102 = vector.multi_reduction <maximumf>, %99, %cst_60 [1] : vector<8x8xf32> to vector<8xf32>
      %103 = vector.shape_cast %102 : vector<8xf32> to vector<8x1xf32>
      %104 = arith.maximumf %101, %103 : vector<8x1xf32>
      %105 = arith.subf %101, %104 : vector<8x1xf32>
      %106 = math.exp %105 : vector<8x1xf32>
      %107 = vector.broadcast %104 : vector<8x1xf32> to vector<8x8xf32>
      %108 = arith.subf %99, %107 : vector<8x8xf32>
      %109 = math.exp %108 : vector<8x8xf32>
      %c2_61 = arith.constant 2 : index
      %c0_62 = arith.constant 0 : index
      %c0_63 = arith.constant 0 : index
      %110 = vector.load %arg8[%c2_61, %c0_62, %c0_63] : memref<4x8x1xf32, #tpu.memory_space<vmem>>, vector<1x8x1xf32>
      %111 = vector.shape_cast %110 : vector<1x8x1xf32> to vector<8x1xf32>
      %112 = arith.mulf %106, %111 : vector<8x1xf32>
      %cst_64 = arith.constant dense<0.000000e+00> : vector<8xf32>
      %113 = vector.multi_reduction <add>, %109, %cst_64 [1] : vector<8x8xf32> to vector<8xf32>
      %114 = vector.shape_cast %113 : vector<8xf32> to vector<8x1xf32>
      %115 = arith.addf %112, %114 : vector<8x1xf32>
      %c2_65 = arith.constant 2 : index
      %c0_66 = arith.constant 0 : index
      %c0_67 = arith.constant 0 : index
      %116 = vector.load %arg8[%c2_65, %c0_66, %c0_67] : memref<4x8x1xf32, #tpu.memory_space<vmem>>, vector<1x8x1xf32>
      %117 = vector.shape_cast %116 : vector<1x8x1xf32> to vector<8x1xf32>
      %118 = vector.shape_cast %115 : vector<8x1xf32> to vector<1x8x1xf32>
      tpu.vector_store %arg8[%c2_65, %c0_66, %c0_67], %118 {strides = array<i32>} : memref<4x8x1xf32, #tpu.memory_space<vmem>>, vector<1x8x1xf32>,
      %c2_68 = arith.constant 2 : index
      %c0_69 = arith.constant 0 : index
      %c0_70 = arith.constant 0 : index
      %119 = vector.load %arg9[%c2_68, %c0_69, %c0_70] : memref<4x8x8xf32, #tpu.memory_space<vmem>>, vector<1x8x8xf32>
      %120 = vector.shape_cast %119 : vector<1x8x8xf32> to vector<8x8xf32>
      %121 = vector.broadcast %106 : vector<8x1xf32> to vector<8x8xf32>
      %122 = arith.mulf %121, %120 : vector<8x8xf32>
      %123 = arith.truncf %109 : vector<8x8xf32> to vector<8x8xbf16>
      %124 = vector.extract_strided_slice %24 {offsets = [0, 16], sizes = [8, 8], strides = [1, 1]} : vector<8x32xbf16> to vector<8x8xbf16>
      %cst_71 = arith.constant dense<0.000000e+00> : vector<8x8xf32>
      %125 = tpu.matmul %123, %124, %cst_71 {dimension_numbers = #tpu.dot_dimension_numbers<[1], [0], [0], [1], [0, 0, 1, 1], [], []>} : vector<8x8xbf16>, vector<8x8xbf16>, vector<8x8xf32> -> vector<8x8xf32>
      %126 = arith.addf %122, %125 : vector<8x8xf32>
      %c2_72 = arith.constant 2 : index
      %c0_73 = arith.constant 0 : index
      %c0_74 = arith.constant 0 : index
      %127 = vector.load %arg9[%c2_72, %c0_73, %c0_74] : memref<4x8x8xf32, #tpu.memory_space<vmem>>, vector<1x8x8xf32>
      %128 = vector.shape_cast %127 : vector<1x8x8xf32> to vector<8x8xf32>
      %129 = vector.shape_cast %126 : vector<8x8xf32> to vector<1x8x8xf32>
      tpu.vector_store %arg9[%c2_72, %c0_73, %c0_74], %129 {strides = array<i32>} : memref<4x8x8xf32, #tpu.memory_space<vmem>>, vector<1x8x8xf32>,
      %c2_75 = arith.constant 2 : index
      %c0_76 = arith.constant 0 : index
      %c0_77 = arith.constant 0 : index
      %130 = vector.load %arg7[%c2_75, %c0_76, %c0_77] : memref<4x8x1xf32, #tpu.memory_space<vmem>>, vector<1x8x1xf32>
      %131 = vector.shape_cast %130 : vector<1x8x1xf32> to vector<8x1xf32>
      %132 = vector.shape_cast %104 : vector<8x1xf32> to vector<1x8x1xf32>
      tpu.vector_store %arg7[%c2_75, %c0_76, %c0_77], %132 {strides = array<i32>} : memref<4x8x1xf32, #tpu.memory_space<vmem>>, vector<1x8x1xf32>,
      %133 = vector.extract_strided_slice %20 {offsets = [0, 24], sizes = [8, 8], strides = [1, 1]} : vector<8x32xbf16> to vector<8x8xbf16>
      %134 = vector.extract_strided_slice %22 {offsets = [0, 24], sizes = [8, 8], strides = [1, 1]} : vector<8x32xbf16> to vector<8x8xbf16>
      %cst_78 = arith.constant dense<0.000000e+00> : vector<8x8xf32>
      %135 = tpu.matmul %133, %134, %cst_78 {dimension_numbers = #tpu.dot_dimension_numbers<[1], [1], [0], [0], [0, 0, 1, 0], [], []>} : vector<8x8xbf16>, vector<8x8xbf16>, vector<8x8xf32> -> vector<8x8xf32>
      %c3 = arith.constant 3 : index
      %c0_79 = arith.constant 0 : index
      %c0_80 = arith.constant 0 : index
      %136 = vector.load %arg7[%c3, %c0_79, %c0_80] : memref<4x8x1xf32, #tpu.memory_space<vmem>>, vector<1x8x1xf32>
      %137 = vector.shape_cast %136 : vector<1x8x1xf32> to vector<8x1xf32>
      %cst_81 = arith.constant dense<0xFF800000> : vector<8xf32>
      %138 = vector.multi_reduction <maximumf>, %135, %cst_81 [1] : vector<8x8xf32> to vector<8xf32>
      %139 = vector.shape_cast %138 : vector<8xf32> to vector<8x1xf32>
      %140 = arith.maximumf %137, %139 : vector<8x1xf32>
      %141 = arith.subf %137, %140 : vector<8x1xf32>
      %142 = math.exp %141 : vector<8x1xf32>
      %143 = vector.broadcast %140 : vector<8x1xf32> to vector<8x8xf32>
      %144 = arith.subf %135, %143 : vector<8x8xf32>
      %145 = math.exp %144 : vector<8x8xf32>
      %c3_82 = arith.constant 3 : index
      %c0_83 = arith.constant 0 : index
      %c0_84 = arith.constant 0 : index
      %146 = vector.load %arg8[%c3_82, %c0_83, %c0_84] : memref<4x8x1xf32, #tpu.memory_space<vmem>>, vector<1x8x1xf32>
      %147 = vector.shape_cast %146 : vector<1x8x1xf32> to vector<8x1xf32>
      %148 = arith.mulf %142, %147 : vector<8x1xf32>
      %cst_85 = arith.constant dense<0.000000e+00> : vector<8xf32>
      %149 = vector.multi_reduction <add>, %145, %cst_85 [1] : vector<8x8xf32> to vector<8xf32>
      %150 = vector.shape_cast %149 : vector<8xf32> to vector<8x1xf32>
      %151 = arith.addf %148, %150 : vector<8x1xf32>
      %c3_86 = arith.constant 3 : index
      %c0_87 = arith.constant 0 : index
      %c0_88 = arith.constant 0 : index
      %152 = vector.load %arg8[%c3_86, %c0_87, %c0_88] : memref<4x8x1xf32, #tpu.memory_space<vmem>>, vector<1x8x1xf32>
      %153 = vector.shape_cast %152 : vector<1x8x1xf32> to vector<8x1xf32>
      %154 = vector.shape_cast %151 : vector<8x1xf32> to vector<1x8x1xf32>
      tpu.vector_store %arg8[%c3_86, %c0_87, %c0_88], %154 {strides = array<i32>} : memref<4x8x1xf32, #tpu.memory_space<vmem>>, vector<1x8x1xf32>,
      %c3_89 = arith.constant 3 : index
      %c0_90 = arith.constant 0 : index
      %c0_91 = arith.constant 0 : index
      %155 = vector.load %arg9[%c3_89, %c0_90, %c0_91] : memref<4x8x8xf32, #tpu.memory_space<vmem>>, vector<1x8x8xf32>
      %156 = vector.shape_cast %155 : vector<1x8x8xf32> to vector<8x8xf32>
      %157 = vector.broadcast %142 : vector<8x1xf32> to vector<8x8xf32>
      %158 = arith.mulf %157, %156 : vector<8x8xf32>
      %159 = arith.truncf %145 : vector<8x8xf32> to vector<8x8xbf16>
      %160 = vector.extract_strided_slice %24 {offsets = [0, 24], sizes = [8, 8], strides = [1, 1]} : vector<8x32xbf16> to vector<8x8xbf16>
      %cst_92 = arith.constant dense<0.000000e+00> : vector<8x8xf32>
      %161 = tpu.matmul %159, %160, %cst_92 {dimension_numbers = #tpu.dot_dimension_numbers<[1], [0], [0], [1], [0, 0, 1, 1], [], []>} : vector<8x8xbf16>, vector<8x8xbf16>, vector<8x8xf32> -> vector<8x8xf32>
      %162 = arith.addf %158, %161 : vector<8x8xf32>
      %c3_93 = arith.constant 3 : index
      %c0_94 = arith.constant 0 : index
      %c0_95 = arith.constant 0 : index
      %163 = vector.load %arg9[%c3_93, %c0_94, %c0_95] : memref<4x8x8xf32, #tpu.memory_space<vmem>>, vector<1x8x8xf32>
      %164 = vector.shape_cast %163 : vector<1x8x8xf32> to vector<8x8xf32>
      %165 = vector.shape_cast %162 : vector<8x8xf32> to vector<1x8x8xf32>
      tpu.vector_store %arg9[%c3_93, %c0_94, %c0_95], %165 {strides = array<i32>} : memref<4x8x8xf32, #tpu.memory_space<vmem>>, vector<1x8x8xf32>,
      %c3_96 = arith.constant 3 : index
      %c0_97 = arith.constant 0 : index
      %c0_98 = arith.constant 0 : index
      %166 = vector.load %arg7[%c3_96, %c0_97, %c0_98] : memref<4x8x1xf32, #tpu.memory_space<vmem>>, vector<1x8x1xf32>
      %167 = vector.shape_cast %166 : vector<1x8x1xf32> to vector<8x1xf32>
      %168 = vector.shape_cast %140 : vector<8x1xf32> to vector<1x8x1xf32>
      tpu.vector_store %arg7[%c3_96, %c0_97, %c0_98], %168 {strides = array<i32>} : memref<4x8x1xf32, #tpu.memory_space<vmem>>, vector<1x8x1xf32>,
    } else {
    }
    %13 = arith.andi %4, %5 : i1
    %14 = arith.extui %13 : i1 to i32
    %c0_i32_4 = arith.constant 0 : i32
    %15 = arith.cmpi ne, %14, %c0_i32_4 : i32
    scf.if %15 {
      %c0 = arith.constant 0 : index
      %c0_7 = arith.constant 0 : index
      %c0_8 = arith.constant 0 : index
      %19 = vector.load %arg3[%c0, %c0_7, %c0_8] : memref<1x8x32xbf16, #tpu.memory_space<vmem>>, vector<1x8x32xbf16>
      %20 = vector.shape_cast %19 : vector<1x8x32xbf16> to vector<8x32xbf16>
      %c0_9 = arith.constant 0 : index
      %c0_10 = arith.constant 0 : index
      %c0_11 = arith.constant 0 : index
      %21 = vector.load %arg4[%c0_9, %c0_10, %c0_11] : memref<1x8x32xbf16, #tpu.memory_space<vmem>>, vector<1x8x32xbf16>
      %22 = vector.shape_cast %21 : vector<1x8x32xbf16> to vector<8x32xbf16>
      %c0_12 = arith.constant 0 : index
      %c0_13 = arith.constant 0 : index
      %c0_14 = arith.constant 0 : index
      %23 = vector.load %arg5[%c0_12, %c0_13, %c0_14] : memref<1x8x32xbf16, #tpu.memory_space<vmem>>, vector<1x8x32xbf16>
      %24 = vector.shape_cast %23 : vector<1x8x32xbf16> to vector<8x32xbf16>
      %25 = tpu.iota {dimensions = array<i32: 0>} : vector<8x8xi32>
      %26 = vector.broadcast %0 : i32 to vector<8x8xi32>
      %27 = arith.addi %26, %25 : vector<8x8xi32>
      %28 = tpu.iota {dimensions = array<i32: 1>} : vector<8x8xi32>
      %29 = vector.broadcast %2 : i32 to vector<8x8xi32>
      %30 = arith.addi %29, %28 : vector<8x8xi32>
      %31 = arith.cmpi sgt, %30, %27 : vector<8x8xi32>
      %32 = vector.extract_strided_slice %20 {offsets = [0, 0], sizes = [8, 8], strides = [1, 1]} : vector<8x32xbf16> to vector<8x8xbf16>
      %33 = vector.extract_strided_slice %22 {offsets = [0, 0], sizes = [8, 8], strides = [1, 1]} : vector<8x32xbf16> to vector<8x8xbf16>
      %cst = arith.constant dense<0.000000e+00> : vector<8x8xf32>
      %34 = tpu.matmul %32, %33, %cst {dimension_numbers = #tpu.dot_dimension_numbers<[1], [1], [0], [0], [0, 0, 1, 0], [], []>} : vector<8x8xbf16>, vector<8x8xbf16>, vector<8x8xf32> -> vector<8x8xf32>
      %cst_15 = arith.constant -1.000000e+30 : f32
      %35 = vector.broadcast %cst_15 : f32 to vector<8x8xf32>
      %36 = arith.select %31, %35, %34 : vector<8x8xi1>, vector<8x8xf32>
      %c0_16 = arith.constant 0 : index
      %c0_17 = arith.constant 0 : index
      %c0_18 = arith.constant 0 : index
      %37 = vector.load %arg7[%c0_16, %c0_17, %c0_18] : memref<4x8x1xf32, #tpu.memory_space<vmem>>, vector<1x8x1xf32>
      %38 = vector.shape_cast %37 : vector<1x8x1xf32> to vector<8x1xf32>
      %cst_19 = arith.constant dense<0xFF800000> : vector<8xf32>
      %39 = vector.multi_reduction <maximumf>, %36, %cst_19 [1] : vector<8x8xf32> to vector<8xf32>
      %40 = vector.shape_cast %39 : vector<8xf32> to vector<8x1xf32>
      %41 = arith.maximumf %38, %40 : vector<8x1xf32>
      %42 = arith.subf %38, %41 : vector<8x1xf32>
      %43 = math.exp %42 : vector<8x1xf32>
      %44 = vector.broadcast %41 : vector<8x1xf32> to vector<8x8xf32>
      %45 = arith.subf %36, %44 : vector<8x8xf32>
      %46 = math.exp %45 : vector<8x8xf32>
      %c0_20 = arith.constant 0 : index
      %c0_21 = arith.constant 0 : index
      %c0_22 = arith.constant 0 : index
      %47 = vector.load %arg8[%c0_20, %c0_21, %c0_22] : memref<4x8x1xf32, #tpu.memory_space<vmem>>, vector<1x8x1xf32>
      %48 = vector.shape_cast %47 : vector<1x8x1xf32> to vector<8x1xf32>
      %49 = arith.mulf %43, %48 : vector<8x1xf32>
      %cst_23 = arith.constant dense<0.000000e+00> : vector<8xf32>
      %50 = vector.multi_reduction <add>, %46, %cst_23 [1] : vector<8x8xf32> to vector<8xf32>
      %51 = vector.shape_cast %50 : vector<8xf32> to vector<8x1xf32>
      %52 = arith.addf %49, %51 : vector<8x1xf32>
      %c0_24 = arith.constant 0 : index
      %c0_25 = arith.constant 0 : index
      %c0_26 = arith.constant 0 : index
      %53 = vector.load %arg8[%c0_24, %c0_25, %c0_26] : memref<4x8x1xf32, #tpu.memory_space<vmem>>, vector<1x8x1xf32>
      %54 = vector.shape_cast %53 : vector<1x8x1xf32> to vector<8x1xf32>
      %55 = vector.shape_cast %52 : vector<8x1xf32> to vector<1x8x1xf32>
      tpu.vector_store %arg8[%c0_24, %c0_25, %c0_26], %55 {strides = array<i32>} : memref<4x8x1xf32, #tpu.memory_space<vmem>>, vector<1x8x1xf32>,
      %c0_27 = arith.constant 0 : index
      %c0_28 = arith.constant 0 : index
      %c0_29 = arith.constant 0 : index
      %56 = vector.load %arg9[%c0_27, %c0_28, %c0_29] : memref<4x8x8xf32, #tpu.memory_space<vmem>>, vector<1x8x8xf32>
      %57 = vector.shape_cast %56 : vector<1x8x8xf32> to vector<8x8xf32>
      %58 = vector.broadcast %43 : vector<8x1xf32> to vector<8x8xf32>
      %59 = arith.mulf %58, %57 : vector<8x8xf32>
      %60 = arith.truncf %46 : vector<8x8xf32> to vector<8x8xbf16>
      %61 = vector.extract_strided_slice %24 {offsets = [0, 0], sizes = [8, 8], strides = [1, 1]} : vector<8x32xbf16> to vector<8x8xbf16>
      %cst_30 = arith.constant dense<0.000000e+00> : vector<8x8xf32>
      %62 = tpu.matmul %60, %61, %cst_30 {dimension_numbers = #tpu.dot_dimension_numbers<[1], [0], [0], [1], [0, 0, 1, 1], [], []>} : vector<8x8xbf16>, vector<8x8xbf16>, vector<8x8xf32> -> vector<8x8xf32>
      %63 = arith.addf %59, %62 : vector<8x8xf32>
      %c0_31 = arith.constant 0 : index
      %c0_32 = arith.constant 0 : index
      %c0_33 = arith.constant 0 : index
      %64 = vector.load %arg9[%c0_31, %c0_32, %c0_33] : memref<4x8x8xf32, #tpu.memory_space<vmem>>, vector<1x8x8xf32>
      %65 = vector.shape_cast %64 : vector<1x8x8xf32> to vector<8x8xf32>
      %66 = vector.shape_cast %63 : vector<8x8xf32> to vector<1x8x8xf32>
      tpu.vector_store %arg9[%c0_31, %c0_32, %c0_33], %66 {strides = array<i32>} : memref<4x8x8xf32, #tpu.memory_space<vmem>>, vector<1x8x8xf32>,
      %c0_34 = arith.constant 0 : index
      %c0_35 = arith.constant 0 : index
      %c0_36 = arith.constant 0 : index
      %67 = vector.load %arg7[%c0_34, %c0_35, %c0_36] : memref<4x8x1xf32, #tpu.memory_space<vmem>>, vector<1x8x1xf32>
      %68 = vector.shape_cast %67 : vector<1x8x1xf32> to vector<8x1xf32>
      %69 = vector.shape_cast %41 : vector<8x1xf32> to vector<1x8x1xf32>
      tpu.vector_store %arg7[%c0_34, %c0_35, %c0_36], %69 {strides = array<i32>} : memref<4x8x1xf32, #tpu.memory_space<vmem>>, vector<1x8x1xf32>,
      %70 = vector.extract_strided_slice %20 {offsets = [0, 8], sizes = [8, 8], strides = [1, 1]} : vector<8x32xbf16> to vector<8x8xbf16>
      %71 = vector.extract_strided_slice %22 {offsets = [0, 8], sizes = [8, 8], strides = [1, 1]} : vector<8x32xbf16> to vector<8x8xbf16>
      %cst_37 = arith.constant dense<0.000000e+00> : vector<8x8xf32>
      %72 = tpu.matmul %70, %71, %cst_37 {dimension_numbers = #tpu.dot_dimension_numbers<[1], [1], [0], [0], [0, 0, 1, 0], [], []>} : vector<8x8xbf16>, vector<8x8xbf16>, vector<8x8xf32> -> vector<8x8xf32>
      %cst_38 = arith.constant -1.000000e+30 : f32
      %73 = vector.broadcast %cst_38 : f32 to vector<8x8xf32>
      %74 = arith.select %31, %73, %72 : vector<8x8xi1>, vector<8x8xf32>
      %c1 = arith.constant 1 : index
      %c0_39 = arith.constant 0 : index
      %c0_40 = arith.constant 0 : index
      %75 = vector.load %arg7[%c1, %c0_39, %c0_40] : memref<4x8x1xf32, #tpu.memory_space<vmem>>, vector<1x8x1xf32>
      %76 = vector.shape_cast %75 : vector<1x8x1xf32> to vector<8x1xf32>
      %cst_41 = arith.constant dense<0xFF800000> : vector<8xf32>
      %77 = vector.multi_reduction <maximumf>, %74, %cst_41 [1] : vector<8x8xf32> to vector<8xf32>
      %78 = vector.shape_cast %77 : vector<8xf32> to vector<8x1xf32>
      %79 = arith.maximumf %76, %78 : vector<8x1xf32>
      %80 = arith.subf %76, %79 : vector<8x1xf32>
      %81 = math.exp %80 : vector<8x1xf32>
      %82 = vector.broadcast %79 : vector<8x1xf32> to vector<8x8xf32>
      %83 = arith.subf %74, %82 : vector<8x8xf32>
      %84 = math.exp %83 : vector<8x8xf32>
      %c1_42 = arith.constant 1 : index
      %c0_43 = arith.constant 0 : index
      %c0_44 = arith.constant 0 : index
      %85 = vector.load %arg8[%c1_42, %c0_43, %c0_44] : memref<4x8x1xf32, #tpu.memory_space<vmem>>, vector<1x8x1xf32>
      %86 = vector.shape_cast %85 : vector<1x8x1xf32> to vector<8x1xf32>
      %87 = arith.mulf %81, %86 : vector<8x1xf32>
      %cst_45 = arith.constant dense<0.000000e+00> : vector<8xf32>
      %88 = vector.multi_reduction <add>, %84, %cst_45 [1] : vector<8x8xf32> to vector<8xf32>
      %89 = vector.shape_cast %88 : vector<8xf32> to vector<8x1xf32>
      %90 = arith.addf %87, %89 : vector<8x1xf32>
      %c1_46 = arith.constant 1 : index
      %c0_47 = arith.constant 0 : index
      %c0_48 = arith.constant 0 : index
      %91 = vector.load %arg8[%c1_46, %c0_47, %c0_48] : memref<4x8x1xf32, #tpu.memory_space<vmem>>, vector<1x8x1xf32>
      %92 = vector.shape_cast %91 : vector<1x8x1xf32> to vector<8x1xf32>
      %93 = vector.shape_cast %90 : vector<8x1xf32> to vector<1x8x1xf32>
      tpu.vector_store %arg8[%c1_46, %c0_47, %c0_48], %93 {strides = array<i32>} : memref<4x8x1xf32, #tpu.memory_space<vmem>>, vector<1x8x1xf32>,
      %c1_49 = arith.constant 1 : index
      %c0_50 = arith.constant 0 : index
      %c0_51 = arith.constant 0 : index
      %94 = vector.load %arg9[%c1_49, %c0_50, %c0_51] : memref<4x8x8xf32, #tpu.memory_space<vmem>>, vector<1x8x8xf32>
      %95 = vector.shape_cast %94 : vector<1x8x8xf32> to vector<8x8xf32>
      %96 = vector.broadcast %81 : vector<8x1xf32> to vector<8x8xf32>
      %97 = arith.mulf %96, %95 : vector<8x8xf32>
      %98 = arith.truncf %84 : vector<8x8xf32> to vector<8x8xbf16>
      %99 = vector.extract_strided_slice %24 {offsets = [0, 8], sizes = [8, 8], strides = [1, 1]} : vector<8x32xbf16> to vector<8x8xbf16>
      %cst_52 = arith.constant dense<0.000000e+00> : vector<8x8xf32>
      %100 = tpu.matmul %98, %99, %cst_52 {dimension_numbers = #tpu.dot_dimension_numbers<[1], [0], [0], [1], [0, 0, 1, 1], [], []>} : vector<8x8xbf16>, vector<8x8xbf16>, vector<8x8xf32> -> vector<8x8xf32>
      %101 = arith.addf %97, %100 : vector<8x8xf32>
      %c1_53 = arith.constant 1 : index
      %c0_54 = arith.constant 0 : index
      %c0_55 = arith.constant 0 : index
      %102 = vector.load %arg9[%c1_53, %c0_54, %c0_55] : memref<4x8x8xf32, #tpu.memory_space<vmem>>, vector<1x8x8xf32>
      %103 = vector.shape_cast %102 : vector<1x8x8xf32> to vector<8x8xf32>
      %104 = vector.shape_cast %101 : vector<8x8xf32> to vector<1x8x8xf32>
      tpu.vector_store %arg9[%c1_53, %c0_54, %c0_55], %104 {strides = array<i32>} : memref<4x8x8xf32, #tpu.memory_space<vmem>>, vector<1x8x8xf32>,
      %c1_56 = arith.constant 1 : index
      %c0_57 = arith.constant 0 : index
      %c0_58 = arith.constant 0 : index
      %105 = vector.load %arg7[%c1_56, %c0_57, %c0_58] : memref<4x8x1xf32, #tpu.memory_space<vmem>>, vector<1x8x1xf32>
      %106 = vector.shape_cast %105 : vector<1x8x1xf32> to vector<8x1xf32>
      %107 = vector.shape_cast %79 : vector<8x1xf32> to vector<1x8x1xf32>
      tpu.vector_store %arg7[%c1_56, %c0_57, %c0_58], %107 {strides = array<i32>} : memref<4x8x1xf32, #tpu.memory_space<vmem>>, vector<1x8x1xf32>,
      %108 = vector.extract_strided_slice %20 {offsets = [0, 16], sizes = [8, 8], strides = [1, 1]} : vector<8x32xbf16> to vector<8x8xbf16>
      %109 = vector.extract_strided_slice %22 {offsets = [0, 16], sizes = [8, 8], strides = [1, 1]} : vector<8x32xbf16> to vector<8x8xbf16>
      %cst_59 = arith.constant dense<0.000000e+00> : vector<8x8xf32>
      %110 = tpu.matmul %108, %109, %cst_59 {dimension_numbers = #tpu.dot_dimension_numbers<[1], [1], [0], [0], [0, 0, 1, 0], [], []>} : vector<8x8xbf16>, vector<8x8xbf16>, vector<8x8xf32> -> vector<8x8xf32>
      %cst_60 = arith.constant -1.000000e+30 : f32
      %111 = vector.broadcast %cst_60 : f32 to vector<8x8xf32>
      %112 = arith.select %31, %111, %110 : vector<8x8xi1>, vector<8x8xf32>
      %c2 = arith.constant 2 : index
      %c0_61 = arith.constant 0 : index
      %c0_62 = arith.constant 0 : index
      %113 = vector.load %arg7[%c2, %c0_61, %c0_62] : memref<4x8x1xf32, #tpu.memory_space<vmem>>, vector<1x8x1xf32>
      %114 = vector.shape_cast %113 : vector<1x8x1xf32> to vector<8x1xf32>
      %cst_63 = arith.constant dense<0xFF800000> : vector<8xf32>
      %115 = vector.multi_reduction <maximumf>, %112, %cst_63 [1] : vector<8x8xf32> to vector<8xf32>
      %116 = vector.shape_cast %115 : vector<8xf32> to vector<8x1xf32>
      %117 = arith.maximumf %114, %116 : vector<8x1xf32>
      %118 = arith.subf %114, %117 : vector<8x1xf32>
      %119 = math.exp %118 : vector<8x1xf32>
      %120 = vector.broadcast %117 : vector<8x1xf32> to vector<8x8xf32>
      %121 = arith.subf %112, %120 : vector<8x8xf32>
      %122 = math.exp %121 : vector<8x8xf32>
      %c2_64 = arith.constant 2 : index
      %c0_65 = arith.constant 0 : index
      %c0_66 = arith.constant 0 : index
      %123 = vector.load %arg8[%c2_64, %c0_65, %c0_66] : memref<4x8x1xf32, #tpu.memory_space<vmem>>, vector<1x8x1xf32>
      %124 = vector.shape_cast %123 : vector<1x8x1xf32> to vector<8x1xf32>
      %125 = arith.mulf %119, %124 : vector<8x1xf32>
      %cst_67 = arith.constant dense<0.000000e+00> : vector<8xf32>
      %126 = vector.multi_reduction <add>, %122, %cst_67 [1] : vector<8x8xf32> to vector<8xf32>
      %127 = vector.shape_cast %126 : vector<8xf32> to vector<8x1xf32>
      %128 = arith.addf %125, %127 : vector<8x1xf32>
      %c2_68 = arith.constant 2 : index
      %c0_69 = arith.constant 0 : index
      %c0_70 = arith.constant 0 : index
      %129 = vector.load %arg8[%c2_68, %c0_69, %c0_70] : memref<4x8x1xf32, #tpu.memory_space<vmem>>, vector<1x8x1xf32>
      %130 = vector.shape_cast %129 : vector<1x8x1xf32> to vector<8x1xf32>
      %131 = vector.shape_cast %128 : vector<8x1xf32> to vector<1x8x1xf32>
      tpu.vector_store %arg8[%c2_68, %c0_69, %c0_70], %131 {strides = array<i32>} : memref<4x8x1xf32, #tpu.memory_space<vmem>>, vector<1x8x1xf32>,
      %c2_71 = arith.constant 2 : index
      %c0_72 = arith.constant 0 : index
      %c0_73 = arith.constant 0 : index
      %132 = vector.load %arg9[%c2_71, %c0_72, %c0_73] : memref<4x8x8xf32, #tpu.memory_space<vmem>>, vector<1x8x8xf32>
      %133 = vector.shape_cast %132 : vector<1x8x8xf32> to vector<8x8xf32>
      %134 = vector.broadcast %119 : vector<8x1xf32> to vector<8x8xf32>
      %135 = arith.mulf %134, %133 : vector<8x8xf32>
      %136 = arith.truncf %122 : vector<8x8xf32> to vector<8x8xbf16>
      %137 = vector.extract_strided_slice %24 {offsets = [0, 16], sizes = [8, 8], strides = [1, 1]} : vector<8x32xbf16> to vector<8x8xbf16>
      %cst_74 = arith.constant dense<0.000000e+00> : vector<8x8xf32>
      %138 = tpu.matmul %136, %137, %cst_74 {dimension_numbers = #tpu.dot_dimension_numbers<[1], [0], [0], [1], [0, 0, 1, 1], [], []>} : vector<8x8xbf16>, vector<8x8xbf16>, vector<8x8xf32> -> vector<8x8xf32>
      %139 = arith.addf %135, %138 : vector<8x8xf32>
      %c2_75 = arith.constant 2 : index
      %c0_76 = arith.constant 0 : index
      %c0_77 = arith.constant 0 : index
      %140 = vector.load %arg9[%c2_75, %c0_76, %c0_77] : memref<4x8x8xf32, #tpu.memory_space<vmem>>, vector<1x8x8xf32>
      %141 = vector.shape_cast %140 : vector<1x8x8xf32> to vector<8x8xf32>
      %142 = vector.shape_cast %139 : vector<8x8xf32> to vector<1x8x8xf32>
      tpu.vector_store %arg9[%c2_75, %c0_76, %c0_77], %142 {strides = array<i32>} : memref<4x8x8xf32, #tpu.memory_space<vmem>>, vector<1x8x8xf32>,
      %c2_78 = arith.constant 2 : index
      %c0_79 = arith.constant 0 : index
      %c0_80 = arith.constant 0 : index
      %143 = vector.load %arg7[%c2_78, %c0_79, %c0_80] : memref<4x8x1xf32, #tpu.memory_space<vmem>>, vector<1x8x1xf32>
      %144 = vector.shape_cast %143 : vector<1x8x1xf32> to vector<8x1xf32>
      %145 = vector.shape_cast %117 : vector<8x1xf32> to vector<1x8x1xf32>
      tpu.vector_store %arg7[%c2_78, %c0_79, %c0_80], %145 {strides = array<i32>} : memref<4x8x1xf32, #tpu.memory_space<vmem>>, vector<1x8x1xf32>,
      %146 = vector.extract_strided_slice %20 {offsets = [0, 24], sizes = [8, 8], strides = [1, 1]} : vector<8x32xbf16> to vector<8x8xbf16>
      %147 = vector.extract_strided_slice %22 {offsets = [0, 24], sizes = [8, 8], strides = [1, 1]} : vector<8x32xbf16> to vector<8x8xbf16>
      %cst_81 = arith.constant dense<0.000000e+00> : vector<8x8xf32>
      %148 = tpu.matmul %146, %147, %cst_81 {dimension_numbers = #tpu.dot_dimension_numbers<[1], [1], [0], [0], [0, 0, 1, 0], [], []>} : vector<8x8xbf16>, vector<8x8xbf16>, vector<8x8xf32> -> vector<8x8xf32>
      %cst_82 = arith.constant -1.000000e+30 : f32
      %149 = vector.broadcast %cst_82 : f32 to vector<8x8xf32>
      %150 = arith.select %31, %149, %148 : vector<8x8xi1>, vector<8x8xf32>
      %c3 = arith.constant 3 : index
      %c0_83 = arith.constant 0 : index
      %c0_84 = arith.constant 0 : index
      %151 = vector.load %arg7[%c3, %c0_83, %c0_84] : memref<4x8x1xf32, #tpu.memory_space<vmem>>, vector<1x8x1xf32>
      %152 = vector.shape_cast %151 : vector<1x8x1xf32> to vector<8x1xf32>
      %cst_85 = arith.constant dense<0xFF800000> : vector<8xf32>
      %153 = vector.multi_reduction <maximumf>, %150, %cst_85 [1] : vector<8x8xf32> to vector<8xf32>
      %154 = vector.shape_cast %153 : vector<8xf32> to vector<8x1xf32>
      %155 = arith.maximumf %152, %154 : vector<8x1xf32>
      %156 = arith.subf %152, %155 : vector<8x1xf32>
      %157 = math.exp %156 : vector<8x1xf32>
      %158 = vector.broadcast %155 : vector<8x1xf32> to vector<8x8xf32>
      %159 = arith.subf %150, %158 : vector<8x8xf32>
      %160 = math.exp %159 : vector<8x8xf32>
      %c3_86 = arith.constant 3 : index
      %c0_87 = arith.constant 0 : index
      %c0_88 = arith.constant 0 : index
      %161 = vector.load %arg8[%c3_86, %c0_87, %c0_88] : memref<4x8x1xf32, #tpu.memory_space<vmem>>, vector<1x8x1xf32>
      %162 = vector.shape_cast %161 : vector<1x8x1xf32> to vector<8x1xf32>
      %163 = arith.mulf %157, %162 : vector<8x1xf32>
      %cst_89 = arith.constant dense<0.000000e+00> : vector<8xf32>
      %164 = vector.multi_reduction <add>, %160, %cst_89 [1] : vector<8x8xf32> to vector<8xf32>
      %165 = vector.shape_cast %164 : vector<8xf32> to vector<8x1xf32>
      %166 = arith.addf %163, %165 : vector<8x1xf32>
      %c3_90 = arith.constant 3 : index
      %c0_91 = arith.constant 0 : index
      %c0_92 = arith.constant 0 : index
      %167 = vector.load %arg8[%c3_90, %c0_91, %c0_92] : memref<4x8x1xf32, #tpu.memory_space<vmem>>, vector<1x8x1xf32>
      %168 = vector.shape_cast %167 : vector<1x8x1xf32> to vector<8x1xf32>
      %169 = vector.shape_cast %166 : vector<8x1xf32> to vector<1x8x1xf32>
      tpu.vector_store %arg8[%c3_90, %c0_91, %c0_92], %169 {strides = array<i32>} : memref<4x8x1xf32, #tpu.memory_space<vmem>>, vector<1x8x1xf32>,
      %c3_93 = arith.constant 3 : index
      %c0_94 = arith.constant 0 : index
      %c0_95 = arith.constant 0 : index
      %170 = vector.load %arg9[%c3_93, %c0_94, %c0_95] : memref<4x8x8xf32, #tpu.memory_space<vmem>>, vector<1x8x8xf32>
      %171 = vector.shape_cast %170 : vector<1x8x8xf32> to vector<8x8xf32>
      %172 = vector.broadcast %157 : vector<8x1xf32> to vector<8x8xf32>
      %173 = arith.mulf %172, %171 : vector<8x8xf32>
      %174 = arith.truncf %160 : vector<8x8xf32> to vector<8x8xbf16>
      %175 = vector.extract_strided_slice %24 {offsets = [0, 24], sizes = [8, 8], strides = [1, 1]} : vector<8x32xbf16> to vector<8x8xbf16>
      %cst_96 = arith.constant dense<0.000000e+00> : vector<8x8xf32>
      %176 = tpu.matmul %174, %175, %cst_96 {dimension_numbers = #tpu.dot_dimension_numbers<[1], [0], [0], [1], [0, 0, 1, 1], [], []>} : vector<8x8xbf16>, vector<8x8xbf16>, vector<8x8xf32> -> vector<8x8xf32>
      %177 = arith.addf %173, %176 : vector<8x8xf32>
      %c3_97 = arith.constant 3 : index
      %c0_98 = arith.constant 0 : index
      %c0_99 = arith.constant 0 : index
      %178 = vector.load %arg9[%c3_97, %c0_98, %c0_99] : memref<4x8x8xf32, #tpu.memory_space<vmem>>, vector<1x8x8xf32>
      %179 = vector.shape_cast %178 : vector<1x8x8xf32> to vector<8x8xf32>
      %180 = vector.shape_cast %177 : vector<8x8xf32> to vector<1x8x8xf32>
      tpu.vector_store %arg9[%c3_97, %c0_98, %c0_99], %180 {strides = array<i32>} : memref<4x8x8xf32, #tpu.memory_space<vmem>>, vector<1x8x8xf32>,
      %c3_100 = arith.constant 3 : index
      %c0_101 = arith.constant 0 : index
      %c0_102 = arith.constant 0 : index
      %181 = vector.load %arg7[%c3_100, %c0_101, %c0_102] : memref<4x8x1xf32, #tpu.memory_space<vmem>>, vector<1x8x1xf32>
      %182 = vector.shape_cast %181 : vector<1x8x1xf32> to vector<8x1xf32>
      %183 = vector.shape_cast %155 : vector<8x1xf32> to vector<1x8x1xf32>
      tpu.vector_store %arg7[%c3_100, %c0_101, %c0_102], %183 {strides = array<i32>} : memref<4x8x1xf32, #tpu.memory_space<vmem>>, vector<1x8x1xf32>,
    } else {
    }
    %c0_i32_5 = arith.constant 0 : i32
    %16 = arith.cmpi eq, %arg2, %c0_i32_5 : i32
    %17 = arith.extui %16 : i1 to i32
    %c0_i32_6 = arith.constant 0 : i32
    %18 = arith.cmpi ne, %17, %c0_i32_6 : i32
    scf.if %18 {
      %c0 = arith.constant 0 : index
      %c0_7 = arith.constant 0 : index
      %c0_8 = arith.constant 0 : index
      %19 = vector.load %arg8[%c0, %c0_7, %c0_8] : memref<4x8x1xf32, #tpu.memory_space<vmem>>, vector<1x8x1xf32>
      %20 = vector.shape_cast %19 : vector<1x8x1xf32> to vector<8x1xf32>
      %21 = tpu.reciprocal %20 {approx = true} : vector<8x1xf32> -> vector<8x1xf32>
      %c0_9 = arith.constant 0 : index
      %c0_10 = arith.constant 0 : index
      %c0_11 = arith.constant 0 : index
      %22 = vector.load %arg9[%c0_9, %c0_10, %c0_11] : memref<4x8x8xf32, #tpu.memory_space<vmem>>, vector<1x8x8xf32>
      %23 = vector.shape_cast %22 : vector<1x8x8xf32> to vector<8x8xf32>
      %24 = vector.broadcast %21 : vector<8x1xf32> to vector<8x8xf32>
      %25 = arith.mulf %23, %24 : vector<8x8xf32>
      %26 = arith.truncf %25 : vector<8x8xf32> to vector<8x8xbf16>
      %c0_12 = arith.constant 0 : index
      %c0_13 = arith.constant 0 : index
      %c0_14 = arith.constant 0 : index
      %27 = vector.load %arg6[%c0_12, %c0_13, %c0_14] : memref<1x8x32xbf16, #tpu.memory_space<vmem>>, vector<1x8x8xbf16>
      %28 = vector.shape_cast %27 : vector<1x8x8xbf16> to vector<8x8xbf16>
      %29 = vector.shape_cast %26 : vector<8x8xbf16> to vector<1x8x8xbf16>
      tpu.vector_store %arg6[%c0_12, %c0_13, %c0_14], %29 {strides = array<i32>} : memref<1x8x32xbf16, #tpu.memory_space<vmem>>, vector<1x8x8xbf16>,
      %c1 = arith.constant 1 : index
      %c0_15 = arith.constant 0 : index
      %c0_16 = arith.constant 0 : index
      %30 = vector.load %arg8[%c1, %c0_15, %c0_16] : memref<4x8x1xf32, #tpu.memory_space<vmem>>, vector<1x8x1xf32>
      %31 = vector.shape_cast %30 : vector<1x8x1xf32> to vector<8x1xf32>
      %32 = tpu.reciprocal %31 {approx = true} : vector<8x1xf32> -> vector<8x1xf32>
      %c1_17 = arith.constant 1 : index
      %c0_18 = arith.constant 0 : index
      %c0_19 = arith.constant 0 : index
      %33 = vector.load %arg9[%c1_17, %c0_18, %c0_19] : memref<4x8x8xf32, #tpu.memory_space<vmem>>, vector<1x8x8xf32>
      %34 = vector.shape_cast %33 : vector<1x8x8xf32> to vector<8x8xf32>
      %35 = vector.broadcast %32 : vector<8x1xf32> to vector<8x8xf32>
      %36 = arith.mulf %34, %35 : vector<8x8xf32>
      %37 = arith.truncf %36 : vector<8x8xf32> to vector<8x8xbf16>
      %c0_20 = arith.constant 0 : index
      %c0_21 = arith.constant 0 : index
      %c8 = arith.constant 8 : index
      %38 = vector.load %arg6[%c0_20, %c0_21, %c8] : memref<1x8x32xbf16, #tpu.memory_space<vmem>>, vector<1x8x8xbf16>
      %39 = vector.shape_cast %38 : vector<1x8x8xbf16> to vector<8x8xbf16>
      %40 = vector.shape_cast %37 : vector<8x8xbf16> to vector<1x8x8xbf16>
      tpu.vector_store %arg6[%c0_20, %c0_21, %c8], %40 {strides = array<i32>} : memref<1x8x32xbf16, #tpu.memory_space<vmem>>, vector<1x8x8xbf16>,
      %c2 = arith.constant 2 : index
      %c0_22 = arith.constant 0 : index
      %c0_23 = arith.constant 0 : index
      %41 = vector.load %arg8[%c2, %c0_22, %c0_23] : memref<4x8x1xf32, #tpu.memory_space<vmem>>, vector<1x8x1xf32>
      %42 = vector.shape_cast %41 : vector<1x8x1xf32> to vector<8x1xf32>
      %43 = tpu.reciprocal %42 {approx = true} : vector<8x1xf32> -> vector<8x1xf32>
      %c2_24 = arith.constant 2 : index
      %c0_25 = arith.constant 0 : index
      %c0_26 = arith.constant 0 : index
      %44 = vector.load %arg9[%c2_24, %c0_25, %c0_26] : memref<4x8x8xf32, #tpu.memory_space<vmem>>, vector<1x8x8xf32>
      %45 = vector.shape_cast %44 : vector<1x8x8xf32> to vector<8x8xf32>
      %46 = vector.broadcast %43 : vector<8x1xf32> to vector<8x8xf32>
      %47 = arith.mulf %45, %46 : vector<8x8xf32>
      %48 = arith.truncf %47 : vector<8x8xf32> to vector<8x8xbf16>
      %c0_27 = arith.constant 0 : index
      %c0_28 = arith.constant 0 : index
      %c16 = arith.constant 16 : index
      %49 = vector.load %arg6[%c0_27, %c0_28, %c16] : memref<1x8x32xbf16, #tpu.memory_space<vmem>>, vector<1x8x8xbf16>
      %50 = vector.shape_cast %49 : vector<1x8x8xbf16> to vector<8x8xbf16>
      %51 = vector.shape_cast %48 : vector<8x8xbf16> to vector<1x8x8xbf16>
      tpu.vector_store %arg6[%c0_27, %c0_28, %c16], %51 {strides = array<i32>} : memref<1x8x32xbf16, #tpu.memory_space<vmem>>, vector<1x8x8xbf16>,
      %c3 = arith.constant 3 : index
      %c0_29 = arith.constant 0 : index
      %c0_30 = arith.constant 0 : index
      %52 = vector.load %arg8[%c3, %c0_29, %c0_30] : memref<4x8x1xf32, #tpu.memory_space<vmem>>, vector<1x8x1xf32>
      %53 = vector.shape_cast %52 : vector<1x8x1xf32> to vector<8x1xf32>
      %54 = tpu.reciprocal %53 {approx = true} : vector<8x1xf32> -> vector<8x1xf32>
      %c3_31 = arith.constant 3 : index
      %c0_32 = arith.constant 0 : index
      %c0_33 = arith.constant 0 : index
      %55 = vector.load %arg9[%c3_31, %c0_32, %c0_33] : memref<4x8x8xf32, #tpu.memory_space<vmem>>, vector<1x8x8xf32>
      %56 = vector.shape_cast %55 : vector<1x8x8xf32> to vector<8x8xf32>
      %57 = vector.broadcast %54 : vector<8x1xf32> to vector<8x8xf32>
      %58 = arith.mulf %56, %57 : vector<8x8xf32>
      %59 = arith.truncf %58 : vector<8x8xf32> to vector<8x8xbf16>
      %c0_34 = arith.constant 0 : index
      %c0_35 = arith.constant 0 : index
      %c24 = arith.constant 24 : index
      %60 = vector.load %arg6[%c0_34, %c0_35, %c24] : memref<1x8x32xbf16, #tpu.memory_space<vmem>>, vector<1x8x8xbf16>
      %61 = vector.shape_cast %60 : vector<1x8x8xbf16> to vector<8x8xbf16>
      %62 = vector.shape_cast %59 : vector<8x8xbf16> to vector<1x8x8xbf16>
      tpu.vector_store %arg6[%c0_34, %c0_35, %c24], %62 {strides = array<i32>} : memref<1x8x32xbf16, #tpu.memory_space<vmem>>, vector<1x8x8xbf16>,
    } else {
    }
    return
  }
  func.func @transform_0(%arg0: i32, %arg1: i32, %arg2: i32) -> (i32, i32, i32) {
    %c0_i32 = arith.constant 0 : i32
    %c0_i32_0 = arith.constant 0 : i32
    return %arg0, %arg1, %c0_i32 : i32, i32, i32
  }
  func.func @transform_1(%arg0: i32, %arg1: i32, %arg2: i32) -> (i32, i32, i32) {
    %0 = arith.minsi %arg2, %arg1 : i32
    %c0_i32 = arith.constant 0 : i32
    %c0_i32_0 = arith.constant 0 : i32
    return %arg0, %0, %c0_i32 : i32, i32, i32
  }
  func.func @transform_2(%arg0: i32, %arg1: i32, %arg2: i32) -> (i32, i32, i32) {
    %0 = arith.minsi %arg2, %arg1 : i32
    %c0_i32 = arith.constant 0 : i32
    %c0_i32_0 = arith.constant 0 : i32
    return %arg0, %0, %c0_i32 : i32, i32, i32
  }
  func.func @transform_3(%arg0: i32, %arg1: i32, %arg2: i32) -> (i32, i32, i32) {
    %c0_i32 = arith.constant 0 : i32
    %c0_i32_0 = arith.constant 0 : i32
    return %arg0, %arg1, %c0_i32 : i32, i32, i32
  }
}

</mosaic_0001>

<llo_original>
// kernel: transformer_block.3
$region0: #{transformer_block.3}
  #allocation0 [shape = 'u32[]', space=smem, size = 0x4, offset = 0x4, fixed_abs, tag = 'smem constant byte address 0x4 - core index']
  #allocation1 [shape = 'u32[144,128]{1,0:T(1,128)}', space=vmem, size = 0x12000, scoped, tag = 'internal scratch']
  %s0 = inlined_call_operand.hbm [shape: f32[2,8,32], index: 0, kind: input, shape index: {}]
  %s1 = inlined_call_operand.hbm [shape: f32[1,32], index: 1, kind: input, shape index: {}]
  %s2 = inlined_call_operand.hbm [shape: f32[1,32], index: 2, kind: input, shape index: {}]
  %s3 = inlined_call_operand.hbm [shape: bf16[32,96], index: 3, kind: input, shape index: {}]
  %s4 = inlined_call_operand.hbm [shape: f32[1,96], index: 4, kind: input, shape index: {}]
  %s5 = inlined_call_operand.hbm [shape: bf16[2,8,32], index: 5, kind: output, shape index: {0}]
  %s6 = inlined_call_operand.hbm [shape: bf16[2,8,32], index: 6, kind: output, shape index: {1}]
  %s7 = inlined_call_operand.hbm [shape: bf16[2,8,32], index: 7, kind: output, shape index: {2}]
  %8 = xla_tuple %s5, %s6, %s7
  %s9 = sld [smem:[#allocation0]]
  $region89: #{transformer_block.3} parent=0
    _
  %s11 = ssub.s32 1, %s9
  %s12 = scalar_select 0, %s11, %s9
  $region1: #{transformer_block.3} parent=0
    #allocation2 [shape = 'u8[8192]{0}', space=vmem, size = 0x2000, scoped, tag = 'input window, operand 0']
    #allocation3 [shape = 's32[2]{0}', space=sflag, size = 0x8, scoped, tag = 'scoped memory for transformer_block.3']
    #allocation4 [shape = 's32[2]{0}', space=sflag, size = 0x8, scoped, tag = 'scoped memory for transformer_block.3']
    #allocation5 [shape = 'u8[512]{0}', space=vmem, size = 0x400, scoped, tag = 'input window, operand 1, single buffered']
    #allocation6 [shape = 's32[1]{0}', space=sflag, size = 0x4, scoped, tag = 'scoped memory for transformer_block.3']
    #allocation7 [shape = 'u8[512]{0}', space=vmem, size = 0x400, scoped, tag = 'input window, operand 2, single buffered']
    #allocation8 [shape = 'u8[8192]{0}', space=vmem, size = 0x2000, scoped, tag = 'input window, operand 3, single buffered']
    #allocation9 [shape = 's32[1]{0}', space=sflag, size = 0x4, scoped, tag = 'scoped memory for transformer_block.3']
    #allocation10 [shape = 'u8[512]{0}', space=vmem, size = 0x400, scoped, tag = 'input window, operand 4, single buffered']
    #allocation11 [shape = 'u8[4096]{0}', space=vmem, size = 0x1000, scoped, tag = 'output window, operand 0']
    #allocation12 [shape = 'u8[4096]{0}', space=vmem, size = 0x1000, scoped, tag = 'output window, operand 1']
    #allocation13 [shape = 's32[2]{0}', space=sflag, size = 0x8, scoped, tag = 'scoped memory for transformer_block.3']
    #allocation14 [shape = 'u8[4096]{0}', space=vmem, size = 0x1000, scoped, tag = 'output window, operand 2']
    %13 = vsyncpa [#allocation3], 0
    %s14 = scalar_lea.sflag [#allocation3], 1
    %15 = vsyncpa %s14, 0
    %16 = vsyncpa [#allocation6], 0
    %17 = vsyncpa [#allocation9], 0
    %18 = vsyncpa [#allocation4], 0
    %s19 = scalar_lea.sflag [#allocation4], 1
    %20 = vsyncpa %s19, 0
    %21 = vsyncpa [#allocation13], 0
    %s22 = scalar_lea.sflag [#allocation13], 1
    %23 = vsyncpa %s22, 0
    loop: start=0, step=1, limit=4
    $region2: #{transformer_block.3} parent=1 // loop_pre_header
      _
    $region3: #{transformer_block.3} parent=1 // loop_header
      %s25 = sphi 0, %s29
      %p26 = scmp.ge.s32.totalorder %s25, 4
      %s32 = sphi 0, %s44
      %s33 = sphi 0, %s40
      %s34 = sphi 0, %s32
      %s35 = sphi 0, %s33
      %s36 = sphi 0, %s34
      %s37 = sphi 0, %s35
      %s49 = sphi 0, %s51
      %s52 = sphi 0, %s49
      %s53 = sphi 0, %s52
      %s69 = sphi 0, %s53
      %s73 = sphi 0, %s73
      %s75 = sphi 0, %s73
      %s76 = sphi 0, %s75
      %s90 = sphi 0, %s76
      %s94 = sphi 0, %s94
      %s96 = sphi 0, %s94
      %s97 = sphi 0, %s96
      %s111 = sphi 0, %s97
      %s115 = sphi 0, %s115
      %s117 = sphi 0, %s115
      %s118 = sphi 0, %s117
      %s132 = sphi 0, %s118
      %s136 = sphi 0, %s136
      %s138 = sphi 0, %s136
      %s139 = sphi 0, %s138
      %s153 = sphi 0, %s139
      %s161 = sphi 0, %s163
      %s164 = sphi 0, %s161
      %s165 = sphi 0, %s164
      %s181 = sphi 0, %s165
      %s189 = sphi 0, %s191
      %s192 = sphi 0, %s189
      %s193 = sphi 0, %s192
      %s209 = sphi 0, %s193
      %s217 = sphi 0, %s219
      %s220 = sphi 0, %s217
      %s221 = sphi 0, %s220
      %s237 = sphi 0, %s221
    $region4: #{transformer_block.3} parent=1 // loop_header_branch
      %28 = sbr.rel (%p26) target = $region8
    $region5: #{transformer_block.3} parent=1 // loop_body
      %s30 = ssub.s32 %s25, 1
      %s31 = ssub.s32 %s25, 2
      %s38 = sadd.s32 1, %s33
      %p39 = scmp.ge.s32.totalorder %s38, 1
      %s40 = scalar_select %p39, 0, %s38
      %s41 = sadd.s32 1, %s32
      %s42 = scalar_select %p39, %s41, %s32
      %p43 = scmp.ge.s32.totalorder %s42, 2
      %s44 = scalar_select %p43, 0, %s42
      %s45 = ssub.s32 %s32, %s44
      %s46 = ssub.s32 %s33, %s40
      %s47 = sor.u32 %s45, %s46
      %p48 = scmp.eq.s32.totalorder %s47, 0
      %s50 = sadd.s32 %s49, 1
      %s51 = scalar_select %p48, %s49, %s50
      %p54 = pneg %p48
      %p55 = scmp.eq.s32.totalorder %s25, 1
      %p56 = por %p54, %p55
      %p57 = scmp.ne.s32.totalorder %s49, %s52
      %p58 = scmp.eq.s32.totalorder %s25, 0
      %p59 = por %p57, %p58
      %p60 = scmp.ne.s32.totalorder %s49, %s52
      %p61 = scmp.eq.s32.totalorder %s30, 1
      %p62 = por %p60, %p61
      %p63 = scmp.ne.s32.totalorder %s52, %s53
      %p64 = scmp.eq.s32.totalorder %s30, 0
      %p65 = por %p63, %p64
      %p66 = scmp.ne.s32.totalorder %s52, %s53
      %p67 = scmp.eq.s32.totalorder %s31, 1
      %p68 = por %p66, %p67
      %p70 = scmp.ne.s32.totalorder %s53, %s69
      %p71 = scmp.eq.s32.totalorder %s31, 0
      %p72 = por %p70, %p71
      %s74 = sadd.s32 %s73, 1
      %p77 = scmp.eq.s32.totalorder %s25, 1
      %p78 = scmp.ne.s32.totalorder %s73, %s75
      %p79 = scmp.eq.s32.totalorder %s25, 0
      %p80 = por %p78, %p79
      %p81 = scmp.ne.s32.totalorder %s73, %s75
      %p82 = scmp.eq.s32.totalorder %s30, 1
      %p83 = por %p81, %p82
      %p84 = scmp.ne.s32.totalorder %s75, %s76
      %p85 = scmp.eq.s32.totalorder %s30, 0
      %p86 = por %p84, %p85
      %p87 = scmp.ne.s32.totalorder %s75, %s76
      %p88 = scmp.eq.s32.totalorder %s31, 1
      %p89 = por %p87, %p88
      %p91 = scmp.ne.s32.totalorder %s76, %s90
      %p92 = scmp.eq.s32.totalorder %s31, 0
      %p93 = por %p91, %p92
      %s95 = sadd.s32 %s94, 1
      %p98 = scmp.eq.s32.totalorder %s25, 1
      %p99 = scmp.ne.s32.totalorder %s94, %s96
      %p100 = scmp.eq.s32.totalorder %s25, 0
      %p101 = por %p99, %p100
      %p102 = scmp.ne.s32.totalorder %s94, %s96
      %p103 = scmp.eq.s32.totalorder %s30, 1
      %p104 = por %p102, %p103
      %p105 = scmp.ne.s32.totalorder %s96, %s97
      %p106 = scmp.eq.s32.totalorder %s30, 0
      %p107 = por %p105, %p106
      %p108 = scmp.ne.s32.totalorder %s96, %s97
      %p109 = scmp.eq.s32.totalorder %s31, 1
      %p110 = por %p108, %p109
      %p112 = scmp.ne.s32.totalorder %s97, %s111
      %p113 = scmp.eq.s32.totalorder %s31, 0
      %p114 = por %p112, %p113
      %s116 = sadd.s32 %s115, 1
      %p119 = scmp.eq.s32.totalorder %s25, 1
      %p120 = scmp.ne.s32.totalorder %s115, %s117
      %p121 = scmp.eq.s32.totalorder %s25, 0
      %p122 = por %p120, %p121
      %p123 = scmp.ne.s32.totalorder %s115, %s117
      %p124 = scmp.eq.s32.totalorder %s30, 1
      %p125 = por %p123, %p124
      %p126 = scmp.ne.s32.totalorder %s117, %s118
      %p127 = scmp.eq.s32.totalorder %s30, 0
      %p128 = por %p126, %p127
      %p129 = scmp.ne.s32.totalorder %s117, %s118
      %p130 = scmp.eq.s32.totalorder %s31, 1
      %p131 = por %p129, %p130
      %p133 = scmp.ne.s32.totalorder %s118, %s132
      %p134 = scmp.eq.s32.totalorder %s31, 0
      %p135 = por %p133, %p134
      %s137 = sadd.s32 %s136, 1
      %p140 = scmp.eq.s32.totalorder %s25, 1
      %p141 = scmp.ne.s32.totalorder %s136, %s138
      %p142 = scmp.eq.s32.totalorder %s25, 0
      %p143 = por %p141, %p142
      %p144 = scmp.ne.s32.totalorder %s136, %s138
      %p145 = scmp.eq.s32.totalorder %s30, 1
      %p146 = por %p144, %p145
      %p147 = scmp.ne.s32.totalorder %s138, %s139
      %p148 = scmp.eq.s32.totalorder %s30, 0
      %p149 = por %p147, %p148
      %p150 = scmp.ne.s32.totalorder %s138, %s139
      %p151 = scmp.eq.s32.totalorder %s31, 1
      %p152 = por %p150, %p151
      %p154 = scmp.ne.s32.totalorder %s139, %s153
      %p155 = scmp.eq.s32.totalorder %s31, 0
      %p156 = por %p154, %p155
      %s157 = ssub.s32 %s32, %s44
      %s158 = ssub.s32 %s33, %s40
      %s159 = sor.u32 %s157, %s158
      %p160 = scmp.eq.s32.totalorder %s159, 0
      %s162 = sadd.s32 %s161, 1
      %s163 = scalar_select %p160, %s161, %s162
      %p166 = pneg %p160
      %p167 = scmp.eq.s32.totalorder %s25, 1
      %p168 = por %p166, %p167
      %p169 = scmp.ne.s32.totalorder %s161, %s164
      %p170 = scmp.eq.s32.totalorder %s25, 0
      %p171 = por %p169, %p170
      %p172 = scmp.ne.s32.totalorder %s161, %s164
      %p173 = scmp.eq.s32.totalorder %s30, 1
      %p174 = por %p172, %p173
      %p175 = scmp.ne.s32.totalorder %s164, %s165
      %p176 = scmp.eq.s32.totalorder %s30, 0
      %p177 = por %p175, %p176
      %p178 = scmp.ne.s32.totalorder %s164, %s165
      %p179 = scmp.eq.s32.totalorder %s31, 1
      %p180 = por %p178, %p179
      %p182 = scmp.ne.s32.totalorder %s165, %s181
      %p183 = scmp.eq.s32.totalorder %s31, 0
      %p184 = por %p182, %p183
      %s185 = ssub.s32 %s32, %s44
      %s186 = ssub.s32 %s33, %s40
      %s187 = sor.u32 %s185, %s186
      %p188 = scmp.eq.s32.totalorder %s187, 0
      %s190 = sadd.s32 %s189, 1
      %s191 = scalar_select %p188, %s189, %s190
      %p194 = pneg %p188
      %p195 = scmp.eq.s32.totalorder %s25, 1
      %p196 = por %p194, %p195
      %p197 = scmp.ne.s32.totalorder %s189, %s192
      %p198 = scmp.eq.s32.totalorder %s25, 0
      %p199 = por %p197, %p198
      %p200 = scmp.ne.s32.totalorder %s189, %s192
      %p201 = scmp.eq.s32.totalorder %s30, 1
      %p202 = por %p200, %p201
      %p203 = scmp.ne.s32.totalorder %s192, %s193
      %p204 = scmp.eq.s32.totalorder %s30, 0
      %p205 = por %p203, %p204
      %p206 = scmp.ne.s32.totalorder %s192, %s193
      %p207 = scmp.eq.s32.totalorder %s31, 1
      %p208 = por %p206, %p207
      %p210 = scmp.ne.s32.totalorder %s193, %s209
      %p211 = scmp.eq.s32.totalorder %s31, 0
      %p212 = por %p210, %p211
      %s213 = ssub.s32 %s32, %s44
      %s214 = ssub.s32 %s33, %s40
      %s215 = sor.u32 %s213, %s214
      %p216 = scmp.eq.s32.totalorder %s215, 0
      %s218 = sadd.s32 %s217, 1
      %s219 = scalar_select %p216, %s217, %s218
      %p222 = pneg %p216
      %p223 = scmp.eq.s32.totalorder %s25, 1
      %p224 = por %p222, %p223
      %p225 = scmp.ne.s32.totalorder %s217, %s220
      %p226 = scmp.eq.s32.totalorder %s25, 0
      %p227 = por %p225, %p226
      %p228 = scmp.ne.s32.totalorder %s217, %s220
      %p229 = scmp.eq.s32.totalorder %s30, 1
      %p230 = por %p228, %p229
      %p231 = scmp.ne.s32.totalorder %s220, %s221
      %p232 = scmp.eq.s32.totalorder %s30, 0
      %p233 = por %p231, %p232
      %p234 = scmp.ne.s32.totalorder %s220, %s221
      %p235 = scmp.eq.s32.totalorder %s31, 1
      %p236 = por %p234, %p235
      %p238 = scmp.ne.s32.totalorder %s221, %s237
      %p239 = scmp.eq.s32.totalorder %s31, 0
      %p240 = por %p238, %p239
      %p241 = scmp.le.s32.totalorder 1, %s25
      %p242 = scmp.lt.s32.totalorder %s25, 3
      %p243 = pnand %p241, %p242
      %p244 = pneg %p243
      // Predicated region
      $region9: #{transformer_block.3} parent=5 // pred_check
        _
      $region10: #{transformer_block.3} parent=5 // pred_check_branch
        %246 = sbr.rel (%p243) target = $region12
      $region11: #{transformer_block.3} parent=5 // pred_region
        %s247 = ssub.s32 %s25, 1
        // Predicated region
        $region13: #{transformer_block.3} parent=11 // pred_check
          %p248 = pneg %p86
        $region14: #{transformer_block.3} parent=11 // pred_check_branch
          %250 = sbr.rel (%p248) target = $region16
        $region15: #{transformer_block.3} parent=11 // pred_region
          %s252 = ssub.s32 16, 16
          %253 = vsyncadd [#allocation6], %s252
          %s255 = sshll.u32 [#allocation5], 4
          %s256 = int_to_ptr.vmem [resolvable:$true] %s255
          %258 = dma.hbm_to_vmem [thread:$0]  %s1, 16, %s256, [#allocation6]
        $region16: #{transformer_block.3} parent=11 // pred_fallthru
          _
        // Predicated region
        $region17: #{transformer_block.3} parent=11 // pred_check
          %p259 = pneg %p107
        $region18: #{transformer_block.3} parent=11 // pred_check_branch
          %261 = sbr.rel (%p259) target = $region20
        $region19: #{transformer_block.3} parent=11 // pred_region
          %s263 = ssub.s32 16, 16
          %264 = vsyncadd [#allocation6], %s263
          %s266 = sshll.u32 [#allocation7], 4
          %s267 = int_to_ptr.vmem [resolvable:$true] %s266
          %269 = dma.hbm_to_vmem [thread:$0]  %s2, 16, %s267, [#allocation6]
        $region20: #{transformer_block.3} parent=11 // pred_fallthru
          _
        // Predicated region
        $region21: #{transformer_block.3} parent=11 // pred_check
          %p270 = pneg %p128
        $region22: #{transformer_block.3} parent=11 // pred_check_branch
          %272 = sbr.rel (%p270) target = $region24
        $region23: #{transformer_block.3} parent=11 // pred_region
          %s274 = ssub.s32 256, 256
          %275 = vsyncadd [#allocation9], %s274
          %s276 = sshll.u32 [#allocation8], 4
          %s277 = int_to_ptr.vmem [resolvable:$true] %s276
          %282 = dma.hbm_to_vmem [thread:$0]  %s3, 256, %s277, [#allocation9], 64, 64, 4
        $region24: #{transformer_block.3} parent=11 // pred_fallthru
          _
        // Predicated region
        $region25: #{transformer_block.3} parent=11 // pred_check
          %p283 = pneg %p149
        $region26: #{transformer_block.3} parent=11 // pred_check_branch
          %285 = sbr.rel (%p283) target = $region28
        $region27: #{transformer_block.3} parent=11 // pred_region
          %s287 = ssub.s32 16, 16
          %288 = vsyncadd [#allocation9], %s287
          %s290 = sshll.u32 [#allocation10], 4
          %s291 = int_to_ptr.vmem [resolvable:$true] %s290
          %293 = dma.hbm_to_vmem [thread:$0]  %s4, 16, %s291, [#allocation9]
        $region28: #{transformer_block.3} parent=11 // pred_fallthru
          _
      $region12: #{transformer_block.3} parent=5 // pred_fallthru
        _
      %p294 = scmp.lt.s32.totalorder %s25, 2
      // Predicated region
      $region29: #{transformer_block.3} parent=5 // pred_check
        %p295 = pneg %p294
      $region30: #{transformer_block.3} parent=5 // pred_check_branch
        %297 = sbr.rel (%p295) target = $region32
      $region31: #{transformer_block.3} parent=5 // pred_region
        // Predicated region
        $region33: #{transformer_block.3} parent=31 // pred_check
          %p298 = pneg %p59
        $region34: #{transformer_block.3} parent=31 // pred_check_branch
          %300 = sbr.rel (%p298) target = $region36
        $region35: #{transformer_block.3} parent=31 // pred_region
          %s301 = sand.u32 %s49, 1
          %s302 = scalar_lea.sflag [#allocation3], %s301
          %s303 = sand.u32 %s49, 1
          %s304 = smul.addr %s303, 8
          %s305 = scalar_lea.vmem [#allocation2], %s304
          %s307 = ssub.s32 128, 128
          %308 = vsyncadd %s302, %s307
          %s309 = sadd.s32 %s33, %s32
          %s310 = smul.addr %s309, 128
          %s311 = scalar_lea.hbm %s0, %s310
          %s313 = sshll.u32 %s305, 4
          %s314 = int_to_ptr.vmem [resolvable:$true] %s313
          %316 = dma.hbm_to_vmem [thread:$0]  %s311, 128, %s314, %s302
        $region36: #{transformer_block.3} parent=31 // pred_fallthru
          _
      $region32: #{transformer_block.3} parent=5 // pred_fallthru
        _
      %p317 = scmp.le.s32.totalorder 1, %s25
      %p318 = scmp.lt.s32.totalorder %s25, 3
      %p319 = pnand %p317, %p318
      %p320 = pneg %p319
      // Predicated region
      $region37: #{transformer_block.3} parent=5 // pred_check
        _
      $region38: #{transformer_block.3} parent=5 // pred_check_branch
        %322 = sbr.rel (%p319) target = $region40
      $region39: #{transformer_block.3} parent=5 // pred_region
        %s323 = ssub.s32 %s25, 1
        %s324 = sand.u32 %s52, 1
        %s325 = scalar_lea.sflag [#allocation3], %s324
        %s326 = sand.u32 %s52, 1
        %s327 = smul.addr %s326, 8
        %s328 = scalar_lea.vmem [#allocation2], %s327
        // Predicated region
        $region41: #{transformer_block.3} parent=39 // pred_check
          %p329 = pneg %p65
        $region42: #{transformer_block.3} parent=39 // pred_check_branch
          %331 = sbr.rel (%p329) target = $region44
        $region43: #{transformer_block.3} parent=39 // pred_region
          %332 = dma.done %s325, 128
        $region44: #{transformer_block.3} parent=39 // pred_fallthru
          _
        // Predicated region
        $region45: #{transformer_block.3} parent=39 // pred_check
          %p333 = pneg %p86
        $region46: #{transformer_block.3} parent=39 // pred_check_branch
          %335 = sbr.rel (%p333) target = $region48
        $region47: #{transformer_block.3} parent=39 // pred_region
          %336 = dma.done [#allocation6], 16
        $region48: #{transformer_block.3} parent=39 // pred_fallthru
          _
        // Predicated region
        $region49: #{transformer_block.3} parent=39 // pred_check
          %p337 = pneg %p107
        $region50: #{transformer_block.3} parent=39 // pred_check_branch
          %339 = sbr.rel (%p337) target = $region52
        $region51: #{transformer_block.3} parent=39 // pred_region
          %340 = dma.done [#allocation6], 16
        $region52: #{transformer_block.3} parent=39 // pred_fallthru
          _
        // Predicated region
        $region53: #{transformer_block.3} parent=39 // pred_check
          %p341 = pneg %p128
        $region54: #{transformer_block.3} parent=39 // pred_check_branch
          %343 = sbr.rel (%p341) target = $region56
        $region55: #{transformer_block.3} parent=39 // pred_region
          %344 = dma.done [#allocation9], 256
        $region56: #{transformer_block.3} parent=39 // pred_fallthru
          _
        // Predicated region
        $region57: #{transformer_block.3} parent=39 // pred_check
          %p345 = pneg %p149
        $region58: #{transformer_block.3} parent=39 // pred_check_branch
          %347 = sbr.rel (%p345) target = $region60
        $region59: #{transformer_block.3} parent=39 // pred_region
          %348 = dma.done [#allocation9], 16
        $region60: #{transformer_block.3} parent=39 // pred_fallthru
          _
        %s349 = sand.u32 %s52, 1
        %s350 = scalar_lea.sflag [#allocation3], %s349
        %s351 = sand.u32 %s52, 1
        %s352 = smul.addr %s351, 8
        %s353 = scalar_lea.vmem [#allocation2], %s352
        %p354 = pneg %p65
        %p355 = pneg %p62
        %p356 = pneg %p86
        %p357 = pneg %p83
        %p358 = pneg %p107
        %p359 = pneg %p104
        %p360 = pneg %p128
        %p361 = pneg %p125
        %p362 = pneg %p149
        %p363 = pneg %p146
        %p364 = pneg %p177
        %p365 = pneg %p174
        %s366 = sand.u32 %s164, 1
        %s367 = scalar_lea.sflag [#allocation4], %s366
        %s368 = sand.u32 %s164, 1
        %s369 = smul.addr %s368, 4
        %s370 = scalar_lea.vmem [#allocation11], %s369
        %p371 = pneg %p205
        %p372 = pneg %p202
        %s373 = sand.u32 %s30, 1
        %s374 = scalar_lea.sflag [#allocation13], %s373
        %s375 = sand.u32 %s192, 1
        %s376 = smul.addr %s375, 4
        %s377 = scalar_lea.vmem [#allocation12], %s376
        %p378 = pneg %p233
        %p379 = pneg %p230
        %s380 = sand.u32 %s30, 1
        %s381 = scalar_lea.sflag [#allocation13], %s380
        %s382 = sand.u32 %s220, 1
        %s383 = smul.addr %s382, 4
        %s384 = scalar_lea.vmem [#allocation14], %s383
        %v386 = vld [vmem:[%s328] sm:$0xff]
        %v387 = vld [vmem:[#allocation5] sm:$0x1]
        %v388 = vld [vmem:[#allocation7] sm:$0x1]
        %vm389 = vcmask 261120
        %v390 = vsel %vm389, %v386, 0.0
        %391 = vadd.xlane.f32.xlu0 %v390
        %v392 = vpop.xlane.xlu0 %391
        %v393 = vrcp.pop 32.0
        %v394 = vmul.f32 %v392, %v393
        %v395 = vsub.f32 %v386, %v394
        %v396 = vmul.f32 %v395, %v395
        %v397 = vsel %vm389, %v396, 0.0
        %398 = vadd.xlane.f32.xlu0 %v397
        %v399 = vpop.xlane.xlu0 %398
        %v400 = vmul.f32 %v399, %v393
        %v401 = vadd.f32 %v400, 1e-05
        %v402 = vrsqrt.pop %v401
        %v403 = vmul.f32 %v395, %v402
        %v405 = vlaneseq
        %v406 = vshrl.u32 %v405, 7
        %v407 = vsub.s32 0, %v406
        %v408 = vrot.slane %v387, %v407
        %v410 = vmul.f32 %v403, %v408
        %v412 = vlaneseq
        %v413 = vshrl.u32 %v412, 7
        %v414 = vsub.s32 0, %v413
        %v415 = vrot.slane %v388, %v414
        %v417 = vadd.f32 %v410, %v415
        %v418 = vpack.c.bf16 %v417, %v417
        %v419 = vld [vmem:[#allocation8] sm:$0xf]
        %v420 = vld [vmem:[#allocation8 + $0x4] sm:$0xf]
        %v421 = vld [vmem:[#allocation8 + $0x8] sm:$0xf]
        %v422 = vld [vmem:[#allocation8 + $0xc] sm:$0xf]
        %v423 = vld [vmem:[#allocation10] sm:$0x1]
        %v425 = vlaneseq
        %v426 = vshrl.u32 %v425, 7
        %v427 = vsub.s32 0, %v426
        %v428 = vrot.slane %v423, %v427
        %v434 = vunpack.c.l.b16 %v419
        %v435 = vunpack.c.l.b16 %v420
        %v436 = vunpack.c.l.b16 %v421
        %v437 = vunpack.c.l.b16 %v422
        %v438 = vpack.c.b16 %v435, %v434
        %v439 = vpack.c.b16 %v437, %v436
        %v443 = vsel %vm389, %v418, 0
        %445 = vmatprep.subr.bf16.mxu0 0
        %446 = vmatpush1.bf16.msra.mxu0 %v438
        %447 = vmatprep.subr.bf16.mxu0 0
        %448 = vmatpush1.bf16.msra.mxu0 %v439
        %449 = vmatprep.subr.bf16.mxu0 0
        %450 = vmatpush1.bf16.msra.mxu0 0
        %451 = vmatprep.subr.bf16.mxu0 0
        %452 = vmatpush1.bf16.msra.mxu0 0
        %453 = vmatprep.subr.bf16.mxu0 0
        %454 = vmatpush1.bf16.msra.mxu0 0
        %455 = vmatprep.subr.bf16.mxu0 0
        %456 = vmatpush1.bf16.msra.mxu0 0
        %457 = vmatprep.subr.bf16.mxu0 0
        %458 = vmatpush1.bf16.msra.mxu0 0
        %459 = vmatprep.subr.bf16.mxu0 0
        %460 = vmatpush1.bf16.msra.mxu0 0
        %461 = vmatprep.subr.bf16.mxu0 0
        %462 = vmatpush1.bf16.msra.mxu0 0
        %463 = vmatprep.subr.bf16.mxu0 0
        %464 = vmatpush1.bf16.msra.mxu0 0
        %465 = vmatprep.subr.bf16.mxu0 0
        %466 = vmatpush1.bf16.msra.mxu0 0
        %467 = vmatprep.subr.bf16.mxu0 0
        %468 = vmatpush1.bf16.msra.mxu0 0
        %469 = vmatprep.subr.bf16.mxu0 0
        %470 = vmatpush1.bf16.msra.mxu0 0
        %471 = vmatprep.subr.bf16.mxu0 0
        %472 = vmatpush1.bf16.msra.mxu0 0
        %473 = vmatprep.subr.bf16.mxu0 0
        %474 = vmatpush1.bf16.msra.mxu0 0
        %475 = vmatprep.subr.bf16.mxu0 0
        %476 = vmatpush1.bf16.msra.mxu0 0
        %477 = vmatprep.mubr.bf16.mxu0 0
        %478 = vmatmul.mubr.bf16.gmra.mrb[0].mxu0 %v443
        %v479 = vpop.f32.mrb[0].mxu0
        %v480 = vadd.f32 %v428, %v479
        %v481 = vpop.f32.mrb[0].mxu0
        %v482 = vpop.f32.mrb[0].mxu0
        %v483 = vpop.f32.mrb[0].mxu0
        %484 = vdwg.mxu0
        %v485 = vmul.f32 %v480, 0.35355338
        %v486 = vpack.c.bf16 %v485, %v485
        %vm487 = vcmask 257024
        %488 = vst.msk [vmem:[%s370] sm:$0xf] %vm487, %v486
        %v489 = vpack.c.bf16 %v480, %v480
        %v491 = vunpack.c.l.b16 %v489
        %v492 = vpack.c.b16 %v491, %v491
        %493 = vrot.lane.b32.xlu0 %v492, 96
        %v494 = vpop.permute.xlu0 %493
        %496 = vst.msk [vmem:[%s377] sm:$0xf] %vm487, %v494
        %497 = vrot.lane.b32.xlu0 %v492, 64
        %v498 = vpop.permute.xlu0 %497
        %500 = vst.msk [vmem:[%s384] sm:$0xf] %vm487, %v498
        %s501 = sand.u32 %s164, 1
        %s502 = scalar_lea.sflag [#allocation4], %s501
        %s503 = sand.u32 %s164, 1
        %s504 = smul.addr %s503, 4
        %s505 = scalar_lea.vmem [#allocation11], %s504
        %s506 = sand.u32 %s30, 1
        %s507 = scalar_lea.sflag [#allocation13], %s506
        %s508 = sand.u32 %s192, 1
        %s509 = smul.addr %s508, 4
        %s510 = scalar_lea.vmem [#allocation12], %s509
        %s511 = sand.u32 %s30, 1
        %s512 = scalar_lea.sflag [#allocation13], %s511
        %s513 = sand.u32 %s220, 1
        %s514 = smul.addr %s513, 4
        %s515 = scalar_lea.vmem [#allocation14], %s514
        // Predicated region
        $region61: #{transformer_block.3} parent=39 // pred_check
          %p516 = pneg %p174
        $region62: #{transformer_block.3} parent=39 // pred_check_branch
          %518 = sbr.rel (%p516) target = $region64
        $region63: #{transformer_block.3} parent=39 // pred_region
          %s520 = ssub.s32 64, 64
          %521 = vsyncadd %s502, %s520
          %s522 = sadd.s32 %s35, %s34
          %s523 = smul.addr %s522, 64
          %s524 = scalar_lea.hbm %s5, %s523
          %s526 = sshll.u32 %s505, 4
          %s527 = int_to_ptr.vmem [resolvable:$true] %s526
          %529 = dma.vmem_to_hbm [thread:$0]  %s527, 64, %s524, %s502
        $region64: #{transformer_block.3} parent=39 // pred_fallthru
          _
        // Predicated region
        $region65: #{transformer_block.3} parent=39 // pred_check
          %p530 = pneg %p202
        $region66: #{transformer_block.3} parent=39 // pred_check_branch
          %532 = sbr.rel (%p530) target = $region68
        $region67: #{transformer_block.3} parent=39 // pred_region
          %s534 = ssub.s32 64, 64
          %535 = vsyncadd %s507, %s534
          %s536 = sadd.s32 %s35, %s34
          %s537 = smul.addr %s536, 64
          %s538 = scalar_lea.hbm %s6, %s537
          %s540 = sshll.u32 %s510, 4
          %s541 = int_to_ptr.vmem [resolvable:$true] %s540
          %543 = dma.vmem_to_hbm [thread:$0]  %s541, 64, %s538, %s507
        $region68: #{transformer_block.3} parent=39 // pred_fallthru
          _
        // Predicated region
        $region69: #{transformer_block.3} parent=39 // pred_check
          %p544 = pneg %p230
        $region70: #{transformer_block.3} parent=39 // pred_check_branch
          %546 = sbr.rel (%p544) target = $region72
        $region71: #{transformer_block.3} parent=39 // pred_region
          %s548 = ssub.s32 64, 64
          %549 = vsyncadd %s512, %s548
          %s550 = sadd.s32 %s35, %s34
          %s551 = smul.addr %s550, 64
          %s552 = scalar_lea.hbm %s7, %s551
          %s554 = sshll.u32 %s515, 4
          %s555 = int_to_ptr.vmem [resolvable:$true] %s554
          %557 = dma.vmem_to_hbm [thread:$0]  %s555, 64, %s552, %s512
        $region72: #{transformer_block.3} parent=39 // pred_fallthru
          _
      $region40: #{transformer_block.3} parent=5 // pred_fallthru
        _
      %p558 = scmp.le.s32.totalorder 2, %s25
      // Predicated region
      $region73: #{transformer_block.3} parent=5 // pred_check
        %p559 = pneg %p558
      $region74: #{transformer_block.3} parent=5 // pred_check_branch
        %561 = sbr.rel (%p559) target = $region76
      $region75: #{transformer_block.3} parent=5 // pred_region
        %s562 = ssub.s32 %s25, 2
        // Predicated region
        $region77: #{transformer_block.3} parent=75 // pred_check
          %p563 = pneg %p180
        $region78: #{transformer_block.3} parent=75 // pred_check_branch
          %565 = sbr.rel (%p563) target = $region80
        $region79: #{transformer_block.3} parent=75 // pred_region
          %s566 = sand.u32 %s165, 1
          %s567 = scalar_lea.sflag [#allocation4], %s566
          %s568 = sand.u32 %s165, 1
          %s569 = smul.addr %s568, 4
          %s570 = scalar_lea.vmem [#allocation11], %s569
          %571 = dma.done %s567, 64
        $region80: #{transformer_block.3} parent=75 // pred_fallthru
          _
        // Predicated region
        $region81: #{transformer_block.3} parent=75 // pred_check
          %p572 = pneg %p208
        $region82: #{transformer_block.3} parent=75 // pred_check_branch
          %574 = sbr.rel (%p572) target = $region84
        $region83: #{transformer_block.3} parent=75 // pred_region
          %s575 = sand.u32 %s31, 1
          %s576 = scalar_lea.sflag [#allocation13], %s575
          %s577 = sand.u32 %s193, 1
          %s578 = smul.addr %s577, 4
          %s579 = scalar_lea.vmem [#allocation12], %s578
          %580 = dma.done %s576, 64
        $region84: #{transformer_block.3} parent=75 // pred_fallthru
          _
        // Predicated region
        $region85: #{transformer_block.3} parent=75 // pred_check
          %p581 = pneg %p236
        $region86: #{transformer_block.3} parent=75 // pred_check_branch
          %583 = sbr.rel (%p581) target = $region88
        $region87: #{transformer_block.3} parent=75 // pred_region
          %s584 = sand.u32 %s31, 1
          %s585 = scalar_lea.sflag [#allocation13], %s584
          %s586 = sand.u32 %s221, 1
          %s587 = smul.addr %s586, 4
          %s588 = scalar_lea.vmem [#allocation14], %s587
          %589 = dma.done %s585, 64
        $region88: #{transformer_block.3} parent=75 // pred_fallthru
          _
      $region76: #{transformer_block.3} parent=5 // pred_fallthru
        _
    $region6: #{transformer_block.3} parent=1 // loop_footer
      %s29 = sadd.s32 1, %s25
    $region7: #{transformer_block.3} parent=1 // loop_footer_branch
      %24 = sbr.rel target = $region3
    $region8: #{transformer_block.3} parent=1 // loop_exit
      _
    %590 = vsyncpa [#allocation3], 1
    %s591 = scalar_lea.sflag [#allocation3], 1
    %592 = vsyncpa %s591, 1
    %593 = vsyncpa [#allocation6], 1
    %594 = vsyncpa [#allocation9], 1
    %595 = vsyncpa [#allocation4], 1
    %s596 = scalar_lea.sflag [#allocation4], 1
    %597 = vsyncpa %s596, 1
    %598 = vsyncpa [#allocation13], 1
    %s599 = scalar_lea.sflag [#allocation13], 1
    %600 = vsyncpa %s599, 1

// kernel: transformer_block.5
$region0: #{transformer_block.5}
  #allocation0 [shape = 'u32[]', space=smem, size = 0x4, offset = 0x4, fixed_abs, tag = 'smem constant byte address 0x4 - core index']
  #allocation1 [shape = 'u32[144,128]{1,0:T(1,128)}', space=vmem, size = 0x12000, scoped, tag = 'internal scratch']
  #allocation2 [shape = 'f32[8,32]{1,0:T(8,128)}', space=vmem, size = 0x1000, scoped, tag = 'scratch operand']
  #allocation3 [shape = 'bf16[8,32]{1,0:T(8,128)(2,1)}', space=vmem, size = 0x800, scoped, tag = 'scratch operand']
  #allocation4 [shape = 'f32[8,32]{1,0:T(8,128)}', space=vmem, size = 0x1000, scoped, tag = 'scratch operand']
  %s0 = inlined_call_operand.hbm [shape: f32[2,8,32], index: 0, kind: input, shape index: {}]
  %s1 = inlined_call_operand.hbm [shape: bf16[2,8,32], index: 1, kind: input, shape index: {}]
  %s2 = inlined_call_operand.hbm [shape: bf16[32,32], index: 2, kind: input, shape index: {}]
  %s3 = inlined_call_operand.hbm [shape: f32[1,32], index: 3, kind: input, shape index: {}]
  %s4 = inlined_call_operand.hbm [shape: f32[1,32], index: 4, kind: input, shape index: {}]
  %s5 = inlined_call_operand.hbm [shape: f32[1,32], index: 5, kind: input, shape index: {}]
  %s6 = inlined_call_operand.hbm [shape: bf16[32,128], index: 6, kind: input, shape index: {}]
  %s7 = inlined_call_operand.hbm [shape: f32[1,128], index: 7, kind: input, shape index: {}]
  %s8 = inlined_call_operand.hbm [shape: bf16[128,32], index: 8, kind: input, shape index: {}]
  %s9 = inlined_call_operand.hbm [shape: f32[1,32], index: 9, kind: input, shape index: {}]
  %s10 = inlined_call_operand.hbm [shape: f32[2,8,32], index: 10, kind: output, shape index: {}]
  %s11 = sld [smem:[#allocation0]]
  $region121: #{transformer_block.5} parent=0
    _
  %s13 = ssub.s32 1, %s11
  %s14 = scalar_select 0, %s13, %s11
  $region1: #{transformer_block.5} parent=0
    #allocation5 [shape = 'u8[8192]{0}', space=vmem, size = 0x2000, scoped, tag = 'input window, operand 0']
    #allocation6 [shape = 's32[2]{0}', space=sflag, size = 0x8, scoped, tag = 'scoped memory for transformer_block.5']
    #allocation7 [shape = 's32[2]{0}', space=sflag, size = 0x8, scoped, tag = 'scoped memory for transformer_block.5']
    #allocation8 [shape = 'u8[4096]{0}', space=vmem, size = 0x1000, scoped, tag = 'input window, operand 1']
    #allocation9 [shape = 's32[2]{0}', space=sflag, size = 0x8, scoped, tag = 'scoped memory for transformer_block.5']
    #allocation10 [shape = 'u8[8192]{0}', space=vmem, size = 0x2000, scoped, tag = 'input window, operand 2, single buffered']
    #allocation11 [shape = 'u8[512]{0}', space=vmem, size = 0x400, scoped, tag = 'input window, operand 3, single buffered']
    #allocation12 [shape = 's32[1]{0}', space=sflag, size = 0x4, scoped, tag = 'scoped memory for transformer_block.5']
    #allocation13 [shape = 'u8[512]{0}', space=vmem, size = 0x400, scoped, tag = 'input window, operand 4, single buffered']
    #allocation14 [shape = 'u8[512]{0}', space=vmem, size = 0x400, scoped, tag = 'input window, operand 5, single buffered']
    #allocation15 [shape = 's32[1]{0}', space=sflag, size = 0x4, scoped, tag = 'scoped memory for transformer_block.5']
    #allocation16 [shape = 'u8[8192]{0}', space=vmem, size = 0x2000, scoped, tag = 'input window, operand 6, single buffered']
    #allocation17 [shape = 'u8[512]{0}', space=vmem, size = 0x400, scoped, tag = 'input window, operand 7, single buffered']
    #allocation18 [shape = 's32[1]{0}', space=sflag, size = 0x4, scoped, tag = 'scoped memory for transformer_block.5']
    #allocation19 [shape = 'u8[32768]{0}', space=vmem, size = 0x8000, scoped, tag = 'input window, operand 8, single buffered']
    #allocation20 [shape = 'u8[512]{0}', space=vmem, size = 0x400, scoped, tag = 'input window, operand 9, single buffered']
    #allocation21 [shape = 's32[1]{0}', space=sflag, size = 0x4, scoped, tag = 'scoped memory for transformer_block.5']
    #allocation22 [shape = 'u8[8192]{0}', space=vmem, size = 0x2000, scoped, tag = 'output window, operand 0']
    %15 = vsyncpa [#allocation6], 0
    %s16 = scalar_lea.sflag [#allocation6], 1
    %17 = vsyncpa %s16, 0
    %18 = vsyncpa [#allocation9], 0
    %s19 = scalar_lea.sflag [#allocation9], 1
    %20 = vsyncpa %s19, 0
    %21 = vsyncpa [#allocation12], 0
    %22 = vsyncpa [#allocation15], 0
    %23 = vsyncpa [#allocation18], 0
    %24 = vsyncpa [#allocation21], 0
    %25 = vsyncpa [#allocation7], 0
    %s26 = scalar_lea.sflag [#allocation7], 1
    %27 = vsyncpa %s26, 0
    loop: start=0, step=1, limit=4
    $region2: #{transformer_block.5} parent=1 // loop_pre_header
      _
    $region3: #{transformer_block.5} parent=1 // loop_header
      %s29 = sphi 0, %s33
      %p30 = scmp.ge.s32.totalorder %s29, 4
      %s36 = sphi 0, %s55
      %s37 = sphi 0, %s51
      %s38 = sphi 0, %s47
      %s39 = sphi 0, %s36
      %s40 = sphi 0, %s37
      %s41 = sphi 0, %s38
      %s42 = sphi 0, %s39
      %s43 = sphi 0, %s40
      %s44 = sphi 0, %s41
      %s60 = sphi 0, %s62
      %s63 = sphi 0, %s60
      %s64 = sphi 0, %s63
      %s80 = sphi 0, %s64
      %s88 = sphi 0, %s90
      %s91 = sphi 0, %s88
      %s92 = sphi 0, %s91
      %s108 = sphi 0, %s92
      %s112 = sphi 0, %s112
      %s114 = sphi 0, %s112
      %s115 = sphi 0, %s114
      %s129 = sphi 0, %s115
      %s133 = sphi 0, %s133
      %s135 = sphi 0, %s133
      %s136 = sphi 0, %s135
      %s150 = sphi 0, %s136
      %s154 = sphi 0, %s154
      %s156 = sphi 0, %s154
      %s157 = sphi 0, %s156
      %s171 = sphi 0, %s157
      %s175 = sphi 0, %s175
      %s177 = sphi 0, %s175
      %s178 = sphi 0, %s177
      %s192 = sphi 0, %s178
      %s198 = sphi 0, %s200
      %s201 = sphi 0, %s198
      %s202 = sphi 0, %s201
      %s218 = sphi 0, %s202
      %s224 = sphi 0, %s226
      %s227 = sphi 0, %s224
      %s228 = sphi 0, %s227
      %s244 = sphi 0, %s228
      %s250 = sphi 0, %s252
      %s253 = sphi 0, %s250
      %s254 = sphi 0, %s253
      %s270 = sphi 0, %s254
      %s274 = sphi 0, %s274
      %s276 = sphi 0, %s274
      %s277 = sphi 0, %s276
      %s291 = sphi 0, %s277
      %s299 = sphi 0, %s301
      %s302 = sphi 0, %s299
      %s303 = sphi 0, %s302
      %s319 = sphi 0, %s303
    $region4: #{transformer_block.5} parent=1 // loop_header_branch
      %32 = sbr.rel (%p30) target = $region8
    $region5: #{transformer_block.5} parent=1 // loop_body
      %s34 = ssub.s32 %s29, 1
      %s35 = ssub.s32 %s29, 2
      %s45 = sadd.s32 1, %s38
      %p46 = scmp.ge.s32.totalorder %s45, 1
      %s47 = scalar_select %p46, 0, %s45
      %s48 = sadd.s32 1, %s37
      %s49 = scalar_select %p46, %s48, %s37
      %p50 = scmp.ge.s32.totalorder %s49, 1
      %s51 = scalar_select %p50, 0, %s49
      %s52 = sadd.s32 1, %s36
      %s53 = scalar_select %p50, %s52, %s36
      %p54 = scmp.ge.s32.totalorder %s53, 2
      %s55 = scalar_select %p54, 0, %s53
      %s56 = ssub.s32 %s36, %s55
      %s57 = ssub.s32 %s37, %s51
      %s58 = sor.u32 %s56, %s57
      %p59 = scmp.eq.s32.totalorder %s58, 0
      %s61 = sadd.s32 %s60, 1
      %s62 = scalar_select %p59, %s60, %s61
      %p65 = pneg %p59
      %p66 = scmp.eq.s32.totalorder %s29, 1
      %p67 = por %p65, %p66
      %p68 = scmp.ne.s32.totalorder %s60, %s63
      %p69 = scmp.eq.s32.totalorder %s29, 0
      %p70 = por %p68, %p69
      %p71 = scmp.ne.s32.totalorder %s60, %s63
      %p72 = scmp.eq.s32.totalorder %s34, 1
      %p73 = por %p71, %p72
      %p74 = scmp.ne.s32.totalorder %s63, %s64
      %p75 = scmp.eq.s32.totalorder %s34, 0
      %p76 = por %p74, %p75
      %p77 = scmp.ne.s32.totalorder %s63, %s64
      %p78 = scmp.eq.s32.totalorder %s35, 1
      %p79 = por %p77, %p78
      %p81 = scmp.ne.s32.totalorder %s64, %s80
      %p82 = scmp.eq.s32.totalorder %s35, 0
      %p83 = por %p81, %p82
      %s84 = ssub.s32 %s36, %s55
      %s85 = ssub.s32 %s37, %s51
      %s86 = sor.u32 %s84, %s85
      %p87 = scmp.eq.s32.totalorder %s86, 0
      %s89 = sadd.s32 %s88, 1
      %s90 = scalar_select %p87, %s88, %s89
      %p93 = pneg %p87
      %p94 = scmp.eq.s32.totalorder %s29, 1
      %p95 = por %p93, %p94
      %p96 = scmp.ne.s32.totalorder %s88, %s91
      %p97 = scmp.eq.s32.totalorder %s29, 0
      %p98 = por %p96, %p97
      %p99 = scmp.ne.s32.totalorder %s88, %s91
      %p100 = scmp.eq.s32.totalorder %s34, 1
      %p101 = por %p99, %p100
      %p102 = scmp.ne.s32.totalorder %s91, %s92
      %p103 = scmp.eq.s32.totalorder %s34, 0
      %p104 = por %p102, %p103
      %p105 = scmp.ne.s32.totalorder %s91, %s92
      %p106 = scmp.eq.s32.totalorder %s35, 1
      %p107 = por %p105, %p106
      %p109 = scmp.ne.s32.totalorder %s92, %s108
      %p110 = scmp.eq.s32.totalorder %s35, 0
      %p111 = por %p109, %p110
      %s113 = sadd.s32 %s112, 1
      %p116 = scmp.eq.s32.totalorder %s29, 1
      %p117 = scmp.ne.s32.totalorder %s112, %s114
      %p118 = scmp.eq.s32.totalorder %s29, 0
      %p119 = por %p117, %p118
      %p120 = scmp.ne.s32.totalorder %s112, %s114
      %p121 = scmp.eq.s32.totalorder %s34, 1
      %p122 = por %p120, %p121
      %p123 = scmp.ne.s32.totalorder %s114, %s115
      %p124 = scmp.eq.s32.totalorder %s34, 0
      %p125 = por %p123, %p124
      %p126 = scmp.ne.s32.totalorder %s114, %s115
      %p127 = scmp.eq.s32.totalorder %s35, 1
      %p128 = por %p126, %p127
      %p130 = scmp.ne.s32.totalorder %s115, %s129
      %p131 = scmp.eq.s32.totalorder %s35, 0
      %p132 = por %p130, %p131
      %s134 = sadd.s32 %s133, 1
      %p137 = scmp.eq.s32.totalorder %s29, 1
      %p138 = scmp.ne.s32.totalorder %s133, %s135
      %p139 = scmp.eq.s32.totalorder %s29, 0
      %p140 = por %p138, %p139
      %p141 = scmp.ne.s32.totalorder %s133, %s135
      %p142 = scmp.eq.s32.totalorder %s34, 1
      %p143 = por %p141, %p142
      %p144 = scmp.ne.s32.totalorder %s135, %s136
      %p145 = scmp.eq.s32.totalorder %s34, 0
      %p146 = por %p144, %p145
      %p147 = scmp.ne.s32.totalorder %s135, %s136
      %p148 = scmp.eq.s32.totalorder %s35, 1
      %p149 = por %p147, %p148
      %p151 = scmp.ne.s32.totalorder %s136, %s150
      %p152 = scmp.eq.s32.totalorder %s35, 0
      %p153 = por %p151, %p152
      %s155 = sadd.s32 %s154, 1
      %p158 = scmp.eq.s32.totalorder %s29, 1
      %p159 = scmp.ne.s32.totalorder %s154, %s156
      %p160 = scmp.eq.s32.totalorder %s29, 0
      %p161 = por %p159, %p160
      %p162 = scmp.ne.s32.totalorder %s154, %s156
      %p163 = scmp.eq.s32.totalorder %s34, 1
      %p164 = por %p162, %p163
      %p165 = scmp.ne.s32.totalorder %s156, %s157
      %p166 = scmp.eq.s32.totalorder %s34, 0
      %p167 = por %p165, %p166
      %p168 = scmp.ne.s32.totalorder %s156, %s157
      %p169 = scmp.eq.s32.totalorder %s35, 1
      %p170 = por %p168, %p169
      %p172 = scmp.ne.s32.totalorder %s157, %s171
      %p173 = scmp.eq.s32.totalorder %s35, 0
      %p174 = por %p172, %p173
      %s176 = sadd.s32 %s175, 1
      %p179 = scmp.eq.s32.totalorder %s29, 1
      %p180 = scmp.ne.s32.totalorder %s175, %s177
      %p181 = scmp.eq.s32.totalorder %s29, 0
      %p182 = por %p180, %p181
      %p183 = scmp.ne.s32.totalorder %s175, %s177
      %p184 = scmp.eq.s32.totalorder %s34, 1
      %p185 = por %p183, %p184
      %p186 = scmp.ne.s32.totalorder %s177, %s178
      %p187 = scmp.eq.s32.totalorder %s34, 0
      %p188 = por %p186, %p187
      %p189 = scmp.ne.s32.totalorder %s177, %s178
      %p190 = scmp.eq.s32.totalorder %s35, 1
      %p191 = por %p189, %p190
      %p193 = scmp.ne.s32.totalorder %s178, %s192
      %p194 = scmp.eq.s32.totalorder %s35, 0
      %p195 = por %p193, %p194
      %s196 = ssub.s32 %s38, %s47
      %p197 = scmp.eq.s32.totalorder %s196, 0
      %s199 = sadd.s32 %s198, 1
      %s200 = scalar_select %p197, %s198, %s199
      %p203 = pneg %p197
      %p204 = scmp.eq.s32.totalorder %s29, 1
      %p205 = por %p203, %p204
      %p206 = scmp.ne.s32.totalorder %s198, %s201
      %p207 = scmp.eq.s32.totalorder %s29, 0
      %p208 = por %p206, %p207
      %p209 = scmp.ne.s32.totalorder %s198, %s201
      %p210 = scmp.eq.s32.totalorder %s34, 1
      %p211 = por %p209, %p210
      %p212 = scmp.ne.s32.totalorder %s201, %s202
      %p213 = scmp.eq.s32.totalorder %s34, 0
      %p214 = por %p212, %p213
      %p215 = scmp.ne.s32.totalorder %s201, %s202
      %p216 = scmp.eq.s32.totalorder %s35, 1
      %p217 = por %p215, %p216
      %p219 = scmp.ne.s32.totalorder %s202, %s218
      %p220 = scmp.eq.s32.totalorder %s35, 0
      %p221 = por %p219, %p220
      %s222 = ssub.s32 %s38, %s47
      %p223 = scmp.eq.s32.totalorder %s222, 0
      %s225 = sadd.s32 %s224, 1
      %s226 = scalar_select %p223, %s224, %s225
      %p229 = pneg %p223
      %p230 = scmp.eq.s32.totalorder %s29, 1
      %p231 = por %p229, %p230
      %p232 = scmp.ne.s32.totalorder %s224, %s227
      %p233 = scmp.eq.s32.totalorder %s29, 0
      %p234 = por %p232, %p233
      %p235 = scmp.ne.s32.totalorder %s224, %s227
      %p236 = scmp.eq.s32.totalorder %s34, 1
      %p237 = por %p235, %p236
      %p238 = scmp.ne.s32.totalorder %s227, %s228
      %p239 = scmp.eq.s32.totalorder %s34, 0
      %p240 = por %p238, %p239
      %p241 = scmp.ne.s32.totalorder %s227, %s228
      %p242 = scmp.eq.s32.totalorder %s35, 1
      %p243 = por %p241, %p242
      %p245 = scmp.ne.s32.totalorder %s228, %s244
      %p246 = scmp.eq.s32.totalorder %s35, 0
      %p247 = por %p245, %p246
      %s248 = ssub.s32 %s38, %s47
      %p249 = scmp.eq.s32.totalorder %s248, 0
      %s251 = sadd.s32 %s250, 1
      %s252 = scalar_select %p249, %s250, %s251
      %p255 = pneg %p249
      %p256 = scmp.eq.s32.totalorder %s29, 1
      %p257 = por %p255, %p256
      %p258 = scmp.ne.s32.totalorder %s250, %s253
      %p259 = scmp.eq.s32.totalorder %s29, 0
      %p260 = por %p258, %p259
      %p261 = scmp.ne.s32.totalorder %s250, %s253
      %p262 = scmp.eq.s32.totalorder %s34, 1
      %p263 = por %p261, %p262
      %p264 = scmp.ne.s32.totalorder %s253, %s254
      %p265 = scmp.eq.s32.totalorder %s34, 0
      %p266 = por %p264, %p265
      %p267 = scmp.ne.s32.totalorder %s253, %s254
      %p268 = scmp.eq.s32.totalorder %s35, 1
      %p269 = por %p267, %p268
      %p271 = scmp.ne.s32.totalorder %s254, %s270
      %p272 = scmp.eq.s32.totalorder %s35, 0
      %p273 = por %p271, %p272
      %s275 = sadd.s32 %s274, 1
      %p278 = scmp.eq.s32.totalorder %s29, 1
      %p279 = scmp.ne.s32.totalorder %s274, %s276
      %p280 = scmp.eq.s32.totalorder %s29, 0
      %p281 = por %p279, %p280
      %p282 = scmp.ne.s32.totalorder %s274, %s276
      %p283 = scmp.eq.s32.totalorder %s34, 1
      %p284 = por %p282, %p283
      %p285 = scmp.ne.s32.totalorder %s276, %s277
      %p286 = scmp.eq.s32.totalorder %s34, 0
      %p287 = por %p285, %p286
      %p288 = scmp.ne.s32.totalorder %s276, %s277
      %p289 = scmp.eq.s32.totalorder %s35, 1
      %p290 = por %p288, %p289
      %p292 = scmp.ne.s32.totalorder %s277, %s291
      %p293 = scmp.eq.s32.totalorder %s35, 0
      %p294 = por %p292, %p293
      %s295 = ssub.s32 %s36, %s55
      %s296 = ssub.s32 %s37, %s51
      %s297 = sor.u32 %s295, %s296
      %p298 = scmp.eq.s32.totalorder %s297, 0
      %s300 = sadd.s32 %s299, 1
      %s301 = scalar_select %p298, %s299, %s300
      %p304 = pneg %p298
      %p305 = scmp.eq.s32.totalorder %s29, 1
      %p306 = por %p304, %p305
      %p307 = scmp.ne.s32.totalorder %s299, %s302
      %p308 = scmp.eq.s32.totalorder %s29, 0
      %p309 = por %p307, %p308
      %p310 = scmp.ne.s32.totalorder %s299, %s302
      %p311 = scmp.eq.s32.totalorder %s34, 1
      %p312 = por %p310, %p311
      %p313 = scmp.ne.s32.totalorder %s302, %s303
      %p314 = scmp.eq.s32.totalorder %s34, 0
      %p315 = por %p313, %p314
      %p316 = scmp.ne.s32.totalorder %s302, %s303
      %p317 = scmp.eq.s32.totalorder %s35, 1
      %p318 = por %p316, %p317
      %p320 = scmp.ne.s32.totalorder %s303, %s319
      %p321 = scmp.eq.s32.totalorder %s35, 0
      %p322 = por %p320, %p321
      %p323 = scmp.le.s32.totalorder 1, %s29
      %p324 = scmp.lt.s32.totalorder %s29, 3
      %p325 = pnand %p323, %p324
      %p326 = pneg %p325
      // Predicated region
      $region9: #{transformer_block.5} parent=5 // pred_check
        _
      $region10: #{transformer_block.5} parent=5 // pred_check_branch
        %328 = sbr.rel (%p325) target = $region12
      $region11: #{transformer_block.5} parent=5 // pred_region
        %s329 = ssub.s32 %s29, 1
        // Predicated region
        $region13: #{transformer_block.5} parent=11 // pred_check
          %p330 = pneg %p125
        $region14: #{transformer_block.5} parent=11 // pred_check_branch
          %332 = sbr.rel (%p330) target = $region16
        $region15: #{transformer_block.5} parent=11 // pred_region
          %s334 = ssub.s32 256, 256
          %335 = vsyncadd [#allocation9], %s334
          %s336 = sshll.u32 [#allocation10], 4
          %s337 = int_to_ptr.vmem [resolvable:$true] %s336
          %342 = dma.hbm_to_vmem [thread:$0]  %s2, 256, %s337, [#allocation9], 64, 64, 4
        $region16: #{transformer_block.5} parent=11 // pred_fallthru
          _
        // Predicated region
        $region17: #{transformer_block.5} parent=11 // pred_check
          %p343 = pneg %p146
        $region18: #{transformer_block.5} parent=11 // pred_check_branch
          %345 = sbr.rel (%p343) target = $region20
        $region19: #{transformer_block.5} parent=11 // pred_region
          %s347 = ssub.s32 16, 16
          %348 = vsyncadd [#allocation12], %s347
          %s350 = sshll.u32 [#allocation11], 4
          %s351 = int_to_ptr.vmem [resolvable:$true] %s350
          %353 = dma.hbm_to_vmem [thread:$0]  %s3, 16, %s351, [#allocation12]
        $region20: #{transformer_block.5} parent=11 // pred_fallthru
          _
        // Predicated region
        $region21: #{transformer_block.5} parent=11 // pred_check
          %p354 = pneg %p167
        $region22: #{transformer_block.5} parent=11 // pred_check_branch
          %356 = sbr.rel (%p354) target = $region24
        $region23: #{transformer_block.5} parent=11 // pred_region
          %s358 = ssub.s32 16, 16
          %359 = vsyncadd [#allocation12], %s358
          %s361 = sshll.u32 [#allocation13], 4
          %s362 = int_to_ptr.vmem [resolvable:$true] %s361
          %364 = dma.hbm_to_vmem [thread:$0]  %s4, 16, %s362, [#allocation12]
        $region24: #{transformer_block.5} parent=11 // pred_fallthru
          _
        // Predicated region
        $region25: #{transformer_block.5} parent=11 // pred_check
          %p365 = pneg %p188
        $region26: #{transformer_block.5} parent=11 // pred_check_branch
          %367 = sbr.rel (%p365) target = $region28
        $region27: #{transformer_block.5} parent=11 // pred_region
          %s369 = ssub.s32 16, 16
          %370 = vsyncadd [#allocation15], %s369
          %s372 = sshll.u32 [#allocation14], 4
          %s373 = int_to_ptr.vmem [resolvable:$true] %s372
          %375 = dma.hbm_to_vmem [thread:$0]  %s5, 16, %s373, [#allocation15]
        $region28: #{transformer_block.5} parent=11 // pred_fallthru
          _
        // Predicated region
        $region29: #{transformer_block.5} parent=11 // pred_check
          %p376 = pneg %p214
        $region30: #{transformer_block.5} parent=11 // pred_check_branch
          %378 = sbr.rel (%p376) target = $region32
        $region31: #{transformer_block.5} parent=11 // pred_region
          %s380 = ssub.s32 256, 256
          %381 = vsyncadd [#allocation15], %s380
          %s382 = smul.addr %s41, 64
          %s383 = scalar_lea.hbm %s6, %s382
          %s384 = sshll.u32 [#allocation16], 4
          %s385 = int_to_ptr.vmem [resolvable:$true] %s384
          %390 = dma.hbm_to_vmem [thread:$0]  %s383, 256, %s385, [#allocation15], 64, 64, 4
        $region32: #{transformer_block.5} parent=11 // pred_fallthru
          _
        // Predicated region
        $region33: #{transformer_block.5} parent=11 // pred_check
          %p391 = pneg %p240
        $region34: #{transformer_block.5} parent=11 // pred_check_branch
          %393 = sbr.rel (%p391) target = $region36
        $region35: #{transformer_block.5} parent=11 // pred_region
          %s395 = ssub.s32 16, 16
          %396 = vsyncadd [#allocation18], %s395
          %s397 = smul.addr %s41, 16
          %s398 = scalar_lea.hbm %s7, %s397
          %s400 = sshll.u32 [#allocation17], 4
          %s401 = int_to_ptr.vmem [resolvable:$true] %s400
          %403 = dma.hbm_to_vmem [thread:$0]  %s398, 16, %s401, [#allocation18]
        $region36: #{transformer_block.5} parent=11 // pred_fallthru
          _
        // Predicated region
        $region37: #{transformer_block.5} parent=11 // pred_check
          %p404 = pneg %p266
        $region38: #{transformer_block.5} parent=11 // pred_check_branch
          %406 = sbr.rel (%p404) target = $region40
        $region39: #{transformer_block.5} parent=11 // pred_region
          %s407 = smul.u32 16, %s41
          %s409 = ssub.s32 1024, 1024
          %410 = vsyncadd [#allocation18], %s409
          %s411 = smul.addr %s407, 64
          %s412 = scalar_lea.hbm %s8, %s411
          %s413 = sshll.u32 [#allocation19], 4
          %s414 = int_to_ptr.vmem [resolvable:$true] %s413
          %419 = dma.hbm_to_vmem [thread:$0]  %s412, 1024, %s414, [#allocation18], 64, 64, 4
        $region40: #{transformer_block.5} parent=11 // pred_fallthru
          _
        // Predicated region
        $region41: #{transformer_block.5} parent=11 // pred_check
          %p420 = pneg %p287
        $region42: #{transformer_block.5} parent=11 // pred_check_branch
          %422 = sbr.rel (%p420) target = $region44
        $region43: #{transformer_block.5} parent=11 // pred_region
          %s424 = ssub.s32 16, 16
          %425 = vsyncadd [#allocation21], %s424
          %s427 = sshll.u32 [#allocation20], 4
          %s428 = int_to_ptr.vmem [resolvable:$true] %s427
          %430 = dma.hbm_to_vmem [thread:$0]  %s9, 16, %s428, [#allocation21]
        $region44: #{transformer_block.5} parent=11 // pred_fallthru
          _
      $region12: #{transformer_block.5} parent=5 // pred_fallthru
        _
      %p431 = scmp.lt.s32.totalorder %s29, 2
      // Predicated region
      $region45: #{transformer_block.5} parent=5 // pred_check
        %p432 = pneg %p431
      $region46: #{transformer_block.5} parent=5 // pred_check_branch
        %434 = sbr.rel (%p432) target = $region48
      $region47: #{transformer_block.5} parent=5 // pred_region
        // Predicated region
        $region49: #{transformer_block.5} parent=47 // pred_check
          %p435 = pneg %p70
        $region50: #{transformer_block.5} parent=47 // pred_check_branch
          %437 = sbr.rel (%p435) target = $region52
        $region51: #{transformer_block.5} parent=47 // pred_region
          %s438 = sand.u32 %s60, 1
          %s439 = scalar_lea.sflag [#allocation6], %s438
          %s440 = sand.u32 %s60, 1
          %s441 = smul.addr %s440, 8
          %s442 = scalar_lea.vmem [#allocation5], %s441
          %s444 = ssub.s32 128, 128
          %445 = vsyncadd %s439, %s444
          %s446 = sadd.s32 %s37, %s36
          %s447 = smul.addr %s446, 128
          %s448 = scalar_lea.hbm %s0, %s447
          %s450 = sshll.u32 %s442, 4
          %s451 = int_to_ptr.vmem [resolvable:$true] %s450
          %453 = dma.hbm_to_vmem [thread:$0]  %s448, 128, %s451, %s439
        $region52: #{transformer_block.5} parent=47 // pred_fallthru
          _
        // Predicated region
        $region53: #{transformer_block.5} parent=47 // pred_check
          %p454 = pneg %p98
        $region54: #{transformer_block.5} parent=47 // pred_check_branch
          %456 = sbr.rel (%p454) target = $region56
        $region55: #{transformer_block.5} parent=47 // pred_region
          %s457 = sand.u32 %s29, 1
          %s458 = scalar_lea.sflag [#allocation9], %s457
          %s459 = sand.u32 %s88, 1
          %s460 = smul.addr %s459, 4
          %s461 = scalar_lea.vmem [#allocation8], %s460
          %s463 = ssub.s32 64, 64
          %464 = vsyncadd %s458, %s463
          %s465 = sadd.s32 %s37, %s36
          %s466 = smul.addr %s465, 64
          %s467 = scalar_lea.hbm %s1, %s466
          %s469 = sshll.u32 %s461, 4
          %s470 = int_to_ptr.vmem [resolvable:$true] %s469
          %472 = dma.hbm_to_vmem [thread:$0]  %s467, 64, %s470, %s458
        $region56: #{transformer_block.5} parent=47 // pred_fallthru
          _
      $region48: #{transformer_block.5} parent=5 // pred_fallthru
        _
      %p473 = scmp.le.s32.totalorder 1, %s29
      %p474 = scmp.lt.s32.totalorder %s29, 3
      %p475 = pnand %p473, %p474
      %p476 = pneg %p475
      // Predicated region
      $region57: #{transformer_block.5} parent=5 // pred_check
        _
      $region58: #{transformer_block.5} parent=5 // pred_check_branch
        %478 = sbr.rel (%p475) target = $region60
      $region59: #{transformer_block.5} parent=5 // pred_region
        %s479 = ssub.s32 %s29, 1
        %s480 = sand.u32 %s63, 1
        %s481 = scalar_lea.sflag [#allocation6], %s480
        %s482 = sand.u32 %s63, 1
        %s483 = smul.addr %s482, 8
        %s484 = scalar_lea.vmem [#allocation5], %s483
        // Predicated region
        $region61: #{transformer_block.5} parent=59 // pred_check
          %p485 = pneg %p76
        $region62: #{transformer_block.5} parent=59 // pred_check_branch
          %487 = sbr.rel (%p485) target = $region64
        $region63: #{transformer_block.5} parent=59 // pred_region
          %488 = dma.done %s481, 128
        $region64: #{transformer_block.5} parent=59 // pred_fallthru
          _
        %s489 = sand.u32 %s34, 1
        %s490 = scalar_lea.sflag [#allocation9], %s489
        %s491 = sand.u32 %s91, 1
        %s492 = smul.addr %s491, 4
        %s493 = scalar_lea.vmem [#allocation8], %s492
        // Predicated region
        $region65: #{transformer_block.5} parent=59 // pred_check
          %p494 = pneg %p104
        $region66: #{transformer_block.5} parent=59 // pred_check_branch
          %496 = sbr.rel (%p494) target = $region68
        $region67: #{transformer_block.5} parent=59 // pred_region
          %497 = dma.done %s490, 64
        $region68: #{transformer_block.5} parent=59 // pred_fallthru
          _
        // Predicated region
        $region69: #{transformer_block.5} parent=59 // pred_check
          %p498 = pneg %p125
        $region70: #{transformer_block.5} parent=59 // pred_check_branch
          %500 = sbr.rel (%p498) target = $region72
        $region71: #{transformer_block.5} parent=59 // pred_region
          %501 = dma.done [#allocation9], 256
        $region72: #{transformer_block.5} parent=59 // pred_fallthru
          _
        // Predicated region
        $region73: #{transformer_block.5} parent=59 // pred_check
          %p502 = pneg %p146
        $region74: #{transformer_block.5} parent=59 // pred_check_branch
          %504 = sbr.rel (%p502) target = $region76
        $region75: #{transformer_block.5} parent=59 // pred_region
          %505 = dma.done [#allocation12], 16
        $region76: #{transformer_block.5} parent=59 // pred_fallthru
          _
        // Predicated region
        $region77: #{transformer_block.5} parent=59 // pred_check
          %p506 = pneg %p167
        $region78: #{transformer_block.5} parent=59 // pred_check_branch
          %508 = sbr.rel (%p506) target = $region80
        $region79: #{transformer_block.5} parent=59 // pred_region
          %509 = dma.done [#allocation12], 16
        $region80: #{transformer_block.5} parent=59 // pred_fallthru
          _
        // Predicated region
        $region81: #{transformer_block.5} parent=59 // pred_check
          %p510 = pneg %p188
        $region82: #{transformer_block.5} parent=59 // pred_check_branch
          %512 = sbr.rel (%p510) target = $region84
        $region83: #{transformer_block.5} parent=59 // pred_region
          %513 = dma.done [#allocation15], 16
        $region84: #{transformer_block.5} parent=59 // pred_fallthru
          _
        // Predicated region
        $region85: #{transformer_block.5} parent=59 // pred_check
          %p514 = pneg %p214
        $region86: #{transformer_block.5} parent=59 // pred_check_branch
          %516 = sbr.rel (%p514) target = $region88
        $region87: #{transformer_block.5} parent=59 // pred_region
          %517 = dma.done [#allocation15], 256
        $region88: #{transformer_block.5} parent=59 // pred_fallthru
          _
        // Predicated region
        $region89: #{transformer_block.5} parent=59 // pred_check
          %p518 = pneg %p240
        $region90: #{transformer_block.5} parent=59 // pred_check_branch
          %520 = sbr.rel (%p518) target = $region92
        $region91: #{transformer_block.5} parent=59 // pred_region
          %521 = dma.done [#allocation18], 16
        $region92: #{transformer_block.5} parent=59 // pred_fallthru
          _
        // Predicated region
        $region93: #{transformer_block.5} parent=59 // pred_check
          %p522 = pneg %p266
        $region94: #{transformer_block.5} parent=59 // pred_check_branch
          %524 = sbr.rel (%p522) target = $region96
        $region95: #{transformer_block.5} parent=59 // pred_region
          %525 = dma.done [#allocation18], 1024
        $region96: #{transformer_block.5} parent=59 // pred_fallthru
          _
        // Predicated region
        $region97: #{transformer_block.5} parent=59 // pred_check
          %p526 = pneg %p287
        $region98: #{transformer_block.5} parent=59 // pred_check_branch
          %528 = sbr.rel (%p526) target = $region100
        $region99: #{transformer_block.5} parent=59 // pred_region
          %529 = dma.done [#allocation21], 16
        $region100: #{transformer_block.5} parent=59 // pred_fallthru
          _
        %s530 = sand.u32 %s63, 1
        %s531 = scalar_lea.sflag [#allocation6], %s530
        %s532 = sand.u32 %s63, 1
        %s533 = smul.addr %s532, 8
        %s534 = scalar_lea.vmem [#allocation5], %s533
        %p535 = pneg %p76
        %p536 = pneg %p73
        %s537 = sand.u32 %s34, 1
        %s538 = scalar_lea.sflag [#allocation9], %s537
        %s539 = sand.u32 %s91, 1
        %s540 = smul.addr %s539, 4
        %s541 = scalar_lea.vmem [#allocation8], %s540
        %p542 = pneg %p104
        %p543 = pneg %p101
        %p544 = pneg %p125
        %p545 = pneg %p122
        %p546 = pneg %p146
        %p547 = pneg %p143
        %p548 = pneg %p167
        %p549 = pneg %p164
        %p550 = pneg %p188
        %p551 = pneg %p185
        %p552 = pneg %p214
        %p553 = pneg %p211
        %p554 = pneg %p240
        %p555 = pneg %p237
        %p556 = pneg %p266
        %p557 = pneg %p263
        %p558 = pneg %p287
        %p559 = pneg %p284
        %p560 = pneg %p315
        %p561 = pneg %p312
        %s562 = sand.u32 %s302, 1
        %s563 = scalar_lea.sflag [#allocation7], %s562
        %s564 = sand.u32 %s302, 1
        %s565 = smul.addr %s564, 8
        %s566 = scalar_lea.vmem [#allocation22], %s565
        %s567 = smul.u32 16, %s41
        %p569 = scmp.eq.s32.totalorder %s41, 0
        // Predicated region
        $region101: #{transformer_block.5} parent=59 // pred_check
          %p570 = pneg %p569
        $region102: #{transformer_block.5} parent=59 // pred_check_branch
          %572 = sbr.rel (%p570) target = $region104
        $region103: #{transformer_block.5} parent=59 // pred_region
          %v573 = vld [vmem:[%s484] sm:$0xff]
          %v574 = vld [vmem:[%s493] sm:$0xf]
          %v575 = vld [vmem:[#allocation10] sm:$0xf]
          %v576 = vld [vmem:[#allocation10 + $0x4] sm:$0xf]
          %v577 = vld [vmem:[#allocation10 + $0x8] sm:$0xf]
          %v578 = vld [vmem:[#allocation10 + $0xc] sm:$0xf]
          %v579 = vld [vmem:[#allocation11] sm:$0x1]
          %v581 = vlaneseq
          %v582 = vshrl.u32 %v581, 7
          %v583 = vsub.s32 0, %v582
          %v584 = vrot.slane %v579, %v583
          %v590 = vunpack.c.l.b16 %v575
          %v591 = vunpack.c.l.b16 %v576
          %v592 = vunpack.c.l.b16 %v577
          %v593 = vunpack.c.l.b16 %v578
          %v594 = vpack.c.b16 %v591, %v590
          %v595 = vpack.c.b16 %v593, %v592
          %vm598 = vcmask 261120
          %v600 = vsel %vm598, %v574, 0
          %602 = vmatprep.subr.bf16.mxu0 0
          %603 = vmatpush1.bf16.msra.mxu0 %v594
          %604 = vmatprep.subr.bf16.mxu0 0
          %605 = vmatpush1.bf16.msra.mxu0 %v595
          %606 = vmatprep.subr.bf16.mxu0 0
          %607 = vmatpush1.bf16.msra.mxu0 0
          %608 = vmatprep.subr.bf16.mxu0 0
          %609 = vmatpush1.bf16.msra.mxu0 0
          %610 = vmatprep.subr.bf16.mxu0 0
          %611 = vmatpush1.bf16.msra.mxu0 0
          %612 = vmatprep.subr.bf16.mxu0 0
          %613 = vmatpush1.bf16.msra.mxu0 0
          %614 = vmatprep.subr.bf16.mxu0 0
          %615 = vmatpush1.bf16.msra.mxu0 0
          %616 = vmatprep.subr.bf16.mxu0 0
          %617 = vmatpush1.bf16.msra.mxu0 0
          %618 = vmatprep.subr.bf16.mxu0 0
          %619 = vmatpush1.bf16.msra.mxu0 0
          %620 = vmatprep.subr.bf16.mxu0 0
          %621 = vmatpush1.bf16.msra.mxu0 0
          %622 = vmatprep.subr.bf16.mxu0 0
          %623 = vmatpush1.bf16.msra.mxu0 0
          %624 = vmatprep.subr.bf16.mxu0 0
          %625 = vmatpush1.bf16.msra.mxu0 0
          %626 = vmatprep.subr.bf16.mxu0 0
          %627 = vmatpush1.bf16.msra.mxu0 0
          %628 = vmatprep.subr.bf16.mxu0 0
          %629 = vmatpush1.bf16.msra.mxu0 0
          %630 = vmatprep.subr.bf16.mxu0 0
          %631 = vmatpush1.bf16.msra.mxu0 0
          %632 = vmatprep.subr.bf16.mxu0 0
          %633 = vmatpush1.bf16.msra.mxu0 0
          %634 = vmatprep.mubr.bf16.mxu0 0
          %635 = vmatmul.mubr.bf16.gmra.mrb[0].mxu0 %v600
          %v636 = vpop.f32.mrb[0].mxu0
          %v637 = vadd.f32 %v584, %v636
          %v638 = vpop.f32.mrb[0].mxu0
          %v639 = vpop.f32.mrb[0].mxu0
          %v640 = vpop.f32.mrb[0].mxu0
          %641 = vdwg.mxu0
          %v642 = vadd.f32 %v573, %v637
          %643 = vst.msk [vmem:[#allocation2] sm:$0xff] %vm598, %v642
          %v644 = vld [vmem:[#allocation13] sm:$0x1]
          %v645 = vld [vmem:[#allocation14] sm:$0x1]
          %v646 = vsel %vm598, %v642, 0.0
          %647 = vadd.xlane.f32.xlu0 %v646
          %v648 = vpop.xlane.xlu0 %647
          %v649 = vrcp.pop 32.0
          %v650 = vmul.f32 %v648, %v649
          %v651 = vsub.f32 %v642, %v650
          %v652 = vmul.f32 %v651, %v651
          %v653 = vsel %vm598, %v652, 0.0
          %654 = vadd.xlane.f32.xlu0 %v653
          %v655 = vpop.xlane.xlu0 %654
          %v656 = vmul.f32 %v655, %v649
          %v657 = vadd.f32 %v656, 1e-05
          %v658 = vrsqrt.pop %v657
          %v659 = vmul.f32 %v651, %v658
          %v661 = vlaneseq
          %v662 = vshrl.u32 %v661, 7
          %v663 = vsub.s32 0, %v662
          %v664 = vrot.slane %v644, %v663
          %v666 = vmul.f32 %v659, %v664
          %v668 = vlaneseq
          %v669 = vshrl.u32 %v668, 7
          %v670 = vsub.s32 0, %v669
          %v671 = vrot.slane %v645, %v670
          %v673 = vadd.f32 %v666, %v671
          %v674 = vpack.c.bf16 %v673, %v673
          %vm675 = vcmask 257024
          %676 = vst.msk [vmem:[#allocation3] sm:$0xf] %vm675, %v674
          %677 = vst.msk [vmem:[#allocation4] sm:$0xff] %vm598, 0.0
        $region104: #{transformer_block.5} parent=59 // pred_fallthru
          _
        %v678 = vld [vmem:[#allocation3] sm:$0xf]
        %v679 = vld [vmem:[#allocation16] sm:$0xf]
        %v680 = vld [vmem:[#allocation16 + $0x4] sm:$0xf]
        %v681 = vld [vmem:[#allocation16 + $0x8] sm:$0xf]
        %v682 = vld [vmem:[#allocation16 + $0xc] sm:$0xf]
        %v683 = vld [vmem:[#allocation17] sm:$0x1]
        %v685 = vlaneseq
        %v686 = vshrl.u32 %v685, 7
        %v687 = vsub.s32 0, %v686
        %v688 = vrot.slane %v683, %v687
        %v694 = vunpack.c.l.b16 %v679
        %v695 = vunpack.c.l.b16 %v680
        %v696 = vunpack.c.l.b16 %v681
        %v697 = vunpack.c.l.b16 %v682
        %v698 = vpack.c.b16 %v695, %v694
        %v699 = vpack.c.b16 %v697, %v696
        %vm702 = vcmask 261120
        %v704 = vsel %vm702, %v678, 0
        %706 = vmatprep.subr.bf16.mxu0 0
        %707 = vmatpush1.bf16.msra.mxu0 %v698
        %708 = vmatprep.subr.bf16.mxu0 0
        %709 = vmatpush1.bf16.msra.mxu0 %v699
        %710 = vmatprep.subr.bf16.mxu0 0
        %711 = vmatpush1.bf16.msra.mxu0 0
        %712 = vmatprep.subr.bf16.mxu0 0
        %713 = vmatpush1.bf16.msra.mxu0 0
        %714 = vmatprep.subr.bf16.mxu0 0
        %715 = vmatpush1.bf16.msra.mxu0 0
        %716 = vmatprep.subr.bf16.mxu0 0
        %717 = vmatpush1.bf16.msra.mxu0 0
        %718 = vmatprep.subr.bf16.mxu0 0
        %719 = vmatpush1.bf16.msra.mxu0 0
        %720 = vmatprep.subr.bf16.mxu0 0
        %721 = vmatpush1.bf16.msra.mxu0 0
        %722 = vmatprep.subr.bf16.mxu0 0
        %723 = vmatpush1.bf16.msra.mxu0 0
        %724 = vmatprep.subr.bf16.mxu0 0
        %725 = vmatpush1.bf16.msra.mxu0 0
        %726 = vmatprep.subr.bf16.mxu0 0
        %727 = vmatpush1.bf16.msra.mxu0 0
        %728 = vmatprep.subr.bf16.mxu0 0
        %729 = vmatpush1.bf16.msra.mxu0 0
        %730 = vmatprep.subr.bf16.mxu0 0
        %731 = vmatpush1.bf16.msra.mxu0 0
        %732 = vmatprep.subr.bf16.mxu0 0
        %733 = vmatpush1.bf16.msra.mxu0 0
        %734 = vmatprep.subr.bf16.mxu0 0
        %735 = vmatpush1.bf16.msra.mxu0 0
        %736 = vmatprep.subr.bf16.mxu0 0
        %737 = vmatpush1.bf16.msra.mxu0 0
        %738 = vmatprep.mubr.bf16.mxu0 0
        %739 = vmatmul.mubr.bf16.gmra.mrb[0].mxu0 %v704
        %v740 = vpop.f32.mrb[0].mxu0
        %v741 = vadd.f32 %v688, %v740
        %v742 = vpop.f32.mrb[0].mxu0
        %v743 = vpop.f32.mrb[0].mxu0
        %v744 = vpop.f32.mrb[0].mxu0
        %745 = vdwg.mxu0
        %v746 = vmul.f32 %v741, 0.5
        %v747 = vmul.f32 %v741, 0.044715
        %v748 = vmul.f32 %v747, %v741
        %v749 = vmul.f32 %v748, %v741
        %v750 = vadd.f32 %v741, %v749
        %v751 = vmul.f32 %v750, 0.7978846
        %v752 = vtanh.pop %v751
        %v753 = vadd.f32 %v752, 1.0
        %v754 = vmul.f32 %v746, %v753
        %v755 = vpack.c.bf16 %v754, %v754
        %v756 = vld [vmem:[#allocation4] sm:$0xff]
        %v757 = vld [vmem:[#allocation19] sm:$0xf]
        %v758 = vld [vmem:[#allocation19 + $0x4] sm:$0xf]
        %v759 = vld [vmem:[#allocation19 + $0x8] sm:$0xf]
        %v760 = vld [vmem:[#allocation19 + $0xc] sm:$0xf]
        %v761 = vld [vmem:[#allocation19 + $0x10] sm:$0xf]
        %v762 = vld [vmem:[#allocation19 + $0x14] sm:$0xf]
        %v763 = vld [vmem:[#allocation19 + $0x18] sm:$0xf]
        %v764 = vld [vmem:[#allocation19 + $0x1c] sm:$0xf]
        %v765 = vld [vmem:[#allocation19 + $0x20] sm:$0xf]
        %v766 = vld [vmem:[#allocation19 + $0x24] sm:$0xf]
        %v767 = vld [vmem:[#allocation19 + $0x28] sm:$0xf]
        %v768 = vld [vmem:[#allocation19 + $0x2c] sm:$0xf]
        %v769 = vld [vmem:[#allocation19 + $0x30] sm:$0xf]
        %v770 = vld [vmem:[#allocation19 + $0x34] sm:$0xf]
        %v771 = vld [vmem:[#allocation19 + $0x38] sm:$0xf]
        %v772 = vld [vmem:[#allocation19 + $0x3c] sm:$0xf]
        %v789 = vunpack.c.l.b16 %v757
        %v790 = vunpack.c.l.b16 %v758
        %v791 = vunpack.c.l.b16 %v759
        %v792 = vunpack.c.l.b16 %v760
        %v793 = vunpack.c.l.b16 %v761
        %v794 = vunpack.c.l.b16 %v762
        %v795 = vunpack.c.l.b16 %v763
        %v796 = vunpack.c.l.b16 %v764
        %v797 = vunpack.c.l.b16 %v765
        %v798 = vunpack.c.l.b16 %v766
        %v799 = vunpack.c.l.b16 %v767
        %v800 = vunpack.c.l.b16 %v768
        %v801 = vunpack.c.l.b16 %v769
        %v802 = vunpack.c.l.b16 %v770
        %v803 = vunpack.c.l.b16 %v771
        %v804 = vunpack.c.l.b16 %v772
        %v805 = vpack.c.b16 %v790, %v789
        %v806 = vpack.c.b16 %v792, %v791
        %v807 = vpack.c.b16 %v794, %v793
        %v808 = vpack.c.b16 %v796, %v795
        %v809 = vpack.c.b16 %v798, %v797
        %v810 = vpack.c.b16 %v800, %v799
        %v811 = vpack.c.b16 %v802, %v801
        %v812 = vpack.c.b16 %v804, %v803
        %821 = vmatprep.subr.bf16.mxu0 0
        %822 = vmatpush1.bf16.msra.mxu0 %v805
        %823 = vmatprep.subr.bf16.mxu0 0
        %824 = vmatpush1.bf16.msra.mxu0 %v806
        %825 = vmatprep.subr.bf16.mxu0 0
        %826 = vmatpush1.bf16.msra.mxu0 %v807
        %827 = vmatprep.subr.bf16.mxu0 0
        %828 = vmatpush1.bf16.msra.mxu0 %v808
        %829 = vmatprep.subr.bf16.mxu0 0
        %830 = vmatpush1.bf16.msra.mxu0 %v809
        %831 = vmatprep.subr.bf16.mxu0 0
        %832 = vmatpush1.bf16.msra.mxu0 %v810
        %833 = vmatprep.subr.bf16.mxu0 0
        %834 = vmatpush1.bf16.msra.mxu0 %v811
        %835 = vmatprep.subr.bf16.mxu0 0
        %836 = vmatpush1.bf16.msra.mxu0 %v812
        %837 = vmatprep.subr.bf16.mxu0 0
        %838 = vmatpush1.bf16.msra.mxu0 0
        %839 = vmatprep.subr.bf16.mxu0 0
        %840 = vmatpush1.bf16.msra.mxu0 0
        %841 = vmatprep.subr.bf16.mxu0 0
        %842 = vmatpush1.bf16.msra.mxu0 0
        %843 = vmatprep.subr.bf16.mxu0 0
        %844 = vmatpush1.bf16.msra.mxu0 0
        %845 = vmatprep.subr.bf16.mxu0 0
        %846 = vmatpush1.bf16.msra.mxu0 0
        %847 = vmatprep.subr.bf16.mxu0 0
        %848 = vmatpush1.bf16.msra.mxu0 0
        %849 = vmatprep.subr.bf16.mxu0 0
        %850 = vmatpush1.bf16.msra.mxu0 0
        %851 = vmatprep.subr.bf16.mxu0 0
        %852 = vmatpush1.bf16.msra.mxu0 0
        %853 = vmatprep.mubr.bf16.mxu0 0
        %854 = vmatmul.mubr.bf16.gmra.mrb[0].mxu0 %v755
        %v855 = vpop.f32.mrb[0].mxu0
        %v856 = vadd.f32 0.0, %v855
        %v857 = vpop.f32.mrb[0].mxu0
        %v858 = vpop.f32.mrb[0].mxu0
        %v859 = vpop.f32.mrb[0].mxu0
        %860 = vdwg.mxu0
        %v861 = vadd.f32 %v756, %v856
        %862 = vst.msk [vmem:[#allocation4] sm:$0xff] %vm702, %v861
        // Predicated region
        $region105: #{transformer_block.5} parent=59 // pred_check
          %p863 = pneg %p569
        $region106: #{transformer_block.5} parent=59 // pred_check_branch
          %865 = sbr.rel (%p863) target = $region108
        $region107: #{transformer_block.5} parent=59 // pred_region
          %v866 = vld [vmem:[#allocation2] sm:$0xff]
          %v867 = vld [vmem:[#allocation4] sm:$0xff]
          %v868 = vadd.f32 %v866, %v867
          %v869 = vld [vmem:[#allocation20] sm:$0x1]
          %v871 = vlaneseq
          %v872 = vshrl.u32 %v871, 7
          %v873 = vsub.s32 0, %v872
          %v874 = vrot.slane %v869, %v873
          %v876 = vadd.f32 %v868, %v874
          %877 = vst.msk [vmem:[%s566] sm:$0xff] %vm702, %v876
        $region108: #{transformer_block.5} parent=59 // pred_fallthru
          _
        %s878 = sand.u32 %s302, 1
        %s879 = scalar_lea.sflag [#allocation7], %s878
        %s880 = sand.u32 %s302, 1
        %s881 = smul.addr %s880, 8
        %s882 = scalar_lea.vmem [#allocation22], %s881
        // Predicated region
        $region109: #{transformer_block.5} parent=59 // pred_check
          %p883 = pneg %p312
        $region110: #{transformer_block.5} parent=59 // pred_check_branch
          %885 = sbr.rel (%p883) target = $region112
        $region111: #{transformer_block.5} parent=59 // pred_region
          %s887 = ssub.s32 128, 128
          %888 = vsyncadd %s879, %s887
          %s889 = sadd.s32 %s40, %s39
          %s890 = smul.addr %s889, 128
          %s891 = scalar_lea.hbm %s10, %s890
          %s893 = sshll.u32 %s882, 4
          %s894 = int_to_ptr.vmem [resolvable:$true] %s893
          %896 = dma.vmem_to_hbm [thread:$0]  %s894, 128, %s891, %s879
        $region112: #{transformer_block.5} parent=59 // pred_fallthru
          _
      $region60: #{transformer_block.5} parent=5 // pred_fallthru
        _
      %p897 = scmp.le.s32.totalorder 2, %s29
      // Predicated region
      $region113: #{transformer_block.5} parent=5 // pred_check
        %p898 = pneg %p897
      $region114: #{transformer_block.5} parent=5 // pred_check_branch
        %900 = sbr.rel (%p898) target = $region116
      $region115: #{transformer_block.5} parent=5 // pred_region
        %s901 = ssub.s32 %s29, 2
        // Predicated region
        $region117: #{transformer_block.5} parent=115 // pred_check
          %p902 = pneg %p318
        $region118: #{transformer_block.5} parent=115 // pred_check_branch
          %904 = sbr.rel (%p902) target = $region120
        $region119: #{transformer_block.5} parent=115 // pred_region
          %s905 = sand.u32 %s303, 1
          %s906 = scalar_lea.sflag [#allocation7], %s905
          %s907 = sand.u32 %s303, 1
          %s908 = smul.addr %s907, 8
          %s909 = scalar_lea.vmem [#allocation22], %s908
          %910 = dma.done %s906, 128
        $region120: #{transformer_block.5} parent=115 // pred_fallthru
          _
      $region116: #{transformer_block.5} parent=5 // pred_fallthru
        _
    $region6: #{transformer_block.5} parent=1 // loop_footer
      %s33 = sadd.s32 1, %s29
    $region7: #{transformer_block.5} parent=1 // loop_footer_branch
      %28 = sbr.rel target = $region3
    $region8: #{transformer_block.5} parent=1 // loop_exit
      _
    %911 = vsyncpa [#allocation6], 1
    %s912 = scalar_lea.sflag [#allocation6], 1
    %913 = vsyncpa %s912, 1
    %914 = vsyncpa [#allocation9], 1
    %s915 = scalar_lea.sflag [#allocation9], 1
    %916 = vsyncpa %s915, 1
    %917 = vsyncpa [#allocation12], 1
    %918 = vsyncpa [#allocation15], 1
    %919 = vsyncpa [#allocation18], 1
    %920 = vsyncpa [#allocation21], 1
    %921 = vsyncpa [#allocation7], 1
    %s922 = scalar_lea.sflag [#allocation7], 1
    %923 = vsyncpa %s922, 1

// kernel: transformer_block.4
$region0: #{transformer_block.4}
  #allocation0 [shape = 'u32[]', space=smem, size = 0x4, offset = 0x4, fixed_abs, tag = 'smem constant byte address 0x4 - core index']
  #allocation1 [shape = 'u32[144,128]{1,0:T(1,128)}', space=vmem, size = 0x12000, scoped, tag = 'internal scratch']
  #allocation2 [shape = 'f32[4,8,1]{2,1,0:T(8,128)}', space=vmem, size = 0x4000, scoped, tag = 'scratch operand']
  #allocation3 [shape = 'f32[4,8,1]{2,1,0:T(8,128)}', space=vmem, size = 0x4000, scoped, tag = 'scratch operand']
  #allocation4 [shape = 'f32[4,8,8]{2,1,0:T(8,128)}', space=vmem, size = 0x4000, scoped, tag = 'scratch operand']
  %s0 = inlined_call_operand.hbm [shape: bf16[2,8,32], index: 0, kind: input, shape index: {}]
  %s1 = inlined_call_operand.hbm [shape: bf16[2,8,32], index: 1, kind: input, shape index: {}]
  %s2 = inlined_call_operand.hbm [shape: bf16[2,8,32], index: 2, kind: input, shape index: {}]
  %s3 = inlined_call_operand.hbm [shape: bf16[2,8,32], index: 3, kind: output, shape index: {}]
  %s4 = sld [smem:[#allocation0]]
  $region73: #{transformer_block.4} parent=0
    _
  %s6 = ssub.s32 1, %s4
  %s7 = scalar_select 0, %s6, %s4
  $region1: #{transformer_block.4} parent=0
    #allocation5 [shape = 'u8[4096]{0}', space=vmem, size = 0x1000, scoped, tag = 'input window, operand 0']
    #allocation6 [shape = 's32[2]{0}', space=sflag, size = 0x8, scoped, tag = 'scoped memory for transformer_block.4']
    #allocation7 [shape = 's32[2]{0}', space=sflag, size = 0x8, scoped, tag = 'scoped memory for transformer_block.4']
    #allocation8 [shape = 'u8[4096]{0}', space=vmem, size = 0x1000, scoped, tag = 'input window, operand 1']
    #allocation9 [shape = 's32[2]{0}', space=sflag, size = 0x8, scoped, tag = 'scoped memory for transformer_block.4']
    #allocation10 [shape = 'u8[4096]{0}', space=vmem, size = 0x1000, scoped, tag = 'input window, operand 2']
    #allocation11 [shape = 'u8[4096]{0}', space=vmem, size = 0x1000, scoped, tag = 'output window, operand 0']
    %8 = vsyncpa [#allocation6], 0
    %s9 = scalar_lea.sflag [#allocation6], 1
    %10 = vsyncpa %s9, 0
    %11 = vsyncpa [#allocation9], 0
    %s12 = scalar_lea.sflag [#allocation9], 1
    %13 = vsyncpa %s12, 0
    %14 = vsyncpa [#allocation7], 0
    %s15 = scalar_lea.sflag [#allocation7], 1
    %16 = vsyncpa %s15, 0
    loop: start=0, step=1, limit=4
    $region2: #{transformer_block.4} parent=1 // loop_pre_header
      _
    $region3: #{transformer_block.4} parent=1 // loop_header
      %s18 = sphi 0, %s22
      %p19 = scmp.ge.s32.totalorder %s18, 4
      %s25 = sphi 0, %s44
      %s26 = sphi 0, %s40
      %s27 = sphi 0, %s36
      %s28 = sphi 0, %s25
      %s29 = sphi 0, %s26
      %s30 = sphi 0, %s27
      %s31 = sphi 0, %s28
      %s32 = sphi 0, %s29
      %s33 = sphi 0, %s30
      %s49 = sphi 0, %s51
      %s52 = sphi 0, %s49
      %s53 = sphi 0, %s52
      %s69 = sphi 0, %s53
      %s81 = sphi 0, %s83
      %s84 = sphi 0, %s81
      %s85 = sphi 0, %s84
      %s101 = sphi 0, %s85
      %s113 = sphi 0, %s115
      %s116 = sphi 0, %s113
      %s117 = sphi 0, %s116
      %s133 = sphi 0, %s117
      %s141 = sphi 0, %s143
      %s144 = sphi 0, %s141
      %s145 = sphi 0, %s144
      %s161 = sphi 0, %s145
    $region4: #{transformer_block.4} parent=1 // loop_header_branch
      %21 = sbr.rel (%p19) target = $region8
    $region5: #{transformer_block.4} parent=1 // loop_body
      %s23 = ssub.s32 %s18, 1
      %s24 = ssub.s32 %s18, 2
      %s34 = sadd.s32 1, %s27
      %p35 = scmp.ge.s32.totalorder %s34, 1
      %s36 = scalar_select %p35, 0, %s34
      %s37 = sadd.s32 1, %s26
      %s38 = scalar_select %p35, %s37, %s26
      %p39 = scmp.ge.s32.totalorder %s38, 1
      %s40 = scalar_select %p39, 0, %s38
      %s41 = sadd.s32 1, %s25
      %s42 = scalar_select %p39, %s41, %s25
      %p43 = scmp.ge.s32.totalorder %s42, 2
      %s44 = scalar_select %p43, 0, %s42
      %s45 = ssub.s32 %s25, %s44
      %s46 = ssub.s32 %s26, %s40
      %s47 = sor.u32 %s45, %s46
      %p48 = scmp.eq.s32.totalorder %s47, 0
      %s50 = sadd.s32 %s49, 1
      %s51 = scalar_select %p48, %s49, %s50
      %p54 = pneg %p48
      %p55 = scmp.eq.s32.totalorder %s18, 1
      %p56 = por %p54, %p55
      %p57 = scmp.ne.s32.totalorder %s49, %s52
      %p58 = scmp.eq.s32.totalorder %s18, 0
      %p59 = por %p57, %p58
      %p60 = scmp.ne.s32.totalorder %s49, %s52
      %p61 = scmp.eq.s32.totalorder %s23, 1
      %p62 = por %p60, %p61
      %p63 = scmp.ne.s32.totalorder %s52, %s53
      %p64 = scmp.eq.s32.totalorder %s23, 0
      %p65 = por %p63, %p64
      %p66 = scmp.ne.s32.totalorder %s52, %s53
      %p67 = scmp.eq.s32.totalorder %s24, 1
      %p68 = por %p66, %p67
      %p70 = scmp.ne.s32.totalorder %s53, %s69
      %p71 = scmp.eq.s32.totalorder %s24, 0
      %p72 = por %p70, %p71
      %p73 = scmp.lt.s32.totalorder %s27, %s26
      %s74 = scalar_select %p73, %s27, %s26
      %p75 = scmp.lt.s32.totalorder %s36, %s40
      %s76 = scalar_select %p75, %s36, %s40
      %s77 = ssub.s32 %s25, %s44
      %s78 = ssub.s32 %s74, %s76
      %s79 = sor.u32 %s77, %s78
      %p80 = scmp.eq.s32.totalorder %s79, 0
      %s82 = sadd.s32 %s81, 1
      %s83 = scalar_select %p80, %s81, %s82
      %p86 = pneg %p80
      %p87 = scmp.eq.s32.totalorder %s18, 1
      %p88 = por %p86, %p87
      %p89 = scmp.ne.s32.totalorder %s81, %s84
      %p90 = scmp.eq.s32.totalorder %s18, 0
      %p91 = por %p89, %p90
      %p92 = scmp.ne.s32.totalorder %s81, %s84
      %p93 = scmp.eq.s32.totalorder %s23, 1
      %p94 = por %p92, %p93
      %p95 = scmp.ne.s32.totalorder %s84, %s85
      %p96 = scmp.eq.s32.totalorder %s23, 0
      %p97 = por %p95, %p96
      %p98 = scmp.ne.s32.totalorder %s84, %s85
      %p99 = scmp.eq.s32.totalorder %s24, 1
      %p100 = por %p98, %p99
      %p102 = scmp.ne.s32.totalorder %s85, %s101
      %p103 = scmp.eq.s32.totalorder %s24, 0
      %p104 = por %p102, %p103
      %p105 = scmp.lt.s32.totalorder %s27, %s26
      %s106 = scalar_select %p105, %s27, %s26
      %p107 = scmp.lt.s32.totalorder %s36, %s40
      %s108 = scalar_select %p107, %s36, %s40
      %s109 = ssub.s32 %s25, %s44
      %s110 = ssub.s32 %s106, %s108
      %s111 = sor.u32 %s109, %s110
      %p112 = scmp.eq.s32.totalorder %s111, 0
      %s114 = sadd.s32 %s113, 1
      %s115 = scalar_select %p112, %s113, %s114
      %p118 = pneg %p112
      %p119 = scmp.eq.s32.totalorder %s18, 1
      %p120 = por %p118, %p119
      %p121 = scmp.ne.s32.totalorder %s113, %s116
      %p122 = scmp.eq.s32.totalorder %s18, 0
      %p123 = por %p121, %p122
      %p124 = scmp.ne.s32.totalorder %s113, %s116
      %p125 = scmp.eq.s32.totalorder %s23, 1
      %p126 = por %p124, %p125
      %p127 = scmp.ne.s32.totalorder %s116, %s117
      %p128 = scmp.eq.s32.totalorder %s23, 0
      %p129 = por %p127, %p128
      %p130 = scmp.ne.s32.totalorder %s116, %s117
      %p131 = scmp.eq.s32.totalorder %s24, 1
      %p132 = por %p130, %p131
      %p134 = scmp.ne.s32.totalorder %s117, %s133
      %p135 = scmp.eq.s32.totalorder %s24, 0
      %p136 = por %p134, %p135
      %s137 = ssub.s32 %s25, %s44
      %s138 = ssub.s32 %s26, %s40
      %s139 = sor.u32 %s137, %s138
      %p140 = scmp.eq.s32.totalorder %s139, 0
      %s142 = sadd.s32 %s141, 1
      %s143 = scalar_select %p140, %s141, %s142
      %p146 = pneg %p140
      %p147 = scmp.eq.s32.totalorder %s18, 1
      %p148 = por %p146, %p147
      %p149 = scmp.ne.s32.totalorder %s141, %s144
      %p150 = scmp.eq.s32.totalorder %s18, 0
      %p151 = por %p149, %p150
      %p152 = scmp.ne.s32.totalorder %s141, %s144
      %p153 = scmp.eq.s32.totalorder %s23, 1
      %p154 = por %p152, %p153
      %p155 = scmp.ne.s32.totalorder %s144, %s145
      %p156 = scmp.eq.s32.totalorder %s23, 0
      %p157 = por %p155, %p156
      %p158 = scmp.ne.s32.totalorder %s144, %s145
      %p159 = scmp.eq.s32.totalorder %s24, 1
      %p160 = por %p158, %p159
      %p162 = scmp.ne.s32.totalorder %s145, %s161
      %p163 = scmp.eq.s32.totalorder %s24, 0
      %p164 = por %p162, %p163
      %p165 = scmp.le.s32.totalorder 1, %s18
      %p166 = scmp.lt.s32.totalorder %s18, 3
      %p167 = pnand %p165, %p166
      %p168 = pneg %p167
      // Predicated region
      $region9: #{transformer_block.4} parent=5 // pred_check
        _
      $region10: #{transformer_block.4} parent=5 // pred_check_branch
        %170 = sbr.rel (%p167) target = $region12
      $region11: #{transformer_block.4} parent=5 // pred_region
        %s171 = ssub.s32 %s18, 1
      $region12: #{transformer_block.4} parent=5 // pred_fallthru
        _
      %p172 = scmp.lt.s32.totalorder %s18, 2
      // Predicated region
      $region13: #{transformer_block.4} parent=5 // pred_check
        %p173 = pneg %p172
      $region14: #{transformer_block.4} parent=5 // pred_check_branch
        %175 = sbr.rel (%p173) target = $region16
      $region15: #{transformer_block.4} parent=5 // pred_region
        // Predicated region
        $region17: #{transformer_block.4} parent=15 // pred_check
          %p176 = pneg %p59
        $region18: #{transformer_block.4} parent=15 // pred_check_branch
          %178 = sbr.rel (%p176) target = $region20
        $region19: #{transformer_block.4} parent=15 // pred_region
          %s179 = sand.u32 %s49, 1
          %s180 = scalar_lea.sflag [#allocation6], %s179
          %s181 = sand.u32 %s49, 1
          %s182 = smul.addr %s181, 4
          %s183 = scalar_lea.vmem [#allocation5], %s182
          %s185 = ssub.s32 64, 64
          %186 = vsyncadd %s180, %s185
          %s187 = sadd.s32 %s26, %s25
          %s188 = smul.addr %s187, 64
          %s189 = scalar_lea.hbm %s0, %s188
          %s191 = sshll.u32 %s183, 4
          %s192 = int_to_ptr.vmem [resolvable:$true] %s191
          %194 = dma.hbm_to_vmem [thread:$0]  %s189, 64, %s192, %s180
        $region20: #{transformer_block.4} parent=15 // pred_fallthru
          _
        // Predicated region
        $region21: #{transformer_block.4} parent=15 // pred_check
          %p195 = pneg %p91
        $region22: #{transformer_block.4} parent=15 // pred_check_branch
          %197 = sbr.rel (%p195) target = $region24
        $region23: #{transformer_block.4} parent=15 // pred_region
          %s198 = sand.u32 %s18, 1
          %s199 = scalar_lea.sflag [#allocation9], %s198
          %s200 = sand.u32 %s81, 1
          %s201 = smul.addr %s200, 4
          %s202 = scalar_lea.vmem [#allocation8], %s201
          %p203 = scmp.lt.s32.totalorder %s27, %s26
          %s204 = scalar_select %p203, %s27, %s26
          %s206 = ssub.s32 64, 64
          %207 = vsyncadd %s199, %s206
          %s208 = sadd.s32 %s204, %s25
          %s209 = smul.addr %s208, 64
          %s210 = scalar_lea.hbm %s1, %s209
          %s212 = sshll.u32 %s202, 4
          %s213 = int_to_ptr.vmem [resolvable:$true] %s212
          %215 = dma.hbm_to_vmem [thread:$0]  %s210, 64, %s213, %s199
        $region24: #{transformer_block.4} parent=15 // pred_fallthru
          _
        // Predicated region
        $region25: #{transformer_block.4} parent=15 // pred_check
          %p216 = pneg %p123
        $region26: #{transformer_block.4} parent=15 // pred_check_branch
          %218 = sbr.rel (%p216) target = $region28
        $region27: #{transformer_block.4} parent=15 // pred_region
          %s219 = sand.u32 %s18, 1
          %s220 = scalar_lea.sflag [#allocation9], %s219
          %s221 = sand.u32 %s113, 1
          %s222 = smul.addr %s221, 4
          %s223 = scalar_lea.vmem [#allocation10], %s222
          %p224 = scmp.lt.s32.totalorder %s27, %s26
          %s225 = scalar_select %p224, %s27, %s26
          %s227 = ssub.s32 64, 64
          %228 = vsyncadd %s220, %s227
          %s229 = sadd.s32 %s225, %s25
          %s230 = smul.addr %s229, 64
          %s231 = scalar_lea.hbm %s2, %s230
          %s233 = sshll.u32 %s223, 4
          %s234 = int_to_ptr.vmem [resolvable:$true] %s233
          %236 = dma.hbm_to_vmem [thread:$0]  %s231, 64, %s234, %s220
        $region28: #{transformer_block.4} parent=15 // pred_fallthru
          _
      $region16: #{transformer_block.4} parent=5 // pred_fallthru
        _
      %p237 = scmp.le.s32.totalorder 1, %s18
      %p238 = scmp.lt.s32.totalorder %s18, 3
      %p239 = pnand %p237, %p238
      %p240 = pneg %p239
      // Predicated region
      $region29: #{transformer_block.4} parent=5 // pred_check
        _
      $region30: #{transformer_block.4} parent=5 // pred_check_branch
        %242 = sbr.rel (%p239) target = $region32
      $region31: #{transformer_block.4} parent=5 // pred_region
        %s243 = ssub.s32 %s18, 1
        %s244 = sand.u32 %s52, 1
        %s245 = scalar_lea.sflag [#allocation6], %s244
        %s246 = sand.u32 %s52, 1
        %s247 = smul.addr %s246, 4
        %s248 = scalar_lea.vmem [#allocation5], %s247
        // Predicated region
        $region33: #{transformer_block.4} parent=31 // pred_check
          %p249 = pneg %p65
        $region34: #{transformer_block.4} parent=31 // pred_check_branch
          %251 = sbr.rel (%p249) target = $region36
        $region35: #{transformer_block.4} parent=31 // pred_region
          %252 = dma.done %s245, 64
        $region36: #{transformer_block.4} parent=31 // pred_fallthru
          _
        %s253 = sand.u32 %s23, 1
        %s254 = scalar_lea.sflag [#allocation9], %s253
        %s255 = sand.u32 %s84, 1
        %s256 = smul.addr %s255, 4
        %s257 = scalar_lea.vmem [#allocation8], %s256
        // Predicated region
        $region37: #{transformer_block.4} parent=31 // pred_check
          %p258 = pneg %p97
        $region38: #{transformer_block.4} parent=31 // pred_check_branch
          %260 = sbr.rel (%p258) target = $region40
        $region39: #{transformer_block.4} parent=31 // pred_region
          %261 = dma.done %s254, 64
        $region40: #{transformer_block.4} parent=31 // pred_fallthru
          _
        %s262 = sand.u32 %s23, 1
        %s263 = scalar_lea.sflag [#allocation9], %s262
        %s264 = sand.u32 %s116, 1
        %s265 = smul.addr %s264, 4
        %s266 = scalar_lea.vmem [#allocation10], %s265
        // Predicated region
        $region41: #{transformer_block.4} parent=31 // pred_check
          %p267 = pneg %p129
        $region42: #{transformer_block.4} parent=31 // pred_check_branch
          %269 = sbr.rel (%p267) target = $region44
        $region43: #{transformer_block.4} parent=31 // pred_region
          %270 = dma.done %s263, 64
        $region44: #{transformer_block.4} parent=31 // pred_fallthru
          _
        %s271 = sand.u32 %s52, 1
        %s272 = scalar_lea.sflag [#allocation6], %s271
        %s273 = sand.u32 %s52, 1
        %s274 = smul.addr %s273, 4
        %s275 = scalar_lea.vmem [#allocation5], %s274
        %p276 = pneg %p65
        %p277 = pneg %p62
        %s278 = sand.u32 %s23, 1
        %s279 = scalar_lea.sflag [#allocation9], %s278
        %s280 = sand.u32 %s84, 1
        %s281 = smul.addr %s280, 4
        %s282 = scalar_lea.vmem [#allocation8], %s281
        %p283 = pneg %p97
        %p284 = pneg %p94
        %s285 = sand.u32 %s23, 1
        %s286 = scalar_lea.sflag [#allocation9], %s285
        %s287 = sand.u32 %s116, 1
        %s288 = smul.addr %s287, 4
        %s289 = scalar_lea.vmem [#allocation10], %s288
        %p290 = pneg %p129
        %p291 = pneg %p126
        %p292 = pneg %p157
        %p293 = pneg %p154
        %s294 = sand.u32 %s144, 1
        %s295 = scalar_lea.sflag [#allocation7], %s294
        %s296 = sand.u32 %s144, 1
        %s297 = smul.addr %s296, 4
        %s298 = scalar_lea.vmem [#allocation11], %s297
        %p299 = scmp.lt.s32.totalorder %s30, %s29
        %s300 = scalar_select %p299, %s30, %s29
        %p301 = scmp.lt.s32.totalorder %s30, %s29
        %s302 = scalar_select %p301, %s30, %s29
        %s304 = smul.u32 %s29, 8
        %s305 = sadd.s32 %s304, 7
        %s306 = smul.u32 %s30, 8
        %s307 = sadd.s32 %s306, 7
        %p308 = scmp.le.s32.totalorder %s306, %s305
        %p309 = scmp.gt.s32.totalorder %s307, %s304
        %p310 = scmp.eq.s32.totalorder %s30, 0
        // Predicated region
        $region45: #{transformer_block.4} parent=31 // pred_check
          %p311 = pneg %p310
        $region46: #{transformer_block.4} parent=31 // pred_check_branch
          %313 = sbr.rel (%p311) target = $region48
        $region47: #{transformer_block.4} parent=31 // pred_region
          %vm314 = vcmask 7168
          %315 = vst.msk [vmem:[#allocation2] sm:$0xff] %vm314, -1e+30
          %316 = vst.msk [vmem:[#allocation2 + $0x8] sm:$0xff] %vm314, -1e+30
          %317 = vst.msk [vmem:[#allocation2 + $0x10] sm:$0xff] %vm314, -1e+30
          %318 = vst.msk [vmem:[#allocation2 + $0x18] sm:$0xff] %vm314, -1e+30
          %319 = vst.msk [vmem:[#allocation3] sm:$0xff] %vm314, 0.0
          %320 = vst.msk [vmem:[#allocation3 + $0x8] sm:$0xff] %vm314, 0.0
          %321 = vst.msk [vmem:[#allocation3 + $0x10] sm:$0xff] %vm314, 0.0
          %322 = vst.msk [vmem:[#allocation3 + $0x18] sm:$0xff] %vm314, 0.0
          %vm323 = vcmask 64512
          %324 = vst.msk [vmem:[#allocation4] sm:$0xff] %vm323, 0.0
          %325 = vst.msk [vmem:[#allocation4 + $0x8] sm:$0xff] %vm323, 0.0
          %326 = vst.msk [vmem:[#allocation4 + $0x10] sm:$0xff] %vm323, 0.0
          %327 = vst.msk [vmem:[#allocation4 + $0x18] sm:$0xff] %vm323, 0.0
        $region48: #{transformer_block.4} parent=31 // pred_fallthru
          _
        %p328 = scmp.le.s32.totalorder %s307, %s304
        %p329 = pnand %p308, %p328
        %p330 = pneg %p329
        // Predicated region
        $region49: #{transformer_block.4} parent=31 // pred_check
          _
        $region50: #{transformer_block.4} parent=31 // pred_check_branch
          %332 = sbr.rel (%p329) target = $region52
        $region51: #{transformer_block.4} parent=31 // pred_region
          %v333 = vld [vmem:[%s248] sm:$0xf]
          %v334 = vld [vmem:[%s257] sm:$0xf]
          %v335 = vld [vmem:[%s266] sm:$0xf]
          %vm336 = vcmask 64512
          %v338 = vsel %vm336, %v333, 0
          %v341 = vsel %vm336, %v334, 0
          %343 = vmatprep.subr.bf16.mxu0 0
          %344 = vmatpush1.bf16.xpose.msra.mxu0 %v341
          %345 = vmatprep.subr.bf16.mxu0 0
          %346 = vmatpush1.bf16.xpose.msra.mxu0 0
          %347 = vmatprep.subr.bf16.mxu0 0
          %348 = vmatpush1.bf16.xpose.msra.mxu0 0
          %349 = vmatprep.subr.bf16.mxu0 0
          %350 = vmatpush1.bf16.xpose.msra.mxu0 0
          %351 = vmatprep.subr.bf16.mxu0 0
          %352 = vmatpush1.bf16.xpose.msra.mxu0 0
          %353 = vmatprep.subr.bf16.mxu0 0
          %354 = vmatpush1.bf16.xpose.msra.mxu0 0
          %355 = vmatprep.subr.bf16.mxu0 0
          %356 = vmatpush1.bf16.xpose.msra.mxu0 0
          %357 = vmatprep.subr.bf16.mxu0 0
          %358 = vmatpush1.bf16.xpose.msra.mxu0 0
          %359 = vmatprep.subr.bf16.mxu0 0
          %360 = vmatpush1.bf16.xpose.msra.mxu0 0
          %361 = vmatprep.subr.bf16.mxu0 0
          %362 = vmatpush1.bf16.xpose.msra.mxu0 0
          %363 = vmatprep.subr.bf16.mxu0 0
          %364 = vmatpush1.bf16.xpose.msra.mxu0 0
          %365 = vmatprep.subr.bf16.mxu0 0
          %366 = vmatpush1.bf16.xpose.msra.mxu0 0
          %367 = vmatprep.subr.bf16.mxu0 0
          %368 = vmatpush1.bf16.xpose.msra.mxu0 0
          %369 = vmatprep.subr.bf16.mxu0 0
          %370 = vmatpush1.bf16.xpose.msra.mxu0 0
          %371 = vmatprep.subr.bf16.mxu0 0
          %372 = vmatpush1.bf16.xpose.msra.mxu0 0
          %373 = vmatprep.subr.bf16.mxu0 0
          %374 = vmatpush1.bf16.xpose.msra.mxu0 0
          %375 = vmatprep.mubr.bf16.mxu0 0
          %376 = vmatmul.mubr.bf16.gmra.mrb[0].mxu0 %v338
          %v377 = vpop.f32.mrb[0].mxu0
          %v378 = vadd.f32 0.0, %v377
          %v379 = vpop.f32.mrb[0].mxu0
          %v380 = vpop.f32.mrb[0].mxu0
          %v381 = vpop.f32.mrb[0].mxu0
          %382 = vdwg.mxu0
          %v383 = vld [vmem:[#allocation2] sm:$0xff]
          %v384 = vsel %vm336, %v378, -inf
          %385 = vmax.xlane.f32.xlu0 %v384
          %v386 = vpop.xlane.xlu0 %385
          %v387 = vmax.f32 %v383, %v386
          %v388 = vsub.f32 %v383, %v387
          %v389 = vmul.f32 %v388, 1.442695
          %v390 = vpow.pop %v389
          %392 = vset.pattern.permute.xlu0 0
          %393 = vperm.xlu0 %392, %v387
          %v394 = vpop.permute.xlu0 %393
          %v396 = vsub.f32 %v378, %v394
          %v397 = vmul.f32 %v396, 1.442695
          %v398 = vpow.pop %v397
          %v399 = vld [vmem:[#allocation3] sm:$0xff]
          %v400 = vmul.f32 %v390, %v399
          %v401 = vsel %vm336, %v398, 0.0
          %402 = vadd.xlane.f32.xlu0 %v401
          %v403 = vpop.xlane.xlu0 %402
          %v404 = vadd.f32 %v400, %v403
          %vm405 = vcmask 7168
          %406 = vst.msk [vmem:[#allocation3] sm:$0xff] %vm405, %v404
          %v407 = vld [vmem:[#allocation4] sm:$0xff]
          %409 = vset.pattern.permute.xlu0 0
          %410 = vperm.xlu0 %409, %v390
          %v411 = vpop.permute.xlu0 %410
          %v413 = vmul.f32 %v411, %v407
          %v414 = vpack.c.bf16 %v398, %v398
          %v416 = vsel %vm336, %v414, 0
          %vm418 = vcmask 1043456
          %v420 = vsel %vm418, %v335, 0
          %422 = vmatprep.subr.bf16.mxu0 0
          %423 = vmatpush1.bf16.msra.mxu0 %v420
          %424 = vmatprep.subr.bf16.mxu0 0
          %425 = vmatpush1.bf16.msra.mxu0 0
          %426 = vmatprep.subr.bf16.mxu0 0
          %427 = vmatpush1.bf16.msra.mxu0 0
          %428 = vmatprep.subr.bf16.mxu0 0
          %429 = vmatpush1.bf16.msra.mxu0 0
          %430 = vmatprep.subr.bf16.mxu0 0
          %431 = vmatpush1.bf16.msra.mxu0 0
          %432 = vmatprep.subr.bf16.mxu0 0
          %433 = vmatpush1.bf16.msra.mxu0 0
          %434 = vmatprep.subr.bf16.mxu0 0
          %435 = vmatpush1.bf16.msra.mxu0 0
          %436 = vmatprep.subr.bf16.mxu0 0
          %437 = vmatpush1.bf16.msra.mxu0 0
          %438 = vmatprep.subr.bf16.mxu0 0
          %439 = vmatpush1.bf16.msra.mxu0 0
          %440 = vmatprep.subr.bf16.mxu0 0
          %441 = vmatpush1.bf16.msra.mxu0 0
          %442 = vmatprep.subr.bf16.mxu0 0
          %443 = vmatpush1.bf16.msra.mxu0 0
          %444 = vmatprep.subr.bf16.mxu0 0
          %445 = vmatpush1.bf16.msra.mxu0 0
          %446 = vmatprep.subr.bf16.mxu0 0
          %447 = vmatpush1.bf16.msra.mxu0 0
          %448 = vmatprep.subr.bf16.mxu0 0
          %449 = vmatpush1.bf16.msra.mxu0 0
          %450 = vmatprep.subr.bf16.mxu0 0
          %451 = vmatpush1.bf16.msra.mxu0 0
          %452 = vmatprep.subr.bf16.mxu0 0
          %453 = vmatpush1.bf16.msra.mxu0 0
          %454 = vmatprep.mubr.bf16.mxu0 0
          %455 = vmatmul.mubr.bf16.gmra.mrb[0].mxu0 %v416
          %v456 = vpop.f32.mrb[0].mxu0
          %v457 = vadd.f32 0.0, %v456
          %v458 = vpop.f32.mrb[0].mxu0
          %v459 = vpop.f32.mrb[0].mxu0
          %v460 = vpop.f32.mrb[0].mxu0
          %461 = vdwg.mxu0
          %v462 = vadd.f32 %v413, %v457
          %463 = vst.msk [vmem:[#allocation4] sm:$0xff] %vm336, %v462
          %464 = vst.msk [vmem:[#allocation2] sm:$0xff] %vm405, %v387
          %v466 = vunpack.c.l.b16 %v333
          %v467 = vpack.c.b16 %v466, %v466
          %468 = vrot.lane.b32.xlu0 %v467, 120
          %v469 = vpop.permute.xlu0 %468
          %v471 = vunpack.c.l.b16 %v334
          %v472 = vpack.c.b16 %v471, %v471
          %473 = vrot.lane.b32.xlu0 %v472, 120
          %v474 = vpop.permute.xlu0 %473
          %v476 = vsel %vm336, %v469, 0
          %v479 = vsel %vm336, %v474, 0
          %481 = vmatprep.subr.bf16.mxu0 0
          %482 = vmatpush1.bf16.xpose.msra.mxu0 %v479
          %483 = vmatprep.subr.bf16.mxu0 0
          %484 = vmatpush1.bf16.xpose.msra.mxu0 0
          %485 = vmatprep.subr.bf16.mxu0 0
          %486 = vmatpush1.bf16.xpose.msra.mxu0 0
          %487 = vmatprep.subr.bf16.mxu0 0
          %488 = vmatpush1.bf16.xpose.msra.mxu0 0
          %489 = vmatprep.subr.bf16.mxu0 0
          %490 = vmatpush1.bf16.xpose.msra.mxu0 0
          %491 = vmatprep.subr.bf16.mxu0 0
          %492 = vmatpush1.bf16.xpose.msra.mxu0 0
          %493 = vmatprep.subr.bf16.mxu0 0
          %494 = vmatpush1.bf16.xpose.msra.mxu0 0
          %495 = vmatprep.subr.bf16.mxu0 0
          %496 = vmatpush1.bf16.xpose.msra.mxu0 0
          %497 = vmatprep.subr.bf16.mxu0 0
          %498 = vmatpush1.bf16.xpose.msra.mxu0 0
          %499 = vmatprep.subr.bf16.mxu0 0
          %500 = vmatpush1.bf16.xpose.msra.mxu0 0
          %501 = vmatprep.subr.bf16.mxu0 0
          %502 = vmatpush1.bf16.xpose.msra.mxu0 0
          %503 = vmatprep.subr.bf16.mxu0 0
          %504 = vmatpush1.bf16.xpose.msra.mxu0 0
          %505 = vmatprep.subr.bf16.mxu0 0
          %506 = vmatpush1.bf16.xpose.msra.mxu0 0
          %507 = vmatprep.subr.bf16.mxu0 0
          %508 = vmatpush1.bf16.xpose.msra.mxu0 0
          %509 = vmatprep.subr.bf16.mxu0 0
          %510 = vmatpush1.bf16.xpose.msra.mxu0 0
          %511 = vmatprep.subr.bf16.mxu0 0
          %512 = vmatpush1.bf16.xpose.msra.mxu0 0
          %513 = vmatprep.mubr.bf16.mxu0 0
          %514 = vmatmul.mubr.bf16.gmra.mrb[0].mxu0 %v476
          %v515 = vpop.f32.mrb[0].mxu0
          %v516 = vadd.f32 0.0, %v515
          %v517 = vpop.f32.mrb[0].mxu0
          %v518 = vpop.f32.mrb[0].mxu0
          %v519 = vpop.f32.mrb[0].mxu0
          %520 = vdwg.mxu0
          %s521 = scalar_lea.vmem [#allocation2], 8
          %v522 = vld [vmem:[%s521] sm:$0xff]
          %v523 = vsel %vm336, %v516, -inf
          %524 = vmax.xlane.f32.xlu0 %v523
          %v525 = vpop.xlane.xlu0 %524
          %v526 = vmax.f32 %v522, %v525
          %v527 = vsub.f32 %v522, %v526
          %v528 = vmul.f32 %v527, 1.442695
          %v529 = vpow.pop %v528
          %531 = vset.pattern.permute.xlu0 0
          %532 = vperm.xlu0 %531, %v526
          %v533 = vpop.permute.xlu0 %532
          %v535 = vsub.f32 %v516, %v533
          %v536 = vmul.f32 %v535, 1.442695
          %v537 = vpow.pop %v536
          %s538 = scalar_lea.vmem [#allocation3], 8
          %v539 = vld [vmem:[%s538] sm:$0xff]
          %v540 = vmul.f32 %v529, %v539
          %v541 = vsel %vm336, %v537, 0.0
          %542 = vadd.xlane.f32.xlu0 %v541
          %v543 = vpop.xlane.xlu0 %542
          %v544 = vadd.f32 %v540, %v543
          %545 = vst.msk [vmem:[%s538] sm:$0xff] %vm405, %v544
          %s546 = scalar_lea.vmem [#allocation4], 8
          %v547 = vld [vmem:[%s546] sm:$0xff]
          %549 = vset.pattern.permute.xlu0 0
          %550 = vperm.xlu0 %549, %v529
          %v551 = vpop.permute.xlu0 %550
          %v553 = vmul.f32 %v551, %v547
          %v554 = vpack.c.bf16 %v537, %v537
          %v556 = vunpack.c.l.b16 %v335
          %v557 = vpack.c.b16 %v556, %v556
          %558 = vrot.lane.b32.xlu0 %v557, 120
          %v559 = vpop.permute.xlu0 %558
          %v561 = vsel %vm336, %v554, 0
          %v564 = vsel %vm418, %v559, 0
          %566 = vmatprep.subr.bf16.mxu0 0
          %567 = vmatpush1.bf16.msra.mxu0 %v564
          %568 = vmatprep.subr.bf16.mxu0 0
          %569 = vmatpush1.bf16.msra.mxu0 0
          %570 = vmatprep.subr.bf16.mxu0 0
          %571 = vmatpush1.bf16.msra.mxu0 0
          %572 = vmatprep.subr.bf16.mxu0 0
          %573 = vmatpush1.bf16.msra.mxu0 0
          %574 = vmatprep.subr.bf16.mxu0 0
          %575 = vmatpush1.bf16.msra.mxu0 0
          %576 = vmatprep.subr.bf16.mxu0 0
          %577 = vmatpush1.bf16.msra.mxu0 0
          %578 = vmatprep.subr.bf16.mxu0 0
          %579 = vmatpush1.bf16.msra.mxu0 0
          %580 = vmatprep.subr.bf16.mxu0 0
          %581 = vmatpush1.bf16.msra.mxu0 0
          %582 = vmatprep.subr.bf16.mxu0 0
          %583 = vmatpush1.bf16.msra.mxu0 0
          %584 = vmatprep.subr.bf16.mxu0 0
          %585 = vmatpush1.bf16.msra.mxu0 0
          %586 = vmatprep.subr.bf16.mxu0 0
          %587 = vmatpush1.bf16.msra.mxu0 0
          %588 = vmatprep.subr.bf16.mxu0 0
          %589 = vmatpush1.bf16.msra.mxu0 0
          %590 = vmatprep.subr.bf16.mxu0 0
          %591 = vmatpush1.bf16.msra.mxu0 0
          %592 = vmatprep.subr.bf16.mxu0 0
          %593 = vmatpush1.bf16.msra.mxu0 0
          %594 = vmatprep.subr.bf16.mxu0 0
          %595 = vmatpush1.bf16.msra.mxu0 0
          %596 = vmatprep.subr.bf16.mxu0 0
          %597 = vmatpush1.bf16.msra.mxu0 0
          %598 = vmatprep.mubr.bf16.mxu0 0
          %599 = vmatmul.mubr.bf16.gmra.mrb[0].mxu0 %v561
          %v600 = vpop.f32.mrb[0].mxu0
          %v601 = vadd.f32 0.0, %v600
          %v602 = vpop.f32.mrb[0].mxu0
          %v603 = vpop.f32.mrb[0].mxu0
          %v604 = vpop.f32.mrb[0].mxu0
          %605 = vdwg.mxu0
          %v606 = vadd.f32 %v553, %v601
          %607 = vst.msk [vmem:[%s546] sm:$0xff] %vm336, %v606
          %608 = vst.msk [vmem:[%s521] sm:$0xff] %vm405, %v526
          %609 = vrot.lane.b32.xlu0 %v467, 112
          %v610 = vpop.permute.xlu0 %609
          %611 = vrot.lane.b32.xlu0 %v472, 112
          %v612 = vpop.permute.xlu0 %611
          %v614 = vsel %vm336, %v610, 0
          %v617 = vsel %vm336, %v612, 0
          %619 = vmatprep.subr.bf16.mxu0 0
          %620 = vmatpush1.bf16.xpose.msra.mxu0 %v617
          %621 = vmatprep.subr.bf16.mxu0 0
          %622 = vmatpush1.bf16.xpose.msra.mxu0 0
          %623 = vmatprep.subr.bf16.mxu0 0
          %624 = vmatpush1.bf16.xpose.msra.mxu0 0
          %625 = vmatprep.subr.bf16.mxu0 0
          %626 = vmatpush1.bf16.xpose.msra.mxu0 0
          %627 = vmatprep.subr.bf16.mxu0 0
          %628 = vmatpush1.bf16.xpose.msra.mxu0 0
          %629 = vmatprep.subr.bf16.mxu0 0
          %630 = vmatpush1.bf16.xpose.msra.mxu0 0
          %631 = vmatprep.subr.bf16.mxu0 0
          %632 = vmatpush1.bf16.xpose.msra.mxu0 0
          %633 = vmatprep.subr.bf16.mxu0 0
          %634 = vmatpush1.bf16.xpose.msra.mxu0 0
          %635 = vmatprep.subr.bf16.mxu0 0
          %636 = vmatpush1.bf16.xpose.msra.mxu0 0
          %637 = vmatprep.subr.bf16.mxu0 0
          %638 = vmatpush1.bf16.xpose.msra.mxu0 0
          %639 = vmatprep.subr.bf16.mxu0 0
          %640 = vmatpush1.bf16.xpose.msra.mxu0 0
          %641 = vmatprep.subr.bf16.mxu0 0
          %642 = vmatpush1.bf16.xpose.msra.mxu0 0
          %643 = vmatprep.subr.bf16.mxu0 0
          %644 = vmatpush1.bf16.xpose.msra.mxu0 0
          %645 = vmatprep.subr.bf16.mxu0 0
          %646 = vmatpush1.bf16.xpose.msra.mxu0 0
          %647 = vmatprep.subr.bf16.mxu0 0
          %648 = vmatpush1.bf16.xpose.msra.mxu0 0
          %649 = vmatprep.subr.bf16.mxu0 0
          %650 = vmatpush1.bf16.xpose.msra.mxu0 0
          %651 = vmatprep.mubr.bf16.mxu0 0
          %652 = vmatmul.mubr.bf16.gmra.mrb[0].mxu0 %v614
          %v653 = vpop.f32.mrb[0].mxu0
          %v654 = vadd.f32 0.0, %v653
          %v655 = vpop.f32.mrb[0].mxu0
          %v656 = vpop.f32.mrb[0].mxu0
          %v657 = vpop.f32.mrb[0].mxu0
          %658 = vdwg.mxu0
          %s659 = scalar_lea.vmem [#allocation2], 16
          %v660 = vld [vmem:[%s659] sm:$0xff]
          %v661 = vsel %vm336, %v654, -inf
          %662 = vmax.xlane.f32.xlu0 %v661
          %v663 = vpop.xlane.xlu0 %662
          %v664 = vmax.f32 %v660, %v663
          %v665 = vsub.f32 %v660, %v664
          %v666 = vmul.f32 %v665, 1.442695
          %v667 = vpow.pop %v666
          %669 = vset.pattern.permute.xlu0 0
          %670 = vperm.xlu0 %669, %v664
          %v671 = vpop.permute.xlu0 %670
          %v673 = vsub.f32 %v654, %v671
          %v674 = vmul.f32 %v673, 1.442695
          %v675 = vpow.pop %v674
          %s676 = scalar_lea.vmem [#allocation3], 16
          %v677 = vld [vmem:[%s676] sm:$0xff]
          %v678 = vmul.f32 %v667, %v677
          %v679 = vsel %vm336, %v675, 0.0
          %680 = vadd.xlane.f32.xlu0 %v679
          %v681 = vpop.xlane.xlu0 %680
          %v682 = vadd.f32 %v678, %v681
          %683 = vst.msk [vmem:[%s676] sm:$0xff] %vm405, %v682
          %s684 = scalar_lea.vmem [#allocation4], 16
          %v685 = vld [vmem:[%s684] sm:$0xff]
          %687 = vset.pattern.permute.xlu0 0
          %688 = vperm.xlu0 %687, %v667
          %v689 = vpop.permute.xlu0 %688
          %v691 = vmul.f32 %v689, %v685
          %v692 = vpack.c.bf16 %v675, %v675
          %693 = vrot.lane.b32.xlu0 %v557, 112
          %v694 = vpop.permute.xlu0 %693
          %v696 = vsel %vm336, %v692, 0
          %v699 = vsel %vm418, %v694, 0
          %701 = vmatprep.subr.bf16.mxu0 0
          %702 = vmatpush1.bf16.msra.mxu0 %v699
          %703 = vmatprep.subr.bf16.mxu0 0
          %704 = vmatpush1.bf16.msra.mxu0 0
          %705 = vmatprep.subr.bf16.mxu0 0
          %706 = vmatpush1.bf16.msra.mxu0 0
          %707 = vmatprep.subr.bf16.mxu0 0
          %708 = vmatpush1.bf16.msra.mxu0 0
          %709 = vmatprep.subr.bf16.mxu0 0
          %710 = vmatpush1.bf16.msra.mxu0 0
          %711 = vmatprep.subr.bf16.mxu0 0
          %712 = vmatpush1.bf16.msra.mxu0 0
          %713 = vmatprep.subr.bf16.mxu0 0
          %714 = vmatpush1.bf16.msra.mxu0 0
          %715 = vmatprep.subr.bf16.mxu0 0
          %716 = vmatpush1.bf16.msra.mxu0 0
          %717 = vmatprep.subr.bf16.mxu0 0
          %718 = vmatpush1.bf16.msra.mxu0 0
          %719 = vmatprep.subr.bf16.mxu0 0
          %720 = vmatpush1.bf16.msra.mxu0 0
          %721 = vmatprep.subr.bf16.mxu0 0
          %722 = vmatpush1.bf16.msra.mxu0 0
          %723 = vmatprep.subr.bf16.mxu0 0
          %724 = vmatpush1.bf16.msra.mxu0 0
          %725 = vmatprep.subr.bf16.mxu0 0
          %726 = vmatpush1.bf16.msra.mxu0 0
          %727 = vmatprep.subr.bf16.mxu0 0
          %728 = vmatpush1.bf16.msra.mxu0 0
          %729 = vmatprep.subr.bf16.mxu0 0
          %730 = vmatpush1.bf16.msra.mxu0 0
          %731 = vmatprep.subr.bf16.mxu0 0
          %732 = vmatpush1.bf16.msra.mxu0 0
          %733 = vmatprep.mubr.bf16.mxu0 0
          %734 = vmatmul.mubr.bf16.gmra.mrb[0].mxu0 %v696
          %v735 = vpop.f32.mrb[0].mxu0
          %v736 = vadd.f32 0.0, %v735
          %v737 = vpop.f32.mrb[0].mxu0
          %v738 = vpop.f32.mrb[0].mxu0
          %v739 = vpop.f32.mrb[0].mxu0
          %740 = vdwg.mxu0
          %v741 = vadd.f32 %v691, %v736
          %742 = vst.msk [vmem:[%s684] sm:$0xff] %vm336, %v741
          %743 = vst.msk [vmem:[%s659] sm:$0xff] %vm405, %v664
          %744 = vrot.lane.b32.xlu0 %v467, 104
          %v745 = vpop.permute.xlu0 %744
          %746 = vrot.lane.b32.xlu0 %v472, 104
          %v747 = vpop.permute.xlu0 %746
          %v749 = vsel %vm336, %v745, 0
          %v752 = vsel %vm336, %v747, 0
          %754 = vmatprep.subr.bf16.mxu0 0
          %755 = vmatpush1.bf16.xpose.msra.mxu0 %v752
          %756 = vmatprep.subr.bf16.mxu0 0
          %757 = vmatpush1.bf16.xpose.msra.mxu0 0
          %758 = vmatprep.subr.bf16.mxu0 0
          %759 = vmatpush1.bf16.xpose.msra.mxu0 0
          %760 = vmatprep.subr.bf16.mxu0 0
          %761 = vmatpush1.bf16.xpose.msra.mxu0 0
          %762 = vmatprep.subr.bf16.mxu0 0
          %763 = vmatpush1.bf16.xpose.msra.mxu0 0
          %764 = vmatprep.subr.bf16.mxu0 0
          %765 = vmatpush1.bf16.xpose.msra.mxu0 0
          %766 = vmatprep.subr.bf16.mxu0 0
          %767 = vmatpush1.bf16.xpose.msra.mxu0 0
          %768 = vmatprep.subr.bf16.mxu0 0
          %769 = vmatpush1.bf16.xpose.msra.mxu0 0
          %770 = vmatprep.subr.bf16.mxu0 0
          %771 = vmatpush1.bf16.xpose.msra.mxu0 0
          %772 = vmatprep.subr.bf16.mxu0 0
          %773 = vmatpush1.bf16.xpose.msra.mxu0 0
          %774 = vmatprep.subr.bf16.mxu0 0
          %775 = vmatpush1.bf16.xpose.msra.mxu0 0
          %776 = vmatprep.subr.bf16.mxu0 0
          %777 = vmatpush1.bf16.xpose.msra.mxu0 0
          %778 = vmatprep.subr.bf16.mxu0 0
          %779 = vmatpush1.bf16.xpose.msra.mxu0 0
          %780 = vmatprep.subr.bf16.mxu0 0
          %781 = vmatpush1.bf16.xpose.msra.mxu0 0
          %782 = vmatprep.subr.bf16.mxu0 0
          %783 = vmatpush1.bf16.xpose.msra.mxu0 0
          %784 = vmatprep.subr.bf16.mxu0 0
          %785 = vmatpush1.bf16.xpose.msra.mxu0 0
          %786 = vmatprep.mubr.bf16.mxu0 0
          %787 = vmatmul.mubr.bf16.gmra.mrb[0].mxu0 %v749
          %v788 = vpop.f32.mrb[0].mxu0
          %v789 = vadd.f32 0.0, %v788
          %v790 = vpop.f32.mrb[0].mxu0
          %v791 = vpop.f32.mrb[0].mxu0
          %v792 = vpop.f32.mrb[0].mxu0
          %793 = vdwg.mxu0
          %s794 = scalar_lea.vmem [#allocation2], 24
          %v795 = vld [vmem:[%s794] sm:$0xff]
          %v796 = vsel %vm336, %v789, -inf
          %797 = vmax.xlane.f32.xlu0 %v796
          %v798 = vpop.xlane.xlu0 %797
          %v799 = vmax.f32 %v795, %v798
          %v800 = vsub.f32 %v795, %v799
          %v801 = vmul.f32 %v800, 1.442695
          %v802 = vpow.pop %v801
          %804 = vset.pattern.permute.xlu0 0
          %805 = vperm.xlu0 %804, %v799
          %v806 = vpop.permute.xlu0 %805
          %v808 = vsub.f32 %v789, %v806
          %v809 = vmul.f32 %v808, 1.442695
          %v810 = vpow.pop %v809
          %s811 = scalar_lea.vmem [#allocation3], 24
          %v812 = vld [vmem:[%s811] sm:$0xff]
          %v813 = vmul.f32 %v802, %v812
          %v814 = vsel %vm336, %v810, 0.0
          %815 = vadd.xlane.f32.xlu0 %v814
          %v816 = vpop.xlane.xlu0 %815
          %v817 = vadd.f32 %v813, %v816
          %818 = vst.msk [vmem:[%s811] sm:$0xff] %vm405, %v817
          %s819 = scalar_lea.vmem [#allocation4], 24
          %v820 = vld [vmem:[%s819] sm:$0xff]
          %822 = vset.pattern.permute.xlu0 0
          %823 = vperm.xlu0 %822, %v802
          %v824 = vpop.permute.xlu0 %823
          %v826 = vmul.f32 %v824, %v820
          %v827 = vpack.c.bf16 %v810, %v810
          %828 = vrot.lane.b32.xlu0 %v557, 104
          %v829 = vpop.permute.xlu0 %828
          %v831 = vsel %vm336, %v827, 0
          %v834 = vsel %vm418, %v829, 0
          %836 = vmatprep.subr.bf16.mxu0 0
          %837 = vmatpush1.bf16.msra.mxu0 %v834
          %838 = vmatprep.subr.bf16.mxu0 0
          %839 = vmatpush1.bf16.msra.mxu0 0
          %840 = vmatprep.subr.bf16.mxu0 0
          %841 = vmatpush1.bf16.msra.mxu0 0
          %842 = vmatprep.subr.bf16.mxu0 0
          %843 = vmatpush1.bf16.msra.mxu0 0
          %844 = vmatprep.subr.bf16.mxu0 0
          %845 = vmatpush1.bf16.msra.mxu0 0
          %846 = vmatprep.subr.bf16.mxu0 0
          %847 = vmatpush1.bf16.msra.mxu0 0
          %848 = vmatprep.subr.bf16.mxu0 0
          %849 = vmatpush1.bf16.msra.mxu0 0
          %850 = vmatprep.subr.bf16.mxu0 0
          %851 = vmatpush1.bf16.msra.mxu0 0
          %852 = vmatprep.subr.bf16.mxu0 0
          %853 = vmatpush1.bf16.msra.mxu0 0
          %854 = vmatprep.subr.bf16.mxu0 0
          %855 = vmatpush1.bf16.msra.mxu0 0
          %856 = vmatprep.subr.bf16.mxu0 0
          %857 = vmatpush1.bf16.msra.mxu0 0
          %858 = vmatprep.subr.bf16.mxu0 0
          %859 = vmatpush1.bf16.msra.mxu0 0
          %860 = vmatprep.subr.bf16.mxu0 0
          %861 = vmatpush1.bf16.msra.mxu0 0
          %862 = vmatprep.subr.bf16.mxu0 0
          %863 = vmatpush1.bf16.msra.mxu0 0
          %864 = vmatprep.subr.bf16.mxu0 0
          %865 = vmatpush1.bf16.msra.mxu0 0
          %866 = vmatprep.subr.bf16.mxu0 0
          %867 = vmatpush1.bf16.msra.mxu0 0
          %868 = vmatprep.mubr.bf16.mxu0 0
          %869 = vmatmul.mubr.bf16.gmra.mrb[0].mxu0 %v831
          %v870 = vpop.f32.mrb[0].mxu0
          %v871 = vadd.f32 0.0, %v870
          %v872 = vpop.f32.mrb[0].mxu0
          %v873 = vpop.f32.mrb[0].mxu0
          %v874 = vpop.f32.mrb[0].mxu0
          %875 = vdwg.mxu0
          %v876 = vadd.f32 %v826, %v871
          %877 = vst.msk [vmem:[%s819] sm:$0xff] %vm336, %v876
          %878 = vst.msk [vmem:[%s794] sm:$0xff] %vm405, %v799
        $region52: #{transformer_block.4} parent=31 // pred_fallthru
          _
        %p879 = pnand %p308, %p309
        %p880 = pneg %p879
        // Predicated region
        $region53: #{transformer_block.4} parent=31 // pred_check
          _
        $region54: #{transformer_block.4} parent=31 // pred_check_branch
          %882 = sbr.rel (%p879) target = $region56
        $region55: #{transformer_block.4} parent=31 // pred_region
          %v883 = vld [vmem:[%s248] sm:$0xf]
          %v884 = vld [vmem:[%s257] sm:$0xf]
          %v885 = vld [vmem:[%s266] sm:$0xf]
          %v886 = vlaneseq
          %v887 = vshrl.u32 %v886, 7
          %v888 = vstv %s304
          %v889 = vadd.s32 %v888, %v887
          %v890 = vlaneseq
          %v891 = vand.u32 %v890, 127
          %v892 = vstv %s306
          %v893 = vadd.s32 %v892, %v891
          %vm894 = vcmp.gt.s32.totalorder %v893, %v889
          %vm895 = vcmask 64512
          %v897 = vsel %vm895, %v883, 0
          %v900 = vsel %vm895, %v884, 0
          %902 = vmatprep.subr.bf16.mxu0 0
          %903 = vmatpush1.bf16.xpose.msra.mxu0 %v900
          %904 = vmatprep.subr.bf16.mxu0 0
          %905 = vmatpush1.bf16.xpose.msra.mxu0 0
          %906 = vmatprep.subr.bf16.mxu0 0
          %907 = vmatpush1.bf16.xpose.msra.mxu0 0
          %908 = vmatprep.subr.bf16.mxu0 0
          %909 = vmatpush1.bf16.xpose.msra.mxu0 0
          %910 = vmatprep.subr.bf16.mxu0 0
          %911 = vmatpush1.bf16.xpose.msra.mxu0 0
          %912 = vmatprep.subr.bf16.mxu0 0
          %913 = vmatpush1.bf16.xpose.msra.mxu0 0
          %914 = vmatprep.subr.bf16.mxu0 0
          %915 = vmatpush1.bf16.xpose.msra.mxu0 0
          %916 = vmatprep.subr.bf16.mxu0 0
          %917 = vmatpush1.bf16.xpose.msra.mxu0 0
          %918 = vmatprep.subr.bf16.mxu0 0
          %919 = vmatpush1.bf16.xpose.msra.mxu0 0
          %920 = vmatprep.subr.bf16.mxu0 0
          %921 = vmatpush1.bf16.xpose.msra.mxu0 0
          %922 = vmatprep.subr.bf16.mxu0 0
          %923 = vmatpush1.bf16.xpose.msra.mxu0 0
          %924 = vmatprep.subr.bf16.mxu0 0
          %925 = vmatpush1.bf16.xpose.msra.mxu0 0
          %926 = vmatprep.subr.bf16.mxu0 0
          %927 = vmatpush1.bf16.xpose.msra.mxu0 0
          %928 = vmatprep.subr.bf16.mxu0 0
          %929 = vmatpush1.bf16.xpose.msra.mxu0 0
          %930 = vmatprep.subr.bf16.mxu0 0
          %931 = vmatpush1.bf16.xpose.msra.mxu0 0
          %932 = vmatprep.subr.bf16.mxu0 0
          %933 = vmatpush1.bf16.xpose.msra.mxu0 0
          %934 = vmatprep.mubr.bf16.mxu0 0
          %935 = vmatmul.mubr.bf16.gmra.mrb[0].mxu0 %v897
          %v936 = vpop.f32.mrb[0].mxu0
          %v937 = vadd.f32 0.0, %v936
          %v938 = vpop.f32.mrb[0].mxu0
          %v939 = vpop.f32.mrb[0].mxu0
          %v940 = vpop.f32.mrb[0].mxu0
          %941 = vdwg.mxu0
          %v942 = vsel %vm894, -1e+30, %v937
          %v943 = vld [vmem:[#allocation2] sm:$0xff]
          %v944 = vsel %vm895, %v942, -inf
          %945 = vmax.xlane.f32.xlu0 %v944
          %v946 = vpop.xlane.xlu0 %945
          %v947 = vmax.f32 %v943, %v946
          %v948 = vsub.f32 %v943, %v947
          %v949 = vmul.f32 %v948, 1.442695
          %v950 = vpow.pop %v949
          %952 = vset.pattern.permute.xlu0 0
          %953 = vperm.xlu0 %952, %v947
          %v954 = vpop.permute.xlu0 %953
          %v956 = vsub.f32 %v942, %v954
          %v957 = vmul.f32 %v956, 1.442695
          %v958 = vpow.pop %v957
          %v959 = vld [vmem:[#allocation3] sm:$0xff]
          %v960 = vmul.f32 %v950, %v959
          %v961 = vsel %vm895, %v958, 0.0
          %962 = vadd.xlane.f32.xlu0 %v961
          %v963 = vpop.xlane.xlu0 %962
          %v964 = vadd.f32 %v960, %v963
          %vm965 = vcmask 7168
          %966 = vst.msk [vmem:[#allocation3] sm:$0xff] %vm965, %v964
          %v967 = vld [vmem:[#allocation4] sm:$0xff]
          %969 = vset.pattern.permute.xlu0 0
          %970 = vperm.xlu0 %969, %v950
          %v971 = vpop.permute.xlu0 %970
          %v973 = vmul.f32 %v971, %v967
          %v974 = vpack.c.bf16 %v958, %v958
          %v976 = vsel %vm895, %v974, 0
          %vm978 = vcmask 1043456
          %v980 = vsel %vm978, %v885, 0
          %982 = vmatprep.subr.bf16.mxu0 0
          %983 = vmatpush1.bf16.msra.mxu0 %v980
          %984 = vmatprep.subr.bf16.mxu0 0
          %985 = vmatpush1.bf16.msra.mxu0 0
          %986 = vmatprep.subr.bf16.mxu0 0
          %987 = vmatpush1.bf16.msra.mxu0 0
          %988 = vmatprep.subr.bf16.mxu0 0
          %989 = vmatpush1.bf16.msra.mxu0 0
          %990 = vmatprep.subr.bf16.mxu0 0
          %991 = vmatpush1.bf16.msra.mxu0 0
          %992 = vmatprep.subr.bf16.mxu0 0
          %993 = vmatpush1.bf16.msra.mxu0 0
          %994 = vmatprep.subr.bf16.mxu0 0
          %995 = vmatpush1.bf16.msra.mxu0 0
          %996 = vmatprep.subr.bf16.mxu0 0
          %997 = vmatpush1.bf16.msra.mxu0 0
          %998 = vmatprep.subr.bf16.mxu0 0
          %999 = vmatpush1.bf16.msra.mxu0 0
          %1000 = vmatprep.subr.bf16.mxu0 0
          %1001 = vmatpush1.bf16.msra.mxu0 0
          %1002 = vmatprep.subr.bf16.mxu0 0
          %1003 = vmatpush1.bf16.msra.mxu0 0
          %1004 = vmatprep.subr.bf16.mxu0 0
          %1005 = vmatpush1.bf16.msra.mxu0 0
          %1006 = vmatprep.subr.bf16.mxu0 0
          %1007 = vmatpush1.bf16.msra.mxu0 0
          %1008 = vmatprep.subr.bf16.mxu0 0
          %1009 = vmatpush1.bf16.msra.mxu0 0
          %1010 = vmatprep.subr.bf16.mxu0 0
          %1011 = vmatpush1.bf16.msra.mxu0 0
          %1012 = vmatprep.subr.bf16.mxu0 0
          %1013 = vmatpush1.bf16.msra.mxu0 0
          %1014 = vmatprep.mubr.bf16.mxu0 0
          %1015 = vmatmul.mubr.bf16.gmra.mrb[0].mxu0 %v976
          %v1016 = vpop.f32.mrb[0].mxu0
          %v1017 = vadd.f32 0.0, %v1016
          %v1018 = vpop.f32.mrb[0].mxu0
          %v1019 = vpop.f32.mrb[0].mxu0
          %v1020 = vpop.f32.mrb[0].mxu0
          %1021 = vdwg.mxu0
          %v1022 = vadd.f32 %v973, %v1017
          %1023 = vst.msk [vmem:[#allocation4] sm:$0xff] %vm895, %v1022
          %1024 = vst.msk [vmem:[#allocation2] sm:$0xff] %vm965, %v947
          %v1026 = vunpack.c.l.b16 %v883
          %v1027 = vpack.c.b16 %v1026, %v1026
          %1028 = vrot.lane.b32.xlu0 %v1027, 120
          %v1029 = vpop.permute.xlu0 %1028
          %v1031 = vunpack.c.l.b16 %v884
          %v1032 = vpack.c.b16 %v1031, %v1031
          %1033 = vrot.lane.b32.xlu0 %v1032, 120
          %v1034 = vpop.permute.xlu0 %1033
          %v1036 = vsel %vm895, %v1029, 0
          %v1039 = vsel %vm895, %v1034, 0
          %1041 = vmatprep.subr.bf16.mxu0 0
          %1042 = vmatpush1.bf16.xpose.msra.mxu0 %v1039
          %1043 = vmatprep.subr.bf16.mxu0 0
          %1044 = vmatpush1.bf16.xpose.msra.mxu0 0
          %1045 = vmatprep.subr.bf16.mxu0 0
          %1046 = vmatpush1.bf16.xpose.msra.mxu0 0
          %1047 = vmatprep.subr.bf16.mxu0 0
          %1048 = vmatpush1.bf16.xpose.msra.mxu0 0
          %1049 = vmatprep.subr.bf16.mxu0 0
          %1050 = vmatpush1.bf16.xpose.msra.mxu0 0
          %1051 = vmatprep.subr.bf16.mxu0 0
          %1052 = vmatpush1.bf16.xpose.msra.mxu0 0
          %1053 = vmatprep.subr.bf16.mxu0 0
          %1054 = vmatpush1.bf16.xpose.msra.mxu0 0
          %1055 = vmatprep.subr.bf16.mxu0 0
          %1056 = vmatpush1.bf16.xpose.msra.mxu0 0
          %1057 = vmatprep.subr.bf16.mxu0 0
          %1058 = vmatpush1.bf16.xpose.msra.mxu0 0
          %1059 = vmatprep.subr.bf16.mxu0 0
          %1060 = vmatpush1.bf16.xpose.msra.mxu0 0
          %1061 = vmatprep.subr.bf16.mxu0 0
          %1062 = vmatpush1.bf16.xpose.msra.mxu0 0
          %1063 = vmatprep.subr.bf16.mxu0 0
          %1064 = vmatpush1.bf16.xpose.msra.mxu0 0
          %1065 = vmatprep.subr.bf16.mxu0 0
          %1066 = vmatpush1.bf16.xpose.msra.mxu0 0
          %1067 = vmatprep.subr.bf16.mxu0 0
          %1068 = vmatpush1.bf16.xpose.msra.mxu0 0
          %1069 = vmatprep.subr.bf16.mxu0 0
          %1070 = vmatpush1.bf16.xpose.msra.mxu0 0
          %1071 = vmatprep.subr.bf16.mxu0 0
          %1072 = vmatpush1.bf16.xpose.msra.mxu0 0
          %1073 = vmatprep.mubr.bf16.mxu0 0
          %1074 = vmatmul.mubr.bf16.gmra.mrb[0].mxu0 %v1036
          %v1075 = vpop.f32.mrb[0].mxu0
          %v1076 = vadd.f32 0.0, %v1075
          %v1077 = vpop.f32.mrb[0].mxu0
          %v1078 = vpop.f32.mrb[0].mxu0
          %v1079 = vpop.f32.mrb[0].mxu0
          %1080 = vdwg.mxu0
          %v1081 = vsel %vm894, -1e+30, %v1076
          %s1082 = scalar_lea.vmem [#allocation2], 8
          %v1083 = vld [vmem:[%s1082] sm:$0xff]
          %v1084 = vsel %vm895, %v1081, -inf
          %1085 = vmax.xlane.f32.xlu0 %v1084
          %v1086 = vpop.xlane.xlu0 %1085
          %v1087 = vmax.f32 %v1083, %v1086
          %v1088 = vsub.f32 %v1083, %v1087
          %v1089 = vmul.f32 %v1088, 1.442695
          %v1090 = vpow.pop %v1089
          %1092 = vset.pattern.permute.xlu0 0
          %1093 = vperm.xlu0 %1092, %v1087
          %v1094 = vpop.permute.xlu0 %1093
          %v1096 = vsub.f32 %v1081, %v1094
          %v1097 = vmul.f32 %v1096, 1.442695
          %v1098 = vpow.pop %v1097
          %s1099 = scalar_lea.vmem [#allocation3], 8
          %v1100 = vld [vmem:[%s1099] sm:$0xff]
          %v1101 = vmul.f32 %v1090, %v1100
          %v1102 = vsel %vm895, %v1098, 0.0
          %1103 = vadd.xlane.f32.xlu0 %v1102
          %v1104 = vpop.xlane.xlu0 %1103
          %v1105 = vadd.f32 %v1101, %v1104
          %1106 = vst.msk [vmem:[%s1099] sm:$0xff] %vm965, %v1105
          %s1107 = scalar_lea.vmem [#allocation4], 8
          %v1108 = vld [vmem:[%s1107] sm:$0xff]
          %1110 = vset.pattern.permute.xlu0 0
          %1111 = vperm.xlu0 %1110, %v1090
          %v1112 = vpop.permute.xlu0 %1111
          %v1114 = vmul.f32 %v1112, %v1108
          %v1115 = vpack.c.bf16 %v1098, %v1098
          %v1117 = vunpack.c.l.b16 %v885
          %v1118 = vpack.c.b16 %v1117, %v1117
          %1119 = vrot.lane.b32.xlu0 %v1118, 120
          %v1120 = vpop.permute.xlu0 %1119
          %v1122 = vsel %vm895, %v1115, 0
          %v1125 = vsel %vm978, %v1120, 0
          %1127 = vmatprep.subr.bf16.mxu0 0
          %1128 = vmatpush1.bf16.msra.mxu0 %v1125
          %1129 = vmatprep.subr.bf16.mxu0 0
          %1130 = vmatpush1.bf16.msra.mxu0 0
          %1131 = vmatprep.subr.bf16.mxu0 0
          %1132 = vmatpush1.bf16.msra.mxu0 0
          %1133 = vmatprep.subr.bf16.mxu0 0
          %1134 = vmatpush1.bf16.msra.mxu0 0
          %1135 = vmatprep.subr.bf16.mxu0 0
          %1136 = vmatpush1.bf16.msra.mxu0 0
          %1137 = vmatprep.subr.bf16.mxu0 0
          %1138 = vmatpush1.bf16.msra.mxu0 0
          %1139 = vmatprep.subr.bf16.mxu0 0
          %1140 = vmatpush1.bf16.msra.mxu0 0
          %1141 = vmatprep.subr.bf16.mxu0 0
          %1142 = vmatpush1.bf16.msra.mxu0 0
          %1143 = vmatprep.subr.bf16.mxu0 0
          %1144 = vmatpush1.bf16.msra.mxu0 0
          %1145 = vmatprep.subr.bf16.mxu0 0
          %1146 = vmatpush1.bf16.msra.mxu0 0
          %1147 = vmatprep.subr.bf16.mxu0 0
          %1148 = vmatpush1.bf16.msra.mxu0 0
          %1149 = vmatprep.subr.bf16.mxu0 0
          %1150 = vmatpush1.bf16.msra.mxu0 0
          %1151 = vmatprep.subr.bf16.mxu0 0
          %1152 = vmatpush1.bf16.msra.mxu0 0
          %1153 = vmatprep.subr.bf16.mxu0 0
          %1154 = vmatpush1.bf16.msra.mxu0 0
          %1155 = vmatprep.subr.bf16.mxu0 0
          %1156 = vmatpush1.bf16.msra.mxu0 0
          %1157 = vmatprep.subr.bf16.mxu0 0
          %1158 = vmatpush1.bf16.msra.mxu0 0
          %1159 = vmatprep.mubr.bf16.mxu0 0
          %1160 = vmatmul.mubr.bf16.gmra.mrb[0].mxu0 %v1122
          %v1161 = vpop.f32.mrb[0].mxu0
          %v1162 = vadd.f32 0.0, %v1161
          %v1163 = vpop.f32.mrb[0].mxu0
          %v1164 = vpop.f32.mrb[0].mxu0
          %v1165 = vpop.f32.mrb[0].mxu0
          %1166 = vdwg.mxu0
          %v1167 = vadd.f32 %v1114, %v1162
          %1168 = vst.msk [vmem:[%s1107] sm:$0xff] %vm895, %v1167
          %1169 = vst.msk [vmem:[%s1082] sm:$0xff] %vm965, %v1087
          %1170 = vrot.lane.b32.xlu0 %v1027, 112
          %v1171 = vpop.permute.xlu0 %1170
          %1172 = vrot.lane.b32.xlu0 %v1032, 112
          %v1173 = vpop.permute.xlu0 %1172
          %v1175 = vsel %vm895, %v1171, 0
          %v1178 = vsel %vm895, %v1173, 0
          %1180 = vmatprep.subr.bf16.mxu0 0
          %1181 = vmatpush1.bf16.xpose.msra.mxu0 %v1178
          %1182 = vmatprep.subr.bf16.mxu0 0
          %1183 = vmatpush1.bf16.xpose.msra.mxu0 0
          %1184 = vmatprep.subr.bf16.mxu0 0
          %1185 = vmatpush1.bf16.xpose.msra.mxu0 0
          %1186 = vmatprep.subr.bf16.mxu0 0
          %1187 = vmatpush1.bf16.xpose.msra.mxu0 0
          %1188 = vmatprep.subr.bf16.mxu0 0
          %1189 = vmatpush1.bf16.xpose.msra.mxu0 0
          %1190 = vmatprep.subr.bf16.mxu0 0
          %1191 = vmatpush1.bf16.xpose.msra.mxu0 0
          %1192 = vmatprep.subr.bf16.mxu0 0
          %1193 = vmatpush1.bf16.xpose.msra.mxu0 0
          %1194 = vmatprep.subr.bf16.mxu0 0
          %1195 = vmatpush1.bf16.xpose.msra.mxu0 0
          %1196 = vmatprep.subr.bf16.mxu0 0
          %1197 = vmatpush1.bf16.xpose.msra.mxu0 0
          %1198 = vmatprep.subr.bf16.mxu0 0
          %1199 = vmatpush1.bf16.xpose.msra.mxu0 0
          %1200 = vmatprep.subr.bf16.mxu0 0
          %1201 = vmatpush1.bf16.xpose.msra.mxu0 0
          %1202 = vmatprep.subr.bf16.mxu0 0
          %1203 = vmatpush1.bf16.xpose.msra.mxu0 0
          %1204 = vmatprep.subr.bf16.mxu0 0
          %1205 = vmatpush1.bf16.xpose.msra.mxu0 0
          %1206 = vmatprep.subr.bf16.mxu0 0
          %1207 = vmatpush1.bf16.xpose.msra.mxu0 0
          %1208 = vmatprep.subr.bf16.mxu0 0
          %1209 = vmatpush1.bf16.xpose.msra.mxu0 0
          %1210 = vmatprep.subr.bf16.mxu0 0
          %1211 = vmatpush1.bf16.xpose.msra.mxu0 0
          %1212 = vmatprep.mubr.bf16.mxu0 0
          %1213 = vmatmul.mubr.bf16.gmra.mrb[0].mxu0 %v1175
          %v1214 = vpop.f32.mrb[0].mxu0
          %v1215 = vadd.f32 0.0, %v1214
          %v1216 = vpop.f32.mrb[0].mxu0
          %v1217 = vpop.f32.mrb[0].mxu0
          %v1218 = vpop.f32.mrb[0].mxu0
          %1219 = vdwg.mxu0
          %v1220 = vsel %vm894, -1e+30, %v1215
          %s1221 = scalar_lea.vmem [#allocation2], 16
          %v1222 = vld [vmem:[%s1221] sm:$0xff]
          %v1223 = vsel %vm895, %v1220, -inf
          %1224 = vmax.xlane.f32.xlu0 %v1223
          %v1225 = vpop.xlane.xlu0 %1224
          %v1226 = vmax.f32 %v1222, %v1225
          %v1227 = vsub.f32 %v1222, %v1226
          %v1228 = vmul.f32 %v1227, 1.442695
          %v1229 = vpow.pop %v1228
          %1231 = vset.pattern.permute.xlu0 0
          %1232 = vperm.xlu0 %1231, %v1226
          %v1233 = vpop.permute.xlu0 %1232
          %v1235 = vsub.f32 %v1220, %v1233
          %v1236 = vmul.f32 %v1235, 1.442695
          %v1237 = vpow.pop %v1236
          %s1238 = scalar_lea.vmem [#allocation3], 16
          %v1239 = vld [vmem:[%s1238] sm:$0xff]
          %v1240 = vmul.f32 %v1229, %v1239
          %v1241 = vsel %vm895, %v1237, 0.0
          %1242 = vadd.xlane.f32.xlu0 %v1241
          %v1243 = vpop.xlane.xlu0 %1242
          %v1244 = vadd.f32 %v1240, %v1243
          %1245 = vst.msk [vmem:[%s1238] sm:$0xff] %vm965, %v1244
          %s1246 = scalar_lea.vmem [#allocation4], 16
          %v1247 = vld [vmem:[%s1246] sm:$0xff]
          %1249 = vset.pattern.permute.xlu0 0
          %1250 = vperm.xlu0 %1249, %v1229
          %v1251 = vpop.permute.xlu0 %1250
          %v1253 = vmul.f32 %v1251, %v1247
          %v1254 = vpack.c.bf16 %v1237, %v1237
          %1255 = vrot.lane.b32.xlu0 %v1118, 112
          %v1256 = vpop.permute.xlu0 %1255
          %v1258 = vsel %vm895, %v1254, 0
          %v1261 = vsel %vm978, %v1256, 0
          %1263 = vmatprep.subr.bf16.mxu0 0
          %1264 = vmatpush1.bf16.msra.mxu0 %v1261
          %1265 = vmatprep.subr.bf16.mxu0 0
          %1266 = vmatpush1.bf16.msra.mxu0 0
          %1267 = vmatprep.subr.bf16.mxu0 0
          %1268 = vmatpush1.bf16.msra.mxu0 0
          %1269 = vmatprep.subr.bf16.mxu0 0
          %1270 = vmatpush1.bf16.msra.mxu0 0
          %1271 = vmatprep.subr.bf16.mxu0 0
          %1272 = vmatpush1.bf16.msra.mxu0 0
          %1273 = vmatprep.subr.bf16.mxu0 0
          %1274 = vmatpush1.bf16.msra.mxu0 0
          %1275 = vmatprep.subr.bf16.mxu0 0
          %1276 = vmatpush1.bf16.msra.mxu0 0
          %1277 = vmatprep.subr.bf16.mxu0 0
          %1278 = vmatpush1.bf16.msra.mxu0 0
          %1279 = vmatprep.subr.bf16.mxu0 0
          %1280 = vmatpush1.bf16.msra.mxu0 0
          %1281 = vmatprep.subr.bf16.mxu0 0
          %1282 = vmatpush1.bf16.msra.mxu0 0
          %1283 = vmatprep.subr.bf16.mxu0 0
          %1284 = vmatpush1.bf16.msra.mxu0 0
          %1285 = vmatprep.subr.bf16.mxu0 0
          %1286 = vmatpush1.bf16.msra.mxu0 0
          %1287 = vmatprep.subr.bf16.mxu0 0
          %1288 = vmatpush1.bf16.msra.mxu0 0
          %1289 = vmatprep.subr.bf16.mxu0 0
          %1290 = vmatpush1.bf16.msra.mxu0 0
          %1291 = vmatprep.subr.bf16.mxu0 0
          %1292 = vmatpush1.bf16.msra.mxu0 0
          %1293 = vmatprep.subr.bf16.mxu0 0
          %1294 = vmatpush1.bf16.msra.mxu0 0
          %1295 = vmatprep.mubr.bf16.mxu0 0
          %1296 = vmatmul.mubr.bf16.gmra.mrb[0].mxu0 %v1258
          %v1297 = vpop.f32.mrb[0].mxu0
          %v1298 = vadd.f32 0.0, %v1297
          %v1299 = vpop.f32.mrb[0].mxu0
          %v1300 = vpop.f32.mrb[0].mxu0
          %v1301 = vpop.f32.mrb[0].mxu0
          %1302 = vdwg.mxu0
          %v1303 = vadd.f32 %v1253, %v1298
          %1304 = vst.msk [vmem:[%s1246] sm:$0xff] %vm895, %v1303
          %1305 = vst.msk [vmem:[%s1221] sm:$0xff] %vm965, %v1226
          %1306 = vrot.lane.b32.xlu0 %v1027, 104
          %v1307 = vpop.permute.xlu0 %1306
          %1308 = vrot.lane.b32.xlu0 %v1032, 104
          %v1309 = vpop.permute.xlu0 %1308
          %v1311 = vsel %vm895, %v1307, 0
          %v1314 = vsel %vm895, %v1309, 0
          %1316 = vmatprep.subr.bf16.mxu0 0
          %1317 = vmatpush1.bf16.xpose.msra.mxu0 %v1314
          %1318 = vmatprep.subr.bf16.mxu0 0
          %1319 = vmatpush1.bf16.xpose.msra.mxu0 0
          %1320 = vmatprep.subr.bf16.mxu0 0
          %1321 = vmatpush1.bf16.xpose.msra.mxu0 0
          %1322 = vmatprep.subr.bf16.mxu0 0
          %1323 = vmatpush1.bf16.xpose.msra.mxu0 0
          %1324 = vmatprep.subr.bf16.mxu0 0
          %1325 = vmatpush1.bf16.xpose.msra.mxu0 0
          %1326 = vmatprep.subr.bf16.mxu0 0
          %1327 = vmatpush1.bf16.xpose.msra.mxu0 0
          %1328 = vmatprep.subr.bf16.mxu0 0
          %1329 = vmatpush1.bf16.xpose.msra.mxu0 0
          %1330 = vmatprep.subr.bf16.mxu0 0
          %1331 = vmatpush1.bf16.xpose.msra.mxu0 0
          %1332 = vmatprep.subr.bf16.mxu0 0
          %1333 = vmatpush1.bf16.xpose.msra.mxu0 0
          %1334 = vmatprep.subr.bf16.mxu0 0
          %1335 = vmatpush1.bf16.xpose.msra.mxu0 0
          %1336 = vmatprep.subr.bf16.mxu0 0
          %1337 = vmatpush1.bf16.xpose.msra.mxu0 0
          %1338 = vmatprep.subr.bf16.mxu0 0
          %1339 = vmatpush1.bf16.xpose.msra.mxu0 0
          %1340 = vmatprep.subr.bf16.mxu0 0
          %1341 = vmatpush1.bf16.xpose.msra.mxu0 0
          %1342 = vmatprep.subr.bf16.mxu0 0
          %1343 = vmatpush1.bf16.xpose.msra.mxu0 0
          %1344 = vmatprep.subr.bf16.mxu0 0
          %1345 = vmatpush1.bf16.xpose.msra.mxu0 0
          %1346 = vmatprep.subr.bf16.mxu0 0
          %1347 = vmatpush1.bf16.xpose.msra.mxu0 0
          %1348 = vmatprep.mubr.bf16.mxu0 0
          %1349 = vmatmul.mubr.bf16.gmra.mrb[0].mxu0 %v1311
          %v1350 = vpop.f32.mrb[0].mxu0
          %v1351 = vadd.f32 0.0, %v1350
          %v1352 = vpop.f32.mrb[0].mxu0
          %v1353 = vpop.f32.mrb[0].mxu0
          %v1354 = vpop.f32.mrb[0].mxu0
          %1355 = vdwg.mxu0
          %v1356 = vsel %vm894, -1e+30, %v1351
          %s1357 = scalar_lea.vmem [#allocation2], 24
          %v1358 = vld [vmem:[%s1357] sm:$0xff]
          %v1359 = vsel %vm895, %v1356, -inf
          %1360 = vmax.xlane.f32.xlu0 %v1359
          %v1361 = vpop.xlane.xlu0 %1360
          %v1362 = vmax.f32 %v1358, %v1361
          %v1363 = vsub.f32 %v1358, %v1362
          %v1364 = vmul.f32 %v1363, 1.442695
          %v1365 = vpow.pop %v1364
          %1367 = vset.pattern.permute.xlu0 0
          %1368 = vperm.xlu0 %1367, %v1362
          %v1369 = vpop.permute.xlu0 %1368
          %v1371 = vsub.f32 %v1356, %v1369
          %v1372 = vmul.f32 %v1371, 1.442695
          %v1373 = vpow.pop %v1372
          %s1374 = scalar_lea.vmem [#allocation3], 24
          %v1375 = vld [vmem:[%s1374] sm:$0xff]
          %v1376 = vmul.f32 %v1365, %v1375
          %v1377 = vsel %vm895, %v1373, 0.0
          %1378 = vadd.xlane.f32.xlu0 %v1377
          %v1379 = vpop.xlane.xlu0 %1378
          %v1380 = vadd.f32 %v1376, %v1379
          %1381 = vst.msk [vmem:[%s1374] sm:$0xff] %vm965, %v1380
          %s1382 = scalar_lea.vmem [#allocation4], 24
          %v1383 = vld [vmem:[%s1382] sm:$0xff]
          %1385 = vset.pattern.permute.xlu0 0
          %1386 = vperm.xlu0 %1385, %v1365
          %v1387 = vpop.permute.xlu0 %1386
          %v1389 = vmul.f32 %v1387, %v1383
          %v1390 = vpack.c.bf16 %v1373, %v1373
          %1391 = vrot.lane.b32.xlu0 %v1118, 104
          %v1392 = vpop.permute.xlu0 %1391
          %v1394 = vsel %vm895, %v1390, 0
          %v1397 = vsel %vm978, %v1392, 0
          %1399 = vmatprep.subr.bf16.mxu0 0
          %1400 = vmatpush1.bf16.msra.mxu0 %v1397
          %1401 = vmatprep.subr.bf16.mxu0 0
          %1402 = vmatpush1.bf16.msra.mxu0 0
          %1403 = vmatprep.subr.bf16.mxu0 0
          %1404 = vmatpush1.bf16.msra.mxu0 0
          %1405 = vmatprep.subr.bf16.mxu0 0
          %1406 = vmatpush1.bf16.msra.mxu0 0
          %1407 = vmatprep.subr.bf16.mxu0 0
          %1408 = vmatpush1.bf16.msra.mxu0 0
          %1409 = vmatprep.subr.bf16.mxu0 0
          %1410 = vmatpush1.bf16.msra.mxu0 0
          %1411 = vmatprep.subr.bf16.mxu0 0
          %1412 = vmatpush1.bf16.msra.mxu0 0
          %1413 = vmatprep.subr.bf16.mxu0 0
          %1414 = vmatpush1.bf16.msra.mxu0 0
          %1415 = vmatprep.subr.bf16.mxu0 0
          %1416 = vmatpush1.bf16.msra.mxu0 0
          %1417 = vmatprep.subr.bf16.mxu0 0
          %1418 = vmatpush1.bf16.msra.mxu0 0
          %1419 = vmatprep.subr.bf16.mxu0 0
          %1420 = vmatpush1.bf16.msra.mxu0 0
          %1421 = vmatprep.subr.bf16.mxu0 0
          %1422 = vmatpush1.bf16.msra.mxu0 0
          %1423 = vmatprep.subr.bf16.mxu0 0
          %1424 = vmatpush1.bf16.msra.mxu0 0
          %1425 = vmatprep.subr.bf16.mxu0 0
          %1426 = vmatpush1.bf16.msra.mxu0 0
          %1427 = vmatprep.subr.bf16.mxu0 0
          %1428 = vmatpush1.bf16.msra.mxu0 0
          %1429 = vmatprep.subr.bf16.mxu0 0
          %1430 = vmatpush1.bf16.msra.mxu0 0
          %1431 = vmatprep.mubr.bf16.mxu0 0
          %1432 = vmatmul.mubr.bf16.gmra.mrb[0].mxu0 %v1394
          %v1433 = vpop.f32.mrb[0].mxu0
          %v1434 = vadd.f32 0.0, %v1433
          %v1435 = vpop.f32.mrb[0].mxu0
          %v1436 = vpop.f32.mrb[0].mxu0
          %v1437 = vpop.f32.mrb[0].mxu0
          %1438 = vdwg.mxu0
          %v1439 = vadd.f32 %v1389, %v1434
          %1440 = vst.msk [vmem:[%s1382] sm:$0xff] %vm895, %v1439
          %1441 = vst.msk [vmem:[%s1357] sm:$0xff] %vm965, %v1362
        $region56: #{transformer_block.4} parent=31 // pred_fallthru
          _
        // Predicated region
        $region57: #{transformer_block.4} parent=31 // pred_check
          %p1442 = pneg %p310
        $region58: #{transformer_block.4} parent=31 // pred_check_branch
          %1444 = sbr.rel (%p1442) target = $region60
        $region59: #{transformer_block.4} parent=31 // pred_region
          %v1445 = vld [vmem:[#allocation3] sm:$0xff]
          %v1446 = vrcp.pop %v1445
          %v1447 = vld [vmem:[#allocation4] sm:$0xff]
          %1449 = vset.pattern.permute.xlu0 0
          %1450 = vperm.xlu0 %1449, %v1446
          %v1451 = vpop.permute.xlu0 %1450
          %v1453 = vmul.f32 %v1447, %v1451
          %v1454 = vpack.c.bf16 %v1453, %v1453
          %vm1455 = vcmask 60416
          %1456 = vst.msk [vmem:[%s298] sm:$0xf] %vm1455, %v1454
          %s1457 = scalar_lea.vmem [#allocation3], 8
          %v1458 = vld [vmem:[%s1457] sm:$0xff]
          %v1459 = vrcp.pop %v1458
          %s1460 = scalar_lea.vmem [#allocation4], 8
          %v1461 = vld [vmem:[%s1460] sm:$0xff]
          %1463 = vset.pattern.permute.xlu0 0
          %1464 = vperm.xlu0 %1463, %v1459
          %v1465 = vpop.permute.xlu0 %1464
          %v1467 = vmul.f32 %v1461, %v1465
          %v1468 = vpack.c.bf16 %v1467, %v1467
          %v1470 = vunpack.c.l.b16 %v1468
          %v1471 = vpack.c.b16 %v1470, %v1470
          %1472 = vrot.lane.b32.xlu0 %v1471, 8
          %v1473 = vpop.permute.xlu0 %1472
          %vm1475 = vcmask 126016
          %1476 = vst.msk [vmem:[%s298] sm:$0xf] %vm1475, %v1473
          %s1477 = scalar_lea.vmem [#allocation3], 16
          %v1478 = vld [vmem:[%s1477] sm:$0xff]
          %v1479 = vrcp.pop %v1478
          %s1480 = scalar_lea.vmem [#allocation4], 16
          %v1481 = vld [vmem:[%s1480] sm:$0xff]
          %1483 = vset.pattern.permute.xlu0 0
          %1484 = vperm.xlu0 %1483, %v1479
          %v1485 = vpop.permute.xlu0 %1484
          %v1487 = vmul.f32 %v1481, %v1485
          %v1488 = vpack.c.bf16 %v1487, %v1487
          %v1490 = vunpack.c.l.b16 %v1488
          %v1491 = vpack.c.b16 %v1490, %v1490
          %1492 = vrot.lane.b32.xlu0 %v1491, 16
          %v1493 = vpop.permute.xlu0 %1492
          %vm1495 = vcmask 191616
          %1496 = vst.msk [vmem:[%s298] sm:$0xf] %vm1495, %v1493
          %s1497 = scalar_lea.vmem [#allocation3], 24
          %v1498 = vld [vmem:[%s1497] sm:$0xff]
          %v1499 = vrcp.pop %v1498
          %s1500 = scalar_lea.vmem [#allocation4], 24
          %v1501 = vld [vmem:[%s1500] sm:$0xff]
          %1503 = vset.pattern.permute.xlu0 0
          %1504 = vperm.xlu0 %1503, %v1499
          %v1505 = vpop.permute.xlu0 %1504
          %v1507 = vmul.f32 %v1501, %v1505
          %v1508 = vpack.c.bf16 %v1507, %v1507
          %v1510 = vunpack.c.l.b16 %v1508
          %v1511 = vpack.c.b16 %v1510, %v1510
          %1512 = vrot.lane.b32.xlu0 %v1511, 24
          %v1513 = vpop.permute.xlu0 %1512
          %vm1515 = vcmask 257216
          %1516 = vst.msk [vmem:[%s298] sm:$0xf] %vm1515, %v1513
        $region60: #{transformer_block.4} parent=31 // pred_fallthru
          _
        %s1517 = sand.u32 %s144, 1
        %s1518 = scalar_lea.sflag [#allocation7], %s1517
        %s1519 = sand.u32 %s144, 1
        %s1520 = smul.addr %s1519, 4
        %s1521 = scalar_lea.vmem [#allocation11], %s1520
        // Predicated region
        $region61: #{transformer_block.4} parent=31 // pred_check
          %p1522 = pneg %p154
        $region62: #{transformer_block.4} parent=31 // pred_check_branch
          %1524 = sbr.rel (%p1522) target = $region64
        $region63: #{transformer_block.4} parent=31 // pred_region
          %s1526 = ssub.s32 64, 64
          %1527 = vsyncadd %s1518, %s1526
          %s1528 = sadd.s32 %s29, %s28
          %s1529 = smul.addr %s1528, 64
          %s1530 = scalar_lea.hbm %s3, %s1529
          %s1532 = sshll.u32 %s1521, 4
          %s1533 = int_to_ptr.vmem [resolvable:$true] %s1532
          %1535 = dma.vmem_to_hbm [thread:$0]  %s1533, 64, %s1530, %s1518
        $region64: #{transformer_block.4} parent=31 // pred_fallthru
          _
      $region32: #{transformer_block.4} parent=5 // pred_fallthru
        _
      %p1536 = scmp.le.s32.totalorder 2, %s18
      // Predicated region
      $region65: #{transformer_block.4} parent=5 // pred_check
        %p1537 = pneg %p1536
      $region66: #{transformer_block.4} parent=5 // pred_check_branch
        %1539 = sbr.rel (%p1537) target = $region68
      $region67: #{transformer_block.4} parent=5 // pred_region
        %s1540 = ssub.s32 %s18, 2
        // Predicated region
        $region69: #{transformer_block.4} parent=67 // pred_check
          %p1541 = pneg %p160
        $region70: #{transformer_block.4} parent=67 // pred_check_branch
          %1543 = sbr.rel (%p1541) target = $region72
        $region71: #{transformer_block.4} parent=67 // pred_region
          %s1544 = sand.u32 %s145, 1
          %s1545 = scalar_lea.sflag [#allocation7], %s1544
          %s1546 = sand.u32 %s145, 1
          %s1547 = smul.addr %s1546, 4
          %s1548 = scalar_lea.vmem [#allocation11], %s1547
          %1549 = dma.done %s1545, 64
        $region72: #{transformer_block.4} parent=67 // pred_fallthru
          _
      $region68: #{transformer_block.4} parent=5 // pred_fallthru
        _
    $region6: #{transformer_block.4} parent=1 // loop_footer
      %s22 = sadd.s32 1, %s18
    $region7: #{transformer_block.4} parent=1 // loop_footer_branch
      %17 = sbr.rel target = $region3
    $region8: #{transformer_block.4} parent=1 // loop_exit
      _
    %1550 = vsyncpa [#allocation6], 1
    %s1551 = scalar_lea.sflag [#allocation6], 1
    %1552 = vsyncpa %s1551, 1
    %1553 = vsyncpa [#allocation9], 1
    %s1554 = scalar_lea.sflag [#allocation9], 1
    %1555 = vsyncpa %s1554, 1
    %1556 = vsyncpa [#allocation7], 1
    %s1557 = scalar_lea.sflag [#allocation7], 1
    %1558 = vsyncpa %s1557, 1

</llo_original>
